<compile_context>
chip_gen: v5e
topology: v5e:2x2
jax: 0.10.0
libtpu: 0.0.40
codegen_flags: <defaults>
</compile_context>

<pallas_src>
from functools import partial

import jax
import jax.numpy as jnp
from jax.experimental import pallas as pl
from jax.experimental.pallas import tpu as pltpu

_LANE = 128
_GRANULE = 16          # row granule: safe for bf16 (16,128) output packing, f32 (8,128) input
_MIN_SPLIT_ROWS = 256  # only force a >=2-step grid once per-tile rows stay >= this


def _round_up(n, m):
    return ((n + m - 1) // m) * m


def _cdiv(a, b):
    return -(-a // b)


# ----------------------------- kernel body ---------------------------------
def _mlp_kernel(x_ref, w1_ref, b1_ref, w2_ref, b2_ref, w3_ref, b3_ref, o_ref):
    # x arrives in its native dtype; cast to bf16 in-register (no extra HBM pass).
    x = x_ref[...].astype(jnp.bfloat16)                                     # (TM, IN)
    h1 = jnp.dot(x, w1_ref[...], preferred_element_type=jnp.float32) + b1_ref[...]
    h1 = jnp.maximum(h1, 0.0).astype(jnp.bfloat16)                          # (TM, 512)
    h2 = jnp.dot(h1, w2_ref[...], preferred_element_type=jnp.float32) + b2_ref[...]
    h2 = jnp.maximum(h2, 0.0).astype(jnp.bfloat16)                          # (TM, 128)
    out = jnp.dot(h2, w3_ref[...], preferred_element_type=jnp.float32) + b3_ref[...]
    o_ref[...] = out.astype(o_ref.dtype)                                    # (TM, OUT_P) lane-dense bf16


# ----------------------------- tiling policy --------------------------------
def _pick_tiling(batch, tile_m):
    """Pick (tile_m, padded_batch) with bounded padding and >=2 grid steps when
    the batch is large enough to keep both v7x TensorCores busy."""
    bg = _round_up(max(batch, 1), _GRANULE)
    n_min = 2 if bg >= 2 * _MIN_SPLIT_ROWS else 1
    n = max(_cdiv(bg, tile_m), n_min)
    tm = _round_up(_cdiv(bg, n), _GRANULE)
    return tm, tm * n


# ----------------------------- forward ---------------------------------------
@partial(jax.jit, static_argnums=(2, 3, 4))
def _forward(x, params, out_size, tile_m, weight_buffers):
    w1, b1 = params["w1"], params["b1"]
    w2, b2 = params["w2"], params["b2"]
    w3, b3 = params["w3"], params["b3"]          # w3/b3 already lane-padded to OUT_P
    input_size, h1_size = w1.shape
    h2_size = w2.shape[1]
    out_p = w3.shape[1]

    # x.view(-1, input_size); keep native dtype (kernel casts to bf16 in-register).
    x2d = x.reshape(-1, input_size)
    batch = x2d.shape[0]

    tm, batch_p = _pick_tiling(batch, tile_m)
    if batch_p != batch:
        x2d = jnp.pad(x2d, ((0, batch_p - batch), (0, 0)))

    resident = lambda i: (0, 0)  # same block every step -> weights stay VMEM-resident
    # Single-buffer the resident operands (constant index_map); fall back to the
    # default pipelining if buffer_count=1 is not supported by this JAX build.
    rkw = {"pipeline_mode": pl.Buffered(buffer_count=weight_buffers)} if weight_buffers == 1 else {}

    out_padded = pl.pallas_call(
        _mlp_kernel,
        out_shape=jax.ShapeDtypeStruct((batch_p, out_p), jnp.bfloat16),
        grid=(batch_p // tm,),
        in_specs=[
            pl.BlockSpec((tm, input_size), lambda i: (i, 0)),          # x tile (pipelined)
            pl.BlockSpec((input_size, h1_size), resident, **rkw),      # w1 (bf16)
            pl.BlockSpec((1, h1_size), resident, **rkw),               # b1 (f32)
            pl.BlockSpec((h1_size, h2_size), resident, **rkw),         # w2 (bf16)
            pl.BlockSpec((1, h2_size), resident, **rkw),               # b2 (f32)
            pl.BlockSpec((h2_size, out_p), resident, **rkw),           # w3 (bf16, lane-padded)
            pl.BlockSpec((1, out_p), resident, **rkw),                 # b3 (f32, lane-padded)
        ],
        out_specs=pl.BlockSpec((tm, out_p), lambda i: (i, 0)),
        compiler_params=pltpu.CompilerParams(
            dimension_semantics=("parallel",),        # batch tiles shard across v7x's 2 TCs
            vmem_limit_bytes=32 * 1024 * 1024,
        ),
    )(x2d, w1, b1, w2, b2, w3, b3)

    # Drop batch padding and the lane padding of the final layer.
    return out_padded[:batch, :out_size]


_WEIGHT_BUFFERS = [1]  # flips to 2 if pl.Buffered(1) is rejected by this build


def mlp_forward(x, params, out_size, *, tile_m=1024):
    """Forward pass. `params` must come from prepare_params(). Returns bf16
    (batch, out_size); convert to f32 in the caller only if truly needed."""
    try:
        return _forward(x, params, out_size, tile_m, _WEIGHT_BUFFERS[0])
    except Exception:
        if _WEIGHT_BUFFERS[0] == 1:
            _WEIGHT_BUFFERS[0] = 2
            return _forward(x, params, out_size, tile_m, 2)
        raise


# ----------------------------- params ----------------------------------------
def init_mlp_params(key, input_size, output_size):
    """Raw f32 params matching nn.Linear shapes (stored transposed: (in, out))."""
    ks = jax.random.split(key, 6)

    def lin(kw, kb, fan_in, fan_out):
        bound = 1.0 / jnp.sqrt(jnp.float32(fan_in))
        w = jax.random.uniform(kw, (fan_in, fan_out), jnp.float32, -bound, bound)
        b = jax.random.uniform(kb, (1, fan_out), jnp.float32, -bound, bound)
        return w, b

    w1, b1 = lin(ks[0], ks[1], input_size, 512)
    w2, b2 = lin(ks[2], ks[3], 512, 128)
    w3, b3 = lin(ks[4], ks[5], 128, output_size)
    return {"w1": w1, "b1": b1, "w2": w2, "b2": b2, "w3": w3, "b3": b3}


def prepare_params(raw):
    """One-time conversion: bf16 weights, f32 biases, fc3 lane-padded to 128.
    Do this once at init, not per forward call."""
    out_size = raw["w3"].shape[1]
    out_p = _round_up(out_size, _LANE)
    pad = out_p - out_size
    params = {
        "w1": raw["w1"].astype(jnp.bfloat16),
        "b1": raw["b1"].astype(jnp.float32),
        "w2": raw["w2"].astype(jnp.bfloat16),
        "b2": raw["b2"].astype(jnp.float32),
        "w3": jnp.pad(raw["w3"].astype(jnp.bfloat16), ((0, 0), (0, pad))),
        "b3": jnp.pad(raw["b3"].astype(jnp.float32), ((0, 0), (0, pad))),
    }
    return params, out_size


# ----------------------------- demo / check ----------------------------------
if __name__ == "__main__":
    key = jax.random.PRNGKey(0)
    k_x, k_p = jax.random.split(key)

    # Example input: NCHW image batch (2, 4, 16, 16) -> input_size = 4*16*16 = 1024
    B, C, H, W = 2, 4, 16, 16
    input_size = C * H * W
    output_size = 10

    x = jax.random.normal(k_x, (B, C, H, W), dtype=jnp.float32)
    raw = init_mlp_params(k_p, input_size, output_size)
    params, out_size = prepare_params(raw)

    out = jax.block_until_ready(mlp_forward(x, params, out_size))

    # Pure-JAX reference with the same bf16-operand / f32-accumulate math.
    x2d = x.reshape(-1, input_size).astype(jnp.bfloat16)
    w1b = raw["w1"].astype(jnp.bfloat16)
    w2b = raw["w2"].astype(jnp.bfloat16)
    w3b = raw["w3"].astype(jnp.bfloat16)
    h1 = jnp.maximum(
        jnp.dot(x2d, w1b, preferred_element_type=jnp.float32) + raw["b1"], 0.0
    ).astype(jnp.bfloat16)
    h2 = jnp.maximum(
        jnp.dot(h1, w2b, preferred_element_type=jnp.float32) + raw["b2"], 0.0
    ).astype(jnp.bfloat16)
    ref = jnp.dot(h2, w3b, preferred_element_type=jnp.float32) + raw["b3"]

    assert out.shape == (B, output_size)
    assert jnp.allclose(out.astype(jnp.float32), ref, atol=2e-2, rtol=2e-2)

    print("KERNEL_OK")
</pallas_src>

<mosaic_0001>
module attributes {stable_mosaic.version = 11 : i64} {
  func.func @_mlp_kernel(%arg0: i32, %arg1: memref<16x1024xf32, #tpu.memory_space<vmem>>, %arg2: memref<1024x512xbf16, #tpu.memory_space<vmem>>, %arg3: memref<1x512xf32, #tpu.memory_space<vmem>>, %arg4: memref<512x128xbf16, #tpu.memory_space<vmem>>, %arg5: memref<1x128xf32, #tpu.memory_space<vmem>>, %arg6: memref<128x128xbf16, #tpu.memory_space<vmem>>, %arg7: memref<1x128xf32, #tpu.memory_space<vmem>>, %arg8: memref<16x128xbf16, #tpu.memory_space<vmem>>) attributes {dimension_semantics = [#tpu.dimension_semantics<parallel>], iteration_bounds = array<i64: 1>, scalar_prefetch = 0 : i64, scratch_operands = 0 : i64, tpu.core_type = #tpu.core_type<tc>, window_params = [{transform_indices = @transform_0, window_bounds = array<i64: 16, 1024>}, {pipeline_mode = #tpu.pipeline_mode<synchronous>, transform_indices = @transform_1, window_bounds = array<i64: 1024, 512>}, {pipeline_mode = #tpu.pipeline_mode<synchronous>, transform_indices = @transform_2, window_bounds = array<i64: 1, 512>}, {pipeline_mode = #tpu.pipeline_mode<synchronous>, transform_indices = @transform_3, window_bounds = array<i64: 512, 128>}, {pipeline_mode = #tpu.pipeline_mode<synchronous>, transform_indices = @transform_4, window_bounds = array<i64: 1, 128>}, {pipeline_mode = #tpu.pipeline_mode<synchronous>, transform_indices = @transform_5, window_bounds = array<i64: 128, 128>}, {pipeline_mode = #tpu.pipeline_mode<synchronous>, transform_indices = @transform_6, window_bounds = array<i64: 1, 128>}, {transform_indices = @transform_7, window_bounds = array<i64: 16, 128>}]} {
    %c0 = arith.constant 0 : index
    %c0_0 = arith.constant 0 : index
    %0 = vector.load %arg1[%c0, %c0_0] : memref<16x1024xf32, #tpu.memory_space<vmem>>, vector<16x1024xf32>
    %1 = arith.truncf %0 : vector<16x1024xf32> to vector<16x1024xbf16>
    %c0_1 = arith.constant 0 : index
    %c0_2 = arith.constant 0 : index
    %2 = vector.load %arg2[%c0_1, %c0_2] : memref<1024x512xbf16, #tpu.memory_space<vmem>>, vector<1024x512xbf16>
    %cst = arith.constant dense<0.000000e+00> : vector<16x512xf32>
    %3 = tpu.matmul %1, %2, %cst {dimension_numbers = #tpu.dot_dimension_numbers<[1], [0], [0], [1], [0, 0, 1, 1], [], []>} : vector<16x1024xbf16>, vector<1024x512xbf16>, vector<16x512xf32> -> vector<16x512xf32>
    %c0_3 = arith.constant 0 : index
    %c0_4 = arith.constant 0 : index
    %4 = vector.load %arg3[%c0_3, %c0_4] : memref<1x512xf32, #tpu.memory_space<vmem>>, vector<1x512xf32>
    %5 = vector.broadcast %4 : vector<1x512xf32> to vector<16x512xf32>
    %6 = arith.addf %3, %5 : vector<16x512xf32>
    %cst_5 = arith.constant 0.000000e+00 : f32
    %7 = vector.broadcast %cst_5 : f32 to vector<16x512xf32>
    %8 = arith.maximumf %6, %7 : vector<16x512xf32>
    %9 = arith.truncf %8 : vector<16x512xf32> to vector<16x512xbf16>
    %c0_6 = arith.constant 0 : index
    %c0_7 = arith.constant 0 : index
    %10 = vector.load %arg4[%c0_6, %c0_7] : memref<512x128xbf16, #tpu.memory_space<vmem>>, vector<512x128xbf16>
    %cst_8 = arith.constant dense<0.000000e+00> : vector<16x128xf32>
    %11 = tpu.matmul %9, %10, %cst_8 {dimension_numbers = #tpu.dot_dimension_numbers<[1], [0], [0], [1], [0, 0, 1, 1], [], []>} : vector<16x512xbf16>, vector<512x128xbf16>, vector<16x128xf32> -> vector<16x128xf32>
    %c0_9 = arith.constant 0 : index
    %c0_10 = arith.constant 0 : index
    %12 = vector.load %arg5[%c0_9, %c0_10] : memref<1x128xf32, #tpu.memory_space<vmem>>, vector<1x128xf32>
    %13 = vector.broadcast %12 : vector<1x128xf32> to vector<16x128xf32>
    %14 = arith.addf %11, %13 : vector<16x128xf32>
    %cst_11 = arith.constant 0.000000e+00 : f32
    %15 = vector.broadcast %cst_11 : f32 to vector<16x128xf32>
    %16 = arith.maximumf %14, %15 : vector<16x128xf32>
    %17 = arith.truncf %16 : vector<16x128xf32> to vector<16x128xbf16>
    %c0_12 = arith.constant 0 : index
    %c0_13 = arith.constant 0 : index
    %18 = vector.load %arg6[%c0_12, %c0_13] : memref<128x128xbf16, #tpu.memory_space<vmem>>, vector<128x128xbf16>
    %cst_14 = arith.constant dense<0.000000e+00> : vector<16x128xf32>
    %19 = tpu.matmul %17, %18, %cst_14 {dimension_numbers = #tpu.dot_dimension_numbers<[1], [0], [0], [1], [0, 0, 1, 1], [], []>} : vector<16x128xbf16>, vector<128x128xbf16>, vector<16x128xf32> -> vector<16x128xf32>
    %c0_15 = arith.constant 0 : index
    %c0_16 = arith.constant 0 : index
    %20 = vector.load %arg7[%c0_15, %c0_16] : memref<1x128xf32, #tpu.memory_space<vmem>>, vector<1x128xf32>
    %21 = vector.broadcast %20 : vector<1x128xf32> to vector<16x128xf32>
    %22 = arith.addf %19, %21 : vector<16x128xf32>
    %23 = arith.truncf %22 : vector<16x128xf32> to vector<16x128xbf16>
    %c0_17 = arith.constant 0 : index
    %c0_18 = arith.constant 0 : index
    %24 = vector.load %arg8[%c0_17, %c0_18] : memref<16x128xbf16, #tpu.memory_space<vmem>>, vector<16x128xbf16>
    tpu.vector_store %arg8[%c0_17, %c0_18], %23 {strides = array<i32>} : memref<16x128xbf16, #tpu.memory_space<vmem>>, vector<16x128xbf16>,
    return
  }
  func.func @transform_0(%arg0: i32) -> (i32, i32) {
    %c0_i32 = arith.constant 0 : i32
    %c0_i32_0 = arith.constant 0 : i32
    return %arg0, %c0_i32 : i32, i32
  }
  func.func @transform_1(%arg0: i32) -> (i32, i32) {
    %c0_i32 = arith.constant 0 : i32
    %c0_i32_0 = arith.constant 0 : i32
    %c0_i32_1 = arith.constant 0 : i32
    return %c0_i32, %c0_i32_0 : i32, i32
  }
  func.func @transform_2(%arg0: i32) -> (i32, i32) {
    %c0_i32 = arith.constant 0 : i32
    %c0_i32_0 = arith.constant 0 : i32
    %c0_i32_1 = arith.constant 0 : i32
    return %c0_i32, %c0_i32_0 : i32, i32
  }
  func.func @transform_3(%arg0: i32) -> (i32, i32) {
    %c0_i32 = arith.constant 0 : i32
    %c0_i32_0 = arith.constant 0 : i32
    %c0_i32_1 = arith.constant 0 : i32
    return %c0_i32, %c0_i32_0 : i32, i32
  }
  func.func @transform_4(%arg0: i32) -> (i32, i32) {
    %c0_i32 = arith.constant 0 : i32
    %c0_i32_0 = arith.constant 0 : i32
    %c0_i32_1 = arith.constant 0 : i32
    return %c0_i32, %c0_i32_0 : i32, i32
  }
  func.func @transform_5(%arg0: i32) -> (i32, i32) {
    %c0_i32 = arith.constant 0 : i32
    %c0_i32_0 = arith.constant 0 : i32
    %c0_i32_1 = arith.constant 0 : i32
    return %c0_i32, %c0_i32_0 : i32, i32
  }
  func.func @transform_6(%arg0: i32) -> (i32, i32) {
    %c0_i32 = arith.constant 0 : i32
    %c0_i32_0 = arith.constant 0 : i32
    %c0_i32_1 = arith.constant 0 : i32
    return %c0_i32, %c0_i32_0 : i32, i32
  }
  func.func @transform_7(%arg0: i32) -> (i32, i32) {
    %c0_i32 = arith.constant 0 : i32
    %c0_i32_0 = arith.constant 0 : i32
    return %arg0, %c0_i32 : i32, i32
  }
}

module attributes {stable_mosaic.version = 11 : i64} {
  func.func @_mlp_kernel(%arg0: i32, %arg1: memref<16x1024xf32, #tpu.memory_space<vmem>>, %arg2: memref<1024x512xbf16, #tpu.memory_space<vmem>>, %arg3: memref<1x512xf32, #tpu.memory_space<vmem>>, %arg4: memref<512x128xbf16, #tpu.memory_space<vmem>>, %arg5: memref<1x128xf32, #tpu.memory_space<vmem>>, %arg6: memref<128x128xbf16, #tpu.memory_space<vmem>>, %arg7: memref<1x128xf32, #tpu.memory_space<vmem>>, %arg8: memref<16x128xbf16, #tpu.memory_space<vmem>>) attributes {dimension_semantics = [#tpu.dimension_semantics<parallel>], iteration_bounds = array<i64: 1>, scalar_prefetch = 0 : i64, scratch_operands = 0 : i64, tpu.core_type = #tpu.core_type<tc>, window_params = [{transform_indices = @transform_0, window_bounds = array<i64: 16, 1024>}, {pipeline_mode = #tpu.pipeline_mode<synchronous>, transform_indices = @transform_1, window_bounds = array<i64: 1024, 512>}, {pipeline_mode = #tpu.pipeline_mode<synchronous>, transform_indices = @transform_2, window_bounds = array<i64: 1, 512>}, {pipeline_mode = #tpu.pipeline_mode<synchronous>, transform_indices = @transform_3, window_bounds = array<i64: 512, 128>}, {pipeline_mode = #tpu.pipeline_mode<synchronous>, transform_indices = @transform_4, window_bounds = array<i64: 1, 128>}, {pipeline_mode = #tpu.pipeline_mode<synchronous>, transform_indices = @transform_5, window_bounds = array<i64: 128, 128>}, {pipeline_mode = #tpu.pipeline_mode<synchronous>, transform_indices = @transform_6, window_bounds = array<i64: 1, 128>}, {transform_indices = @transform_7, window_bounds = array<i64: 16, 128>}]} {
    %c0 = arith.constant 0 : index
    %c0_0 = arith.constant 0 : index
    %0 = vector.load %arg1[%c0, %c0_0] : memref<16x1024xf32, #tpu.memory_space<vmem>>, vector<16x1024xf32>
    %1 = arith.truncf %0 : vector<16x1024xf32> to vector<16x1024xbf16>
    %c0_1 = arith.constant 0 : index
    %c0_2 = arith.constant 0 : index
    %2 = vector.load %arg2[%c0_1, %c0_2] : memref<1024x512xbf16, #tpu.memory_space<vmem>>, vector<1024x512xbf16>
    %cst = arith.constant dense<0.000000e+00> : vector<16x512xf32>
    %3 = tpu.matmul %1, %2, %cst {dimension_numbers = #tpu.dot_dimension_numbers<[1], [0], [0], [1], [0, 0, 1, 1], [], []>} : vector<16x1024xbf16>, vector<1024x512xbf16>, vector<16x512xf32> -> vector<16x512xf32>
    %c0_3 = arith.constant 0 : index
    %c0_4 = arith.constant 0 : index
    %4 = vector.load %arg3[%c0_3, %c0_4] : memref<1x512xf32, #tpu.memory_space<vmem>>, vector<1x512xf32>
    %5 = vector.broadcast %4 : vector<1x512xf32> to vector<16x512xf32>
    %6 = arith.addf %3, %5 : vector<16x512xf32>
    %cst_5 = arith.constant 0.000000e+00 : f32
    %7 = vector.broadcast %cst_5 : f32 to vector<16x512xf32>
    %8 = arith.maximumf %6, %7 : vector<16x512xf32>
    %9 = arith.truncf %8 : vector<16x512xf32> to vector<16x512xbf16>
    %c0_6 = arith.constant 0 : index
    %c0_7 = arith.constant 0 : index
    %10 = vector.load %arg4[%c0_6, %c0_7] : memref<512x128xbf16, #tpu.memory_space<vmem>>, vector<512x128xbf16>
    %cst_8 = arith.constant dense<0.000000e+00> : vector<16x128xf32>
    %11 = tpu.matmul %9, %10, %cst_8 {dimension_numbers = #tpu.dot_dimension_numbers<[1], [0], [0], [1], [0, 0, 1, 1], [], []>} : vector<16x512xbf16>, vector<512x128xbf16>, vector<16x128xf32> -> vector<16x128xf32>
    %c0_9 = arith.constant 0 : index
    %c0_10 = arith.constant 0 : index
    %12 = vector.load %arg5[%c0_9, %c0_10] : memref<1x128xf32, #tpu.memory_space<vmem>>, vector<1x128xf32>
    %13 = vector.broadcast %12 : vector<1x128xf32> to vector<16x128xf32>
    %14 = arith.addf %11, %13 : vector<16x128xf32>
    %cst_11 = arith.constant 0.000000e+00 : f32
    %15 = vector.broadcast %cst_11 : f32 to vector<16x128xf32>
    %16 = arith.maximumf %14, %15 : vector<16x128xf32>
    %17 = arith.truncf %16 : vector<16x128xf32> to vector<16x128xbf16>
    %c0_12 = arith.constant 0 : index
    %c0_13 = arith.constant 0 : index
    %18 = vector.load %arg6[%c0_12, %c0_13] : memref<128x128xbf16, #tpu.memory_space<vmem>>, vector<128x128xbf16>
    %cst_14 = arith.constant dense<0.000000e+00> : vector<16x128xf32>
    %19 = tpu.matmul %17, %18, %cst_14 {dimension_numbers = #tpu.dot_dimension_numbers<[1], [0], [0], [1], [0, 0, 1, 1], [], []>} : vector<16x128xbf16>, vector<128x128xbf16>, vector<16x128xf32> -> vector<16x128xf32>
    %c0_15 = arith.constant 0 : index
    %c0_16 = arith.constant 0 : index
    %20 = vector.load %arg7[%c0_15, %c0_16] : memref<1x128xf32, #tpu.memory_space<vmem>>, vector<1x128xf32>
    %21 = vector.broadcast %20 : vector<1x128xf32> to vector<16x128xf32>
    %22 = arith.addf %19, %21 : vector<16x128xf32>
    %23 = arith.truncf %22 : vector<16x128xf32> to vector<16x128xbf16>
    %c0_17 = arith.constant 0 : index
    %c0_18 = arith.constant 0 : index
    %24 = vector.load %arg8[%c0_17, %c0_18] : memref<16x128xbf16, #tpu.memory_space<vmem>>, vector<16x128xbf16>
    tpu.vector_store %arg8[%c0_17, %c0_18], %23 {strides = array<i32>} : memref<16x128xbf16, #tpu.memory_space<vmem>>, vector<16x128xbf16>,
    return
  }
  func.func @transform_0(%arg0: i32) -> (i32, i32) {
    %c0_i32 = arith.constant 0 : i32
    %c0_i32_0 = arith.constant 0 : i32
    return %arg0, %c0_i32 : i32, i32
  }
  func.func @transform_1(%arg0: i32) -> (i32, i32) {
    %c0_i32 = arith.constant 0 : i32
    %c0_i32_0 = arith.constant 0 : i32
    %c0_i32_1 = arith.constant 0 : i32
    return %c0_i32, %c0_i32_0 : i32, i32
  }
  func.func @transform_2(%arg0: i32) -> (i32, i32) {
    %c0_i32 = arith.constant 0 : i32
    %c0_i32_0 = arith.constant 0 : i32
    %c0_i32_1 = arith.constant 0 : i32
    return %c0_i32, %c0_i32_0 : i32, i32
  }
  func.func @transform_3(%arg0: i32) -> (i32, i32) {
    %c0_i32 = arith.constant 0 : i32
    %c0_i32_0 = arith.constant 0 : i32
    %c0_i32_1 = arith.constant 0 : i32
    return %c0_i32, %c0_i32_0 : i32, i32
  }
  func.func @transform_4(%arg0: i32) -> (i32, i32) {
    %c0_i32 = arith.constant 0 : i32
    %c0_i32_0 = arith.constant 0 : i32
    %c0_i32_1 = arith.constant 0 : i32
    return %c0_i32, %c0_i32_0 : i32, i32
  }
  func.func @transform_5(%arg0: i32) -> (i32, i32) {
    %c0_i32 = arith.constant 0 : i32
    %c0_i32_0 = arith.constant 0 : i32
    %c0_i32_1 = arith.constant 0 : i32
    return %c0_i32, %c0_i32_0 : i32, i32
  }
  func.func @transform_6(%arg0: i32) -> (i32, i32) {
    %c0_i32 = arith.constant 0 : i32
    %c0_i32_0 = arith.constant 0 : i32
    %c0_i32_1 = arith.constant 0 : i32
    return %c0_i32, %c0_i32_0 : i32, i32
  }
  func.func @transform_7(%arg0: i32) -> (i32, i32) {
    %c0_i32 = arith.constant 0 : i32
    %c0_i32_0 = arith.constant 0 : i32
    return %arg0, %c0_i32 : i32, i32
  }
}

</mosaic_0001>

<llo_original>
// kernel: _forward.1
$region0: #{_forward.1}
  #allocation0 [shape = 'u32[]', space=smem, size = 0x4, offset = 0x4, fixed_abs, tag = 'smem constant byte address 0x4 - core index']
  #allocation1 [shape = 'u32[72,128]{1,0:T(1,128)}', space=vmem, size = 0x9000, scoped, tag = 'internal scratch']
  %s0 = inlined_call_operand.vmem [shape: f32[16,1024], index: 0, kind: input, shape index: {}]
  %s1 = inlined_call_operand.hbm [shape: bf16[1024,512], index: 1, kind: input, shape index: {}]
  %s2 = inlined_call_operand.vmem [shape: f32[1,512], index: 2, kind: input, shape index: {}]
  %s3 = inlined_call_operand.vmem [shape: bf16[512,128], index: 3, kind: input, shape index: {}]
  %s4 = inlined_call_operand.vmem [shape: f32[1,128], index: 4, kind: input, shape index: {}]
  %s5 = inlined_call_operand.hbm [shape: bf16[128,128], index: 5, kind: input, shape index: {}]
  %s6 = inlined_call_operand.vmem [shape: f32[1,128], index: 6, kind: input, shape index: {}]
  %s7 = inlined_call_operand.vmem [shape: bf16[16,128], index: 7, kind: output, shape index: {}]
  %s8 = sld [smem:[#allocation0]]
  $region46: #{_forward.1} parent=0
    _
  %s10 = ssub.s32 1, %s8
  %s11 = scalar_select 0, %s10, %s8
  $region1: #{_forward.1} parent=0
    #allocation2 [shape = 'u8[1048576]{0}', space=vmem, size = 0x100000, scoped, tag = 'input window, operand 1, single buffered']
    #allocation3 [shape = 's32[1]{0}', space=sflag, size = 0x4, scoped, tag = 'scoped memory for _forward.1']
    #allocation4 [shape = 'u8[32768]{0}', space=vmem, size = 0x8000, scoped, tag = 'input window, operand 5, single buffered']
    #allocation5 [shape = 's32[1]{0}', space=sflag, size = 0x4, scoped, tag = 'scoped memory for _forward.1']
    %12 = vsyncpa [#allocation3], 0
    %13 = vsyncpa [#allocation5], 0
    // Predicated region
    $region2: #{_forward.1} parent=1 // pred_check
      _
    $region3: #{_forward.1} parent=1 // pred_check_branch
      %15 = sbr.rel (0) target = $region5
    $region4: #{_forward.1} parent=1 // pred_region
      _
    $region5: #{_forward.1} parent=1 // pred_fallthru
      _
    // Predicated region
    $region6: #{_forward.1} parent=1 // pred_check
      _
    $region7: #{_forward.1} parent=1 // pred_check_branch
      %17 = sbr.rel (0) target = $region9
    $region8: #{_forward.1} parent=1 // pred_region
      %19 = vsyncadd [#allocation3], 0
      %s20 = sshll.u32 %s1, 4
      %s21 = int_to_ptr.hbm [resolvable:$true] %s20
      %s22 = sshll.u32 [#allocation2], 4
      %s23 = int_to_ptr.vmem [resolvable:$true] %s22
      %28 = dma.hbm_to_vmem [thread:$0]  %s21, 32768, %s23, [#allocation3], 256, 256, 16
    $region9: #{_forward.1} parent=1 // pred_fallthru
      _
    // Predicated region
    $region10: #{_forward.1} parent=1 // pred_check
      _
    $region11: #{_forward.1} parent=1 // pred_check_branch
      %30 = sbr.rel (0) target = $region13
    $region12: #{_forward.1} parent=1 // pred_region
      _
    $region13: #{_forward.1} parent=1 // pred_fallthru
      _
    // Predicated region
    $region14: #{_forward.1} parent=1 // pred_check
      _
    $region15: #{_forward.1} parent=1 // pred_check_branch
      %32 = sbr.rel (0) target = $region17
    $region16: #{_forward.1} parent=1 // pred_region
      _
    $region17: #{_forward.1} parent=1 // pred_fallthru
      _
    // Predicated region
    $region18: #{_forward.1} parent=1 // pred_check
      _
    $region19: #{_forward.1} parent=1 // pred_check_branch
      %34 = sbr.rel (0) target = $region21
    $region20: #{_forward.1} parent=1 // pred_region
      _
    $region21: #{_forward.1} parent=1 // pred_fallthru
      _
    // Predicated region
    $region22: #{_forward.1} parent=1 // pred_check
      _
    $region23: #{_forward.1} parent=1 // pred_check_branch
      %36 = sbr.rel (0) target = $region25
    $region24: #{_forward.1} parent=1 // pred_region
      %38 = vsyncadd [#allocation5], 0
      %s39 = sshll.u32 %s5, 4
      %s40 = int_to_ptr.hbm [resolvable:$true] %s39
      %s41 = sshll.u32 [#allocation4], 4
      %s42 = int_to_ptr.vmem [resolvable:$true] %s41
      %47 = dma.hbm_to_vmem [thread:$0]  %s40, 1024, %s42, [#allocation5], 64, 64, 4
    $region25: #{_forward.1} parent=1 // pred_fallthru
      _
    // Predicated region
    $region26: #{_forward.1} parent=1 // pred_check
      _
    $region27: #{_forward.1} parent=1 // pred_check_branch
      %49 = sbr.rel (0) target = $region29
    $region28: #{_forward.1} parent=1 // pred_region
      _
    $region29: #{_forward.1} parent=1 // pred_fallthru
      _
    // Predicated region
    $region30: #{_forward.1} parent=1 // pred_check
      _
    $region31: #{_forward.1} parent=1 // pred_check_branch
      %51 = sbr.rel (0) target = $region33
    $region32: #{_forward.1} parent=1 // pred_region
      %53 = dma.done [#allocation3], 32768
    $region33: #{_forward.1} parent=1 // pred_fallthru
      _
    // Predicated region
    $region34: #{_forward.1} parent=1 // pred_check
      _
    $region35: #{_forward.1} parent=1 // pred_check_branch
      %55 = sbr.rel (0) target = $region37
    $region36: #{_forward.1} parent=1 // pred_region
      %57 = dma.done [#allocation5], 1024
    $region37: #{_forward.1} parent=1 // pred_fallthru
      _
    %v58 = vld [vmem:[%s0] sm:$0xff]
    %v59 = vld [vmem:[%s0 + $0x8] sm:$0xff]
    %v60 = vld [vmem:[%s0 + $0x10] sm:$0xff]
    %v61 = vld [vmem:[%s0 + $0x18] sm:$0xff]
    %v62 = vld [vmem:[%s0 + $0x20] sm:$0xff]
    %v63 = vld [vmem:[%s0 + $0x28] sm:$0xff]
    %v64 = vld [vmem:[%s0 + $0x30] sm:$0xff]
    %v65 = vld [vmem:[%s0 + $0x38] sm:$0xff]
    %v66 = vld [vmem:[%s0 + $0x40] sm:$0xff]
    %v67 = vld [vmem:[%s0 + $0x48] sm:$0xff]
    %v68 = vld [vmem:[%s0 + $0x50] sm:$0xff]
    %v69 = vld [vmem:[%s0 + $0x58] sm:$0xff]
    %v70 = vld [vmem:[%s0 + $0x60] sm:$0xff]
    %v71 = vld [vmem:[%s0 + $0x68] sm:$0xff]
    %v72 = vld [vmem:[%s0 + $0x70] sm:$0xff]
    %v73 = vld [vmem:[%s0 + $0x78] sm:$0xff]
    %v74 = vpack.c.bf16 %v66, %v58
    %v75 = vpack.c.bf16 %v67, %v59
    %v76 = vpack.c.bf16 %v68, %v60
    %v77 = vpack.c.bf16 %v69, %v61
    %v78 = vpack.c.bf16 %v70, %v62
    %v79 = vpack.c.bf16 %v71, %v63
    %v80 = vpack.c.bf16 %v72, %v64
    %v81 = vpack.c.bf16 %v73, %v65
    %v82 = vld [vmem:[#allocation2] sm:$0xff]
    %v83 = vld [vmem:[#allocation2 + $0x8] sm:$0xff]
    %v84 = vld [vmem:[#allocation2 + $0x10] sm:$0xff]
    %v85 = vld [vmem:[#allocation2 + $0x18] sm:$0xff]
    %v86 = vld [vmem:[#allocation2 + $0x20] sm:$0xff]
    %v87 = vld [vmem:[#allocation2 + $0x28] sm:$0xff]
    %v88 = vld [vmem:[#allocation2 + $0x30] sm:$0xff]
    %v89 = vld [vmem:[#allocation2 + $0x38] sm:$0xff]
    %v90 = vld [vmem:[#allocation2 + $0x40] sm:$0xff]
    %v91 = vld [vmem:[#allocation2 + $0x48] sm:$0xff]
    %v92 = vld [vmem:[#allocation2 + $0x50] sm:$0xff]
    %v93 = vld [vmem:[#allocation2 + $0x58] sm:$0xff]
    %v94 = vld [vmem:[#allocation2 + $0x60] sm:$0xff]
    %v95 = vld [vmem:[#allocation2 + $0x68] sm:$0xff]
    %v96 = vld [vmem:[#allocation2 + $0x70] sm:$0xff]
    %v97 = vld [vmem:[#allocation2 + $0x78] sm:$0xff]
    %v98 = vld [vmem:[#allocation2 + $0x80] sm:$0xff]
    %v99 = vld [vmem:[#allocation2 + $0x88] sm:$0xff]
    %v100 = vld [vmem:[#allocation2 + $0x90] sm:$0xff]
    %v101 = vld [vmem:[#allocation2 + $0x98] sm:$0xff]
    %v102 = vld [vmem:[#allocation2 + $0xa0] sm:$0xff]
    %v103 = vld [vmem:[#allocation2 + $0xa8] sm:$0xff]
    %v104 = vld [vmem:[#allocation2 + $0xb0] sm:$0xff]
    %v105 = vld [vmem:[#allocation2 + $0xb8] sm:$0xff]
    %v106 = vld [vmem:[#allocation2 + $0xc0] sm:$0xff]
    %v107 = vld [vmem:[#allocation2 + $0xc8] sm:$0xff]
    %v108 = vld [vmem:[#allocation2 + $0xd0] sm:$0xff]
    %v109 = vld [vmem:[#allocation2 + $0xd8] sm:$0xff]
    %v110 = vld [vmem:[#allocation2 + $0xe0] sm:$0xff]
    %v111 = vld [vmem:[#allocation2 + $0xe8] sm:$0xff]
    %v112 = vld [vmem:[#allocation2 + $0xf0] sm:$0xff]
    %v113 = vld [vmem:[#allocation2 + $0xf8] sm:$0xff]
    %v114 = vld [vmem:[#allocation2 + $0x100] sm:$0xff]
    %v115 = vld [vmem:[#allocation2 + $0x108] sm:$0xff]
    %v116 = vld [vmem:[#allocation2 + $0x110] sm:$0xff]
    %v117 = vld [vmem:[#allocation2 + $0x118] sm:$0xff]
    %v118 = vld [vmem:[#allocation2 + $0x120] sm:$0xff]
    %v119 = vld [vmem:[#allocation2 + $0x128] sm:$0xff]
    %v120 = vld [vmem:[#allocation2 + $0x130] sm:$0xff]
    %v121 = vld [vmem:[#allocation2 + $0x138] sm:$0xff]
    %v122 = vld [vmem:[#allocation2 + $0x140] sm:$0xff]
    %v123 = vld [vmem:[#allocation2 + $0x148] sm:$0xff]
    %v124 = vld [vmem:[#allocation2 + $0x150] sm:$0xff]
    %v125 = vld [vmem:[#allocation2 + $0x158] sm:$0xff]
    %v126 = vld [vmem:[#allocation2 + $0x160] sm:$0xff]
    %v127 = vld [vmem:[#allocation2 + $0x168] sm:$0xff]
    %v128 = vld [vmem:[#allocation2 + $0x170] sm:$0xff]
    %v129 = vld [vmem:[#allocation2 + $0x178] sm:$0xff]
    %v130 = vld [vmem:[#allocation2 + $0x180] sm:$0xff]
    %v131 = vld [vmem:[#allocation2 + $0x188] sm:$0xff]
    %v132 = vld [vmem:[#allocation2 + $0x190] sm:$0xff]
    %v133 = vld [vmem:[#allocation2 + $0x198] sm:$0xff]
    %v134 = vld [vmem:[#allocation2 + $0x1a0] sm:$0xff]
    %v135 = vld [vmem:[#allocation2 + $0x1a8] sm:$0xff]
    %v136 = vld [vmem:[#allocation2 + $0x1b0] sm:$0xff]
    %v137 = vld [vmem:[#allocation2 + $0x1b8] sm:$0xff]
    %v138 = vld [vmem:[#allocation2 + $0x1c0] sm:$0xff]
    %v139 = vld [vmem:[#allocation2 + $0x1c8] sm:$0xff]
    %v140 = vld [vmem:[#allocation2 + $0x1d0] sm:$0xff]
    %v141 = vld [vmem:[#allocation2 + $0x1d8] sm:$0xff]
    %v142 = vld [vmem:[#allocation2 + $0x1e0] sm:$0xff]
    %v143 = vld [vmem:[#allocation2 + $0x1e8] sm:$0xff]
    %v144 = vld [vmem:[#allocation2 + $0x1f0] sm:$0xff]
    %v145 = vld [vmem:[#allocation2 + $0x1f8] sm:$0xff]
    %v146 = vld [vmem:[#allocation2 + $0x200] sm:$0xff]
    %v147 = vld [vmem:[#allocation2 + $0x208] sm:$0xff]
    %v148 = vld [vmem:[#allocation2 + $0x210] sm:$0xff]
    %v149 = vld [vmem:[#allocation2 + $0x218] sm:$0xff]
    %v150 = vld [vmem:[#allocation2 + $0x220] sm:$0xff]
    %v151 = vld [vmem:[#allocation2 + $0x228] sm:$0xff]
    %v152 = vld [vmem:[#allocation2 + $0x230] sm:$0xff]
    %v153 = vld [vmem:[#allocation2 + $0x238] sm:$0xff]
    %v154 = vld [vmem:[#allocation2 + $0x240] sm:$0xff]
    %v155 = vld [vmem:[#allocation2 + $0x248] sm:$0xff]
    %v156 = vld [vmem:[#allocation2 + $0x250] sm:$0xff]
    %v157 = vld [vmem:[#allocation2 + $0x258] sm:$0xff]
    %v158 = vld [vmem:[#allocation2 + $0x260] sm:$0xff]
    %v159 = vld [vmem:[#allocation2 + $0x268] sm:$0xff]
    %v160 = vld [vmem:[#allocation2 + $0x270] sm:$0xff]
    %v161 = vld [vmem:[#allocation2 + $0x278] sm:$0xff]
    %v162 = vld [vmem:[#allocation2 + $0x280] sm:$0xff]
    %v163 = vld [vmem:[#allocation2 + $0x288] sm:$0xff]
    %v164 = vld [vmem:[#allocation2 + $0x290] sm:$0xff]
    %v165 = vld [vmem:[#allocation2 + $0x298] sm:$0xff]
    %v166 = vld [vmem:[#allocation2 + $0x2a0] sm:$0xff]
    %v167 = vld [vmem:[#allocation2 + $0x2a8] sm:$0xff]
    %v168 = vld [vmem:[#allocation2 + $0x2b0] sm:$0xff]
    %v169 = vld [vmem:[#allocation2 + $0x2b8] sm:$0xff]
    %v170 = vld [vmem:[#allocation2 + $0x2c0] sm:$0xff]
    %v171 = vld [vmem:[#allocation2 + $0x2c8] sm:$0xff]
    %v172 = vld [vmem:[#allocation2 + $0x2d0] sm:$0xff]
    %v173 = vld [vmem:[#allocation2 + $0x2d8] sm:$0xff]
    %v174 = vld [vmem:[#allocation2 + $0x2e0] sm:$0xff]
    %v175 = vld [vmem:[#allocation2 + $0x2e8] sm:$0xff]
    %v176 = vld [vmem:[#allocation2 + $0x2f0] sm:$0xff]
    %v177 = vld [vmem:[#allocation2 + $0x2f8] sm:$0xff]
    %v178 = vld [vmem:[#allocation2 + $0x300] sm:$0xff]
    %v179 = vld [vmem:[#allocation2 + $0x308] sm:$0xff]
    %v180 = vld [vmem:[#allocation2 + $0x310] sm:$0xff]
    %v181 = vld [vmem:[#allocation2 + $0x318] sm:$0xff]
    %v182 = vld [vmem:[#allocation2 + $0x320] sm:$0xff]
    %v183 = vld [vmem:[#allocation2 + $0x328] sm:$0xff]
    %v184 = vld [vmem:[#allocation2 + $0x330] sm:$0xff]
    %v185 = vld [vmem:[#allocation2 + $0x338] sm:$0xff]
    %v186 = vld [vmem:[#allocation2 + $0x340] sm:$0xff]
    %v187 = vld [vmem:[#allocation2 + $0x348] sm:$0xff]
    %v188 = vld [vmem:[#allocation2 + $0x350] sm:$0xff]
    %v189 = vld [vmem:[#allocation2 + $0x358] sm:$0xff]
    %v190 = vld [vmem:[#allocation2 + $0x360] sm:$0xff]
    %v191 = vld [vmem:[#allocation2 + $0x368] sm:$0xff]
    %v192 = vld [vmem:[#allocation2 + $0x370] sm:$0xff]
    %v193 = vld [vmem:[#allocation2 + $0x378] sm:$0xff]
    %v194 = vld [vmem:[#allocation2 + $0x380] sm:$0xff]
    %v195 = vld [vmem:[#allocation2 + $0x388] sm:$0xff]
    %v196 = vld [vmem:[#allocation2 + $0x390] sm:$0xff]
    %v197 = vld [vmem:[#allocation2 + $0x398] sm:$0xff]
    %v198 = vld [vmem:[#allocation2 + $0x3a0] sm:$0xff]
    %v199 = vld [vmem:[#allocation2 + $0x3a8] sm:$0xff]
    %v200 = vld [vmem:[#allocation2 + $0x3b0] sm:$0xff]
    %v201 = vld [vmem:[#allocation2 + $0x3b8] sm:$0xff]
    %v202 = vld [vmem:[#allocation2 + $0x3c0] sm:$0xff]
    %v203 = vld [vmem:[#allocation2 + $0x3c8] sm:$0xff]
    %v204 = vld [vmem:[#allocation2 + $0x3d0] sm:$0xff]
    %v205 = vld [vmem:[#allocation2 + $0x3d8] sm:$0xff]
    %v206 = vld [vmem:[#allocation2 + $0x3e0] sm:$0xff]
    %v207 = vld [vmem:[#allocation2 + $0x3e8] sm:$0xff]
    %v208 = vld [vmem:[#allocation2 + $0x3f0] sm:$0xff]
    %v209 = vld [vmem:[#allocation2 + $0x3f8] sm:$0xff]
    %v210 = vld [vmem:[#allocation2 + $0x400] sm:$0xff]
    %v211 = vld [vmem:[#allocation2 + $0x408] sm:$0xff]
    %v212 = vld [vmem:[#allocation2 + $0x410] sm:$0xff]
    %v213 = vld [vmem:[#allocation2 + $0x418] sm:$0xff]
    %v214 = vld [vmem:[#allocation2 + $0x420] sm:$0xff]
    %v215 = vld [vmem:[#allocation2 + $0x428] sm:$0xff]
    %v216 = vld [vmem:[#allocation2 + $0x430] sm:$0xff]
    %v217 = vld [vmem:[#allocation2 + $0x438] sm:$0xff]
    %v218 = vld [vmem:[#allocation2 + $0x440] sm:$0xff]
    %v219 = vld [vmem:[#allocation2 + $0x448] sm:$0xff]
    %v220 = vld [vmem:[#allocation2 + $0x450] sm:$0xff]
    %v221 = vld [vmem:[#allocation2 + $0x458] sm:$0xff]
    %v222 = vld [vmem:[#allocation2 + $0x460] sm:$0xff]
    %v223 = vld [vmem:[#allocation2 + $0x468] sm:$0xff]
    %v224 = vld [vmem:[#allocation2 + $0x470] sm:$0xff]
    %v225 = vld [vmem:[#allocation2 + $0x478] sm:$0xff]
    %v226 = vld [vmem:[#allocation2 + $0x480] sm:$0xff]
    %v227 = vld [vmem:[#allocation2 + $0x488] sm:$0xff]
    %v228 = vld [vmem:[#allocation2 + $0x490] sm:$0xff]
    %v229 = vld [vmem:[#allocation2 + $0x498] sm:$0xff]
    %v230 = vld [vmem:[#allocation2 + $0x4a0] sm:$0xff]
    %v231 = vld [vmem:[#allocation2 + $0x4a8] sm:$0xff]
    %v232 = vld [vmem:[#allocation2 + $0x4b0] sm:$0xff]
    %v233 = vld [vmem:[#allocation2 + $0x4b8] sm:$0xff]
    %v234 = vld [vmem:[#allocation2 + $0x4c0] sm:$0xff]
    %v235 = vld [vmem:[#allocation2 + $0x4c8] sm:$0xff]
    %v236 = vld [vmem:[#allocation2 + $0x4d0] sm:$0xff]
    %v237 = vld [vmem:[#allocation2 + $0x4d8] sm:$0xff]
    %v238 = vld [vmem:[#allocation2 + $0x4e0] sm:$0xff]
    %v239 = vld [vmem:[#allocation2 + $0x4e8] sm:$0xff]
    %v240 = vld [vmem:[#allocation2 + $0x4f0] sm:$0xff]
    %v241 = vld [vmem:[#allocation2 + $0x4f8] sm:$0xff]
    %v242 = vld [vmem:[#allocation2 + $0x500] sm:$0xff]
    %v243 = vld [vmem:[#allocation2 + $0x508] sm:$0xff]
    %v244 = vld [vmem:[#allocation2 + $0x510] sm:$0xff]
    %v245 = vld [vmem:[#allocation2 + $0x518] sm:$0xff]
    %v246 = vld [vmem:[#allocation2 + $0x520] sm:$0xff]
    %v247 = vld [vmem:[#allocation2 + $0x528] sm:$0xff]
    %v248 = vld [vmem:[#allocation2 + $0x530] sm:$0xff]
    %v249 = vld [vmem:[#allocation2 + $0x538] sm:$0xff]
    %v250 = vld [vmem:[#allocation2 + $0x540] sm:$0xff]
    %v251 = vld [vmem:[#allocation2 + $0x548] sm:$0xff]
    %v252 = vld [vmem:[#allocation2 + $0x550] sm:$0xff]
    %v253 = vld [vmem:[#allocation2 + $0x558] sm:$0xff]
    %v254 = vld [vmem:[#allocation2 + $0x560] sm:$0xff]
    %v255 = vld [vmem:[#allocation2 + $0x568] sm:$0xff]
    %v256 = vld [vmem:[#allocation2 + $0x570] sm:$0xff]
    %v257 = vld [vmem:[#allocation2 + $0x578] sm:$0xff]
    %v258 = vld [vmem:[#allocation2 + $0x580] sm:$0xff]
    %v259 = vld [vmem:[#allocation2 + $0x588] sm:$0xff]
    %v260 = vld [vmem:[#allocation2 + $0x590] sm:$0xff]
    %v261 = vld [vmem:[#allocation2 + $0x598] sm:$0xff]
    %v262 = vld [vmem:[#allocation2 + $0x5a0] sm:$0xff]
    %v263 = vld [vmem:[#allocation2 + $0x5a8] sm:$0xff]
    %v264 = vld [vmem:[#allocation2 + $0x5b0] sm:$0xff]
    %v265 = vld [vmem:[#allocation2 + $0x5b8] sm:$0xff]
    %v266 = vld [vmem:[#allocation2 + $0x5c0] sm:$0xff]
    %v267 = vld [vmem:[#allocation2 + $0x5c8] sm:$0xff]
    %v268 = vld [vmem:[#allocation2 + $0x5d0] sm:$0xff]
    %v269 = vld [vmem:[#allocation2 + $0x5d8] sm:$0xff]
    %v270 = vld [vmem:[#allocation2 + $0x5e0] sm:$0xff]
    %v271 = vld [vmem:[#allocation2 + $0x5e8] sm:$0xff]
    %v272 = vld [vmem:[#allocation2 + $0x5f0] sm:$0xff]
    %v273 = vld [vmem:[#allocation2 + $0x5f8] sm:$0xff]
    %v274 = vld [vmem:[#allocation2 + $0x600] sm:$0xff]
    %v275 = vld [vmem:[#allocation2 + $0x608] sm:$0xff]
    %v276 = vld [vmem:[#allocation2 + $0x610] sm:$0xff]
    %v277 = vld [vmem:[#allocation2 + $0x618] sm:$0xff]
    %v278 = vld [vmem:[#allocation2 + $0x620] sm:$0xff]
    %v279 = vld [vmem:[#allocation2 + $0x628] sm:$0xff]
    %v280 = vld [vmem:[#allocation2 + $0x630] sm:$0xff]
    %v281 = vld [vmem:[#allocation2 + $0x638] sm:$0xff]
    %v282 = vld [vmem:[#allocation2 + $0x640] sm:$0xff]
    %v283 = vld [vmem:[#allocation2 + $0x648] sm:$0xff]
    %v284 = vld [vmem:[#allocation2 + $0x650] sm:$0xff]
    %v285 = vld [vmem:[#allocation2 + $0x658] sm:$0xff]
    %v286 = vld [vmem:[#allocation2 + $0x660] sm:$0xff]
    %v287 = vld [vmem:[#allocation2 + $0x668] sm:$0xff]
    %v288 = vld [vmem:[#allocation2 + $0x670] sm:$0xff]
    %v289 = vld [vmem:[#allocation2 + $0x678] sm:$0xff]
    %v290 = vld [vmem:[#allocation2 + $0x680] sm:$0xff]
    %v291 = vld [vmem:[#allocation2 + $0x688] sm:$0xff]
    %v292 = vld [vmem:[#allocation2 + $0x690] sm:$0xff]
    %v293 = vld [vmem:[#allocation2 + $0x698] sm:$0xff]
    %v294 = vld [vmem:[#allocation2 + $0x6a0] sm:$0xff]
    %v295 = vld [vmem:[#allocation2 + $0x6a8] sm:$0xff]
    %v296 = vld [vmem:[#allocation2 + $0x6b0] sm:$0xff]
    %v297 = vld [vmem:[#allocation2 + $0x6b8] sm:$0xff]
    %v298 = vld [vmem:[#allocation2 + $0x6c0] sm:$0xff]
    %v299 = vld [vmem:[#allocation2 + $0x6c8] sm:$0xff]
    %v300 = vld [vmem:[#allocation2 + $0x6d0] sm:$0xff]
    %v301 = vld [vmem:[#allocation2 + $0x6d8] sm:$0xff]
    %v302 = vld [vmem:[#allocation2 + $0x6e0] sm:$0xff]
    %v303 = vld [vmem:[#allocation2 + $0x6e8] sm:$0xff]
    %v304 = vld [vmem:[#allocation2 + $0x6f0] sm:$0xff]
    %v305 = vld [vmem:[#allocation2 + $0x6f8] sm:$0xff]
    %v306 = vld [vmem:[#allocation2 + $0x700] sm:$0xff]
    %v307 = vld [vmem:[#allocation2 + $0x708] sm:$0xff]
    %v308 = vld [vmem:[#allocation2 + $0x710] sm:$0xff]
    %v309 = vld [vmem:[#allocation2 + $0x718] sm:$0xff]
    %v310 = vld [vmem:[#allocation2 + $0x720] sm:$0xff]
    %v311 = vld [vmem:[#allocation2 + $0x728] sm:$0xff]
    %v312 = vld [vmem:[#allocation2 + $0x730] sm:$0xff]
    %v313 = vld [vmem:[#allocation2 + $0x738] sm:$0xff]
    %v314 = vld [vmem:[#allocation2 + $0x740] sm:$0xff]
    %v315 = vld [vmem:[#allocation2 + $0x748] sm:$0xff]
    %v316 = vld [vmem:[#allocation2 + $0x750] sm:$0xff]
    %v317 = vld [vmem:[#allocation2 + $0x758] sm:$0xff]
    %v318 = vld [vmem:[#allocation2 + $0x760] sm:$0xff]
    %v319 = vld [vmem:[#allocation2 + $0x768] sm:$0xff]
    %v320 = vld [vmem:[#allocation2 + $0x770] sm:$0xff]
    %v321 = vld [vmem:[#allocation2 + $0x778] sm:$0xff]
    %v322 = vld [vmem:[#allocation2 + $0x780] sm:$0xff]
    %v323 = vld [vmem:[#allocation2 + $0x788] sm:$0xff]
    %v324 = vld [vmem:[#allocation2 + $0x790] sm:$0xff]
    %v325 = vld [vmem:[#allocation2 + $0x798] sm:$0xff]
    %v326 = vld [vmem:[#allocation2 + $0x7a0] sm:$0xff]
    %v327 = vld [vmem:[#allocation2 + $0x7a8] sm:$0xff]
    %v328 = vld [vmem:[#allocation2 + $0x7b0] sm:$0xff]
    %v329 = vld [vmem:[#allocation2 + $0x7b8] sm:$0xff]
    %v330 = vld [vmem:[#allocation2 + $0x7c0] sm:$0xff]
    %v331 = vld [vmem:[#allocation2 + $0x7c8] sm:$0xff]
    %v332 = vld [vmem:[#allocation2 + $0x7d0] sm:$0xff]
    %v333 = vld [vmem:[#allocation2 + $0x7d8] sm:$0xff]
    %v334 = vld [vmem:[#allocation2 + $0x7e0] sm:$0xff]
    %v335 = vld [vmem:[#allocation2 + $0x7e8] sm:$0xff]
    %v336 = vld [vmem:[#allocation2 + $0x7f0] sm:$0xff]
    %v337 = vld [vmem:[#allocation2 + $0x7f8] sm:$0xff]
    %v338 = vld [vmem:[%s2] sm:$0xf]
    %v340 = vperm.slane %v338, 0
    %v341 = vperm.slane %v338, 1
    %v342 = vperm.slane %v338, 2
    %v343 = vperm.slane %v338, 3
    %v604 = vunpack.c.l.b16 %v82
    %v605 = vunpack.c.h.b16 %v82
    %v606 = vunpack.c.l.b16 %v83
    %v607 = vunpack.c.h.b16 %v83
    %v608 = vunpack.c.l.b16 %v84
    %v609 = vunpack.c.h.b16 %v84
    %v610 = vunpack.c.l.b16 %v85
    %v611 = vunpack.c.h.b16 %v85
    %v612 = vunpack.c.l.b16 %v86
    %v613 = vunpack.c.h.b16 %v86
    %v614 = vunpack.c.l.b16 %v87
    %v615 = vunpack.c.h.b16 %v87
    %v616 = vunpack.c.l.b16 %v88
    %v617 = vunpack.c.h.b16 %v88
    %v618 = vunpack.c.l.b16 %v89
    %v619 = vunpack.c.h.b16 %v89
    %v620 = vunpack.c.l.b16 %v90
    %v621 = vunpack.c.h.b16 %v90
    %v622 = vunpack.c.l.b16 %v91
    %v623 = vunpack.c.h.b16 %v91
    %v624 = vunpack.c.l.b16 %v92
    %v625 = vunpack.c.h.b16 %v92
    %v626 = vunpack.c.l.b16 %v93
    %v627 = vunpack.c.h.b16 %v93
    %v628 = vunpack.c.l.b16 %v94
    %v629 = vunpack.c.h.b16 %v94
    %v630 = vunpack.c.l.b16 %v95
    %v631 = vunpack.c.h.b16 %v95
    %v632 = vunpack.c.l.b16 %v96
    %v633 = vunpack.c.h.b16 %v96
    %v634 = vunpack.c.l.b16 %v97
    %v635 = vunpack.c.h.b16 %v97
    %v636 = vunpack.c.l.b16 %v98
    %v637 = vunpack.c.h.b16 %v98
    %v638 = vunpack.c.l.b16 %v99
    %v639 = vunpack.c.h.b16 %v99
    %v640 = vunpack.c.l.b16 %v100
    %v641 = vunpack.c.h.b16 %v100
    %v642 = vunpack.c.l.b16 %v101
    %v643 = vunpack.c.h.b16 %v101
    %v644 = vunpack.c.l.b16 %v102
    %v645 = vunpack.c.h.b16 %v102
    %v646 = vunpack.c.l.b16 %v103
    %v647 = vunpack.c.h.b16 %v103
    %v648 = vunpack.c.l.b16 %v104
    %v649 = vunpack.c.h.b16 %v104
    %v650 = vunpack.c.l.b16 %v105
    %v651 = vunpack.c.h.b16 %v105
    %v652 = vunpack.c.l.b16 %v106
    %v653 = vunpack.c.h.b16 %v106
    %v654 = vunpack.c.l.b16 %v107
    %v655 = vunpack.c.h.b16 %v107
    %v656 = vunpack.c.l.b16 %v108
    %v657 = vunpack.c.h.b16 %v108
    %v658 = vunpack.c.l.b16 %v109
    %v659 = vunpack.c.h.b16 %v109
    %v660 = vunpack.c.l.b16 %v110
    %v661 = vunpack.c.h.b16 %v110
    %v662 = vunpack.c.l.b16 %v111
    %v663 = vunpack.c.h.b16 %v111
    %v664 = vunpack.c.l.b16 %v112
    %v665 = vunpack.c.h.b16 %v112
    %v666 = vunpack.c.l.b16 %v113
    %v667 = vunpack.c.h.b16 %v113
    %v668 = vunpack.c.l.b16 %v114
    %v669 = vunpack.c.h.b16 %v114
    %v670 = vunpack.c.l.b16 %v115
    %v671 = vunpack.c.h.b16 %v115
    %v672 = vunpack.c.l.b16 %v116
    %v673 = vunpack.c.h.b16 %v116
    %v674 = vunpack.c.l.b16 %v117
    %v675 = vunpack.c.h.b16 %v117
    %v676 = vunpack.c.l.b16 %v118
    %v677 = vunpack.c.h.b16 %v118
    %v678 = vunpack.c.l.b16 %v119
    %v679 = vunpack.c.h.b16 %v119
    %v680 = vunpack.c.l.b16 %v120
    %v681 = vunpack.c.h.b16 %v120
    %v682 = vunpack.c.l.b16 %v121
    %v683 = vunpack.c.h.b16 %v121
    %v684 = vunpack.c.l.b16 %v122
    %v685 = vunpack.c.h.b16 %v122
    %v686 = vunpack.c.l.b16 %v123
    %v687 = vunpack.c.h.b16 %v123
    %v688 = vunpack.c.l.b16 %v124
    %v689 = vunpack.c.h.b16 %v124
    %v690 = vunpack.c.l.b16 %v125
    %v691 = vunpack.c.h.b16 %v125
    %v692 = vunpack.c.l.b16 %v126
    %v693 = vunpack.c.h.b16 %v126
    %v694 = vunpack.c.l.b16 %v127
    %v695 = vunpack.c.h.b16 %v127
    %v696 = vunpack.c.l.b16 %v128
    %v697 = vunpack.c.h.b16 %v128
    %v698 = vunpack.c.l.b16 %v129
    %v699 = vunpack.c.h.b16 %v129
    %v700 = vunpack.c.l.b16 %v130
    %v701 = vunpack.c.h.b16 %v130
    %v702 = vunpack.c.l.b16 %v131
    %v703 = vunpack.c.h.b16 %v131
    %v704 = vunpack.c.l.b16 %v132
    %v705 = vunpack.c.h.b16 %v132
    %v706 = vunpack.c.l.b16 %v133
    %v707 = vunpack.c.h.b16 %v133
    %v708 = vunpack.c.l.b16 %v134
    %v709 = vunpack.c.h.b16 %v134
    %v710 = vunpack.c.l.b16 %v135
    %v711 = vunpack.c.h.b16 %v135
    %v712 = vunpack.c.l.b16 %v136
    %v713 = vunpack.c.h.b16 %v136
    %v714 = vunpack.c.l.b16 %v137
    %v715 = vunpack.c.h.b16 %v137
    %v716 = vunpack.c.l.b16 %v138
    %v717 = vunpack.c.h.b16 %v138
    %v718 = vunpack.c.l.b16 %v139
    %v719 = vunpack.c.h.b16 %v139
    %v720 = vunpack.c.l.b16 %v140
    %v721 = vunpack.c.h.b16 %v140
    %v722 = vunpack.c.l.b16 %v141
    %v723 = vunpack.c.h.b16 %v141
    %v724 = vunpack.c.l.b16 %v142
    %v725 = vunpack.c.h.b16 %v142
    %v726 = vunpack.c.l.b16 %v143
    %v727 = vunpack.c.h.b16 %v143
    %v728 = vunpack.c.l.b16 %v144
    %v729 = vunpack.c.h.b16 %v144
    %v730 = vunpack.c.l.b16 %v145
    %v731 = vunpack.c.h.b16 %v145
    %v732 = vunpack.c.l.b16 %v146
    %v733 = vunpack.c.h.b16 %v146
    %v734 = vunpack.c.l.b16 %v147
    %v735 = vunpack.c.h.b16 %v147
    %v736 = vunpack.c.l.b16 %v148
    %v737 = vunpack.c.h.b16 %v148
    %v738 = vunpack.c.l.b16 %v149
    %v739 = vunpack.c.h.b16 %v149
    %v740 = vunpack.c.l.b16 %v150
    %v741 = vunpack.c.h.b16 %v150
    %v742 = vunpack.c.l.b16 %v151
    %v743 = vunpack.c.h.b16 %v151
    %v744 = vunpack.c.l.b16 %v152
    %v745 = vunpack.c.h.b16 %v152
    %v746 = vunpack.c.l.b16 %v153
    %v747 = vunpack.c.h.b16 %v153
    %v748 = vunpack.c.l.b16 %v154
    %v749 = vunpack.c.h.b16 %v154
    %v750 = vunpack.c.l.b16 %v155
    %v751 = vunpack.c.h.b16 %v155
    %v752 = vunpack.c.l.b16 %v156
    %v753 = vunpack.c.h.b16 %v156
    %v754 = vunpack.c.l.b16 %v157
    %v755 = vunpack.c.h.b16 %v157
    %v756 = vunpack.c.l.b16 %v158
    %v757 = vunpack.c.h.b16 %v158
    %v758 = vunpack.c.l.b16 %v159
    %v759 = vunpack.c.h.b16 %v159
    %v760 = vunpack.c.l.b16 %v160
    %v761 = vunpack.c.h.b16 %v160
    %v762 = vunpack.c.l.b16 %v161
    %v763 = vunpack.c.h.b16 %v161
    %v764 = vunpack.c.l.b16 %v162
    %v765 = vunpack.c.h.b16 %v162
    %v766 = vunpack.c.l.b16 %v163
    %v767 = vunpack.c.h.b16 %v163
    %v768 = vunpack.c.l.b16 %v164
    %v769 = vunpack.c.h.b16 %v164
    %v770 = vunpack.c.l.b16 %v165
    %v771 = vunpack.c.h.b16 %v165
    %v772 = vunpack.c.l.b16 %v166
    %v773 = vunpack.c.h.b16 %v166
    %v774 = vunpack.c.l.b16 %v167
    %v775 = vunpack.c.h.b16 %v167
    %v776 = vunpack.c.l.b16 %v168
    %v777 = vunpack.c.h.b16 %v168
    %v778 = vunpack.c.l.b16 %v169
    %v779 = vunpack.c.h.b16 %v169
    %v780 = vunpack.c.l.b16 %v170
    %v781 = vunpack.c.h.b16 %v170
    %v782 = vunpack.c.l.b16 %v171
    %v783 = vunpack.c.h.b16 %v171
    %v784 = vunpack.c.l.b16 %v172
    %v785 = vunpack.c.h.b16 %v172
    %v786 = vunpack.c.l.b16 %v173
    %v787 = vunpack.c.h.b16 %v173
    %v788 = vunpack.c.l.b16 %v174
    %v789 = vunpack.c.h.b16 %v174
    %v790 = vunpack.c.l.b16 %v175
    %v791 = vunpack.c.h.b16 %v175
    %v792 = vunpack.c.l.b16 %v176
    %v793 = vunpack.c.h.b16 %v176
    %v794 = vunpack.c.l.b16 %v177
    %v795 = vunpack.c.h.b16 %v177
    %v796 = vunpack.c.l.b16 %v178
    %v797 = vunpack.c.h.b16 %v178
    %v798 = vunpack.c.l.b16 %v179
    %v799 = vunpack.c.h.b16 %v179
    %v800 = vunpack.c.l.b16 %v180
    %v801 = vunpack.c.h.b16 %v180
    %v802 = vunpack.c.l.b16 %v181
    %v803 = vunpack.c.h.b16 %v181
    %v804 = vunpack.c.l.b16 %v182
    %v805 = vunpack.c.h.b16 %v182
    %v806 = vunpack.c.l.b16 %v183
    %v807 = vunpack.c.h.b16 %v183
    %v808 = vunpack.c.l.b16 %v184
    %v809 = vunpack.c.h.b16 %v184
    %v810 = vunpack.c.l.b16 %v185
    %v811 = vunpack.c.h.b16 %v185
    %v812 = vunpack.c.l.b16 %v186
    %v813 = vunpack.c.h.b16 %v186
    %v814 = vunpack.c.l.b16 %v187
    %v815 = vunpack.c.h.b16 %v187
    %v816 = vunpack.c.l.b16 %v188
    %v817 = vunpack.c.h.b16 %v188
    %v818 = vunpack.c.l.b16 %v189
    %v819 = vunpack.c.h.b16 %v189
    %v820 = vunpack.c.l.b16 %v190
    %v821 = vunpack.c.h.b16 %v190
    %v822 = vunpack.c.l.b16 %v191
    %v823 = vunpack.c.h.b16 %v191
    %v824 = vunpack.c.l.b16 %v192
    %v825 = vunpack.c.h.b16 %v192
    %v826 = vunpack.c.l.b16 %v193
    %v827 = vunpack.c.h.b16 %v193
    %v828 = vunpack.c.l.b16 %v194
    %v829 = vunpack.c.h.b16 %v194
    %v830 = vunpack.c.l.b16 %v195
    %v831 = vunpack.c.h.b16 %v195
    %v832 = vunpack.c.l.b16 %v196
    %v833 = vunpack.c.h.b16 %v196
    %v834 = vunpack.c.l.b16 %v197
    %v835 = vunpack.c.h.b16 %v197
    %v836 = vunpack.c.l.b16 %v198
    %v837 = vunpack.c.h.b16 %v198
    %v838 = vunpack.c.l.b16 %v199
    %v839 = vunpack.c.h.b16 %v199
    %v840 = vunpack.c.l.b16 %v200
    %v841 = vunpack.c.h.b16 %v200
    %v842 = vunpack.c.l.b16 %v201
    %v843 = vunpack.c.h.b16 %v201
    %v844 = vunpack.c.l.b16 %v202
    %v845 = vunpack.c.h.b16 %v202
    %v846 = vunpack.c.l.b16 %v203
    %v847 = vunpack.c.h.b16 %v203
    %v848 = vunpack.c.l.b16 %v204
    %v849 = vunpack.c.h.b16 %v204
    %v850 = vunpack.c.l.b16 %v205
    %v851 = vunpack.c.h.b16 %v205
    %v852 = vunpack.c.l.b16 %v206
    %v853 = vunpack.c.h.b16 %v206
    %v854 = vunpack.c.l.b16 %v207
    %v855 = vunpack.c.h.b16 %v207
    %v856 = vunpack.c.l.b16 %v208
    %v857 = vunpack.c.h.b16 %v208
    %v858 = vunpack.c.l.b16 %v209
    %v859 = vunpack.c.h.b16 %v209
    %v860 = vunpack.c.l.b16 %v210
    %v861 = vunpack.c.h.b16 %v210
    %v862 = vunpack.c.l.b16 %v211
    %v863 = vunpack.c.h.b16 %v211
    %v864 = vunpack.c.l.b16 %v212
    %v865 = vunpack.c.h.b16 %v212
    %v866 = vunpack.c.l.b16 %v213
    %v867 = vunpack.c.h.b16 %v213
    %v868 = vunpack.c.l.b16 %v214
    %v869 = vunpack.c.h.b16 %v214
    %v870 = vunpack.c.l.b16 %v215
    %v871 = vunpack.c.h.b16 %v215
    %v872 = vunpack.c.l.b16 %v216
    %v873 = vunpack.c.h.b16 %v216
    %v874 = vunpack.c.l.b16 %v217
    %v875 = vunpack.c.h.b16 %v217
    %v876 = vunpack.c.l.b16 %v218
    %v877 = vunpack.c.h.b16 %v218
    %v878 = vunpack.c.l.b16 %v219
    %v879 = vunpack.c.h.b16 %v219
    %v880 = vunpack.c.l.b16 %v220
    %v881 = vunpack.c.h.b16 %v220
    %v882 = vunpack.c.l.b16 %v221
    %v883 = vunpack.c.h.b16 %v221
    %v884 = vunpack.c.l.b16 %v222
    %v885 = vunpack.c.h.b16 %v222
    %v886 = vunpack.c.l.b16 %v223
    %v887 = vunpack.c.h.b16 %v223
    %v888 = vunpack.c.l.b16 %v224
    %v889 = vunpack.c.h.b16 %v224
    %v890 = vunpack.c.l.b16 %v225
    %v891 = vunpack.c.h.b16 %v225
    %v892 = vunpack.c.l.b16 %v226
    %v893 = vunpack.c.h.b16 %v226
    %v894 = vunpack.c.l.b16 %v227
    %v895 = vunpack.c.h.b16 %v227
    %v896 = vunpack.c.l.b16 %v228
    %v897 = vunpack.c.h.b16 %v228
    %v898 = vunpack.c.l.b16 %v229
    %v899 = vunpack.c.h.b16 %v229
    %v900 = vunpack.c.l.b16 %v230
    %v901 = vunpack.c.h.b16 %v230
    %v902 = vunpack.c.l.b16 %v231
    %v903 = vunpack.c.h.b16 %v231
    %v904 = vunpack.c.l.b16 %v232
    %v905 = vunpack.c.h.b16 %v232
    %v906 = vunpack.c.l.b16 %v233
    %v907 = vunpack.c.h.b16 %v233
    %v908 = vunpack.c.l.b16 %v234
    %v909 = vunpack.c.h.b16 %v234
    %v910 = vunpack.c.l.b16 %v235
    %v911 = vunpack.c.h.b16 %v235
    %v912 = vunpack.c.l.b16 %v236
    %v913 = vunpack.c.h.b16 %v236
    %v914 = vunpack.c.l.b16 %v237
    %v915 = vunpack.c.h.b16 %v237
    %v916 = vunpack.c.l.b16 %v238
    %v917 = vunpack.c.h.b16 %v238
    %v918 = vunpack.c.l.b16 %v239
    %v919 = vunpack.c.h.b16 %v239
    %v920 = vunpack.c.l.b16 %v240
    %v921 = vunpack.c.h.b16 %v240
    %v922 = vunpack.c.l.b16 %v241
    %v923 = vunpack.c.h.b16 %v241
    %v924 = vunpack.c.l.b16 %v242
    %v925 = vunpack.c.h.b16 %v242
    %v926 = vunpack.c.l.b16 %v243
    %v927 = vunpack.c.h.b16 %v243
    %v928 = vunpack.c.l.b16 %v244
    %v929 = vunpack.c.h.b16 %v244
    %v930 = vunpack.c.l.b16 %v245
    %v931 = vunpack.c.h.b16 %v245
    %v932 = vunpack.c.l.b16 %v246
    %v933 = vunpack.c.h.b16 %v246
    %v934 = vunpack.c.l.b16 %v247
    %v935 = vunpack.c.h.b16 %v247
    %v936 = vunpack.c.l.b16 %v248
    %v937 = vunpack.c.h.b16 %v248
    %v938 = vunpack.c.l.b16 %v249
    %v939 = vunpack.c.h.b16 %v249
    %v940 = vunpack.c.l.b16 %v250
    %v941 = vunpack.c.h.b16 %v250
    %v942 = vunpack.c.l.b16 %v251
    %v943 = vunpack.c.h.b16 %v251
    %v944 = vunpack.c.l.b16 %v252
    %v945 = vunpack.c.h.b16 %v252
    %v946 = vunpack.c.l.b16 %v253
    %v947 = vunpack.c.h.b16 %v253
    %v948 = vunpack.c.l.b16 %v254
    %v949 = vunpack.c.h.b16 %v254
    %v950 = vunpack.c.l.b16 %v255
    %v951 = vunpack.c.h.b16 %v255
    %v952 = vunpack.c.l.b16 %v256
    %v953 = vunpack.c.h.b16 %v256
    %v954 = vunpack.c.l.b16 %v257
    %v955 = vunpack.c.h.b16 %v257
    %v956 = vunpack.c.l.b16 %v258
    %v957 = vunpack.c.h.b16 %v258
    %v958 = vunpack.c.l.b16 %v259
    %v959 = vunpack.c.h.b16 %v259
    %v960 = vunpack.c.l.b16 %v260
    %v961 = vunpack.c.h.b16 %v260
    %v962 = vunpack.c.l.b16 %v261
    %v963 = vunpack.c.h.b16 %v261
    %v964 = vunpack.c.l.b16 %v262
    %v965 = vunpack.c.h.b16 %v262
    %v966 = vunpack.c.l.b16 %v263
    %v967 = vunpack.c.h.b16 %v263
    %v968 = vunpack.c.l.b16 %v264
    %v969 = vunpack.c.h.b16 %v264
    %v970 = vunpack.c.l.b16 %v265
    %v971 = vunpack.c.h.b16 %v265
    %v972 = vunpack.c.l.b16 %v266
    %v973 = vunpack.c.h.b16 %v266
    %v974 = vunpack.c.l.b16 %v267
    %v975 = vunpack.c.h.b16 %v267
    %v976 = vunpack.c.l.b16 %v268
    %v977 = vunpack.c.h.b16 %v268
    %v978 = vunpack.c.l.b16 %v269
    %v979 = vunpack.c.h.b16 %v269
    %v980 = vunpack.c.l.b16 %v270
    %v981 = vunpack.c.h.b16 %v270
    %v982 = vunpack.c.l.b16 %v271
    %v983 = vunpack.c.h.b16 %v271
    %v984 = vunpack.c.l.b16 %v272
    %v985 = vunpack.c.h.b16 %v272
    %v986 = vunpack.c.l.b16 %v273
    %v987 = vunpack.c.h.b16 %v273
    %v988 = vunpack.c.l.b16 %v274
    %v989 = vunpack.c.h.b16 %v274
    %v990 = vunpack.c.l.b16 %v275
    %v991 = vunpack.c.h.b16 %v275
    %v992 = vunpack.c.l.b16 %v276
    %v993 = vunpack.c.h.b16 %v276
    %v994 = vunpack.c.l.b16 %v277
    %v995 = vunpack.c.h.b16 %v277
    %v996 = vunpack.c.l.b16 %v278
    %v997 = vunpack.c.h.b16 %v278
    %v998 = vunpack.c.l.b16 %v279
    %v999 = vunpack.c.h.b16 %v279
    %v1000 = vunpack.c.l.b16 %v280
    %v1001 = vunpack.c.h.b16 %v280
    %v1002 = vunpack.c.l.b16 %v281
    %v1003 = vunpack.c.h.b16 %v281
    %v1004 = vunpack.c.l.b16 %v282
    %v1005 = vunpack.c.h.b16 %v282
    %v1006 = vunpack.c.l.b16 %v283
    %v1007 = vunpack.c.h.b16 %v283
    %v1008 = vunpack.c.l.b16 %v284
    %v1009 = vunpack.c.h.b16 %v284
    %v1010 = vunpack.c.l.b16 %v285
    %v1011 = vunpack.c.h.b16 %v285
    %v1012 = vunpack.c.l.b16 %v286
    %v1013 = vunpack.c.h.b16 %v286
    %v1014 = vunpack.c.l.b16 %v287
    %v1015 = vunpack.c.h.b16 %v287
    %v1016 = vunpack.c.l.b16 %v288
    %v1017 = vunpack.c.h.b16 %v288
    %v1018 = vunpack.c.l.b16 %v289
    %v1019 = vunpack.c.h.b16 %v289
    %v1020 = vunpack.c.l.b16 %v290
    %v1021 = vunpack.c.h.b16 %v290
    %v1022 = vunpack.c.l.b16 %v291
    %v1023 = vunpack.c.h.b16 %v291
    %v1024 = vunpack.c.l.b16 %v292
    %v1025 = vunpack.c.h.b16 %v292
    %v1026 = vunpack.c.l.b16 %v293
    %v1027 = vunpack.c.h.b16 %v293
    %v1028 = vunpack.c.l.b16 %v294
    %v1029 = vunpack.c.h.b16 %v294
    %v1030 = vunpack.c.l.b16 %v295
    %v1031 = vunpack.c.h.b16 %v295
    %v1032 = vunpack.c.l.b16 %v296
    %v1033 = vunpack.c.h.b16 %v296
    %v1034 = vunpack.c.l.b16 %v297
    %v1035 = vunpack.c.h.b16 %v297
    %v1036 = vunpack.c.l.b16 %v298
    %v1037 = vunpack.c.h.b16 %v298
    %v1038 = vunpack.c.l.b16 %v299
    %v1039 = vunpack.c.h.b16 %v299
    %v1040 = vunpack.c.l.b16 %v300
    %v1041 = vunpack.c.h.b16 %v300
    %v1042 = vunpack.c.l.b16 %v301
    %v1043 = vunpack.c.h.b16 %v301
    %v1044 = vunpack.c.l.b16 %v302
    %v1045 = vunpack.c.h.b16 %v302
    %v1046 = vunpack.c.l.b16 %v303
    %v1047 = vunpack.c.h.b16 %v303
    %v1048 = vunpack.c.l.b16 %v304
    %v1049 = vunpack.c.h.b16 %v304
    %v1050 = vunpack.c.l.b16 %v305
    %v1051 = vunpack.c.h.b16 %v305
    %v1052 = vunpack.c.l.b16 %v306
    %v1053 = vunpack.c.h.b16 %v306
    %v1054 = vunpack.c.l.b16 %v307
    %v1055 = vunpack.c.h.b16 %v307
    %v1056 = vunpack.c.l.b16 %v308
    %v1057 = vunpack.c.h.b16 %v308
    %v1058 = vunpack.c.l.b16 %v309
    %v1059 = vunpack.c.h.b16 %v309
    %v1060 = vunpack.c.l.b16 %v310
    %v1061 = vunpack.c.h.b16 %v310
    %v1062 = vunpack.c.l.b16 %v311
    %v1063 = vunpack.c.h.b16 %v311
    %v1064 = vunpack.c.l.b16 %v312
    %v1065 = vunpack.c.h.b16 %v312
    %v1066 = vunpack.c.l.b16 %v313
    %v1067 = vunpack.c.h.b16 %v313
    %v1068 = vunpack.c.l.b16 %v314
    %v1069 = vunpack.c.h.b16 %v314
    %v1070 = vunpack.c.l.b16 %v315
    %v1071 = vunpack.c.h.b16 %v315
    %v1072 = vunpack.c.l.b16 %v316
    %v1073 = vunpack.c.h.b16 %v316
    %v1074 = vunpack.c.l.b16 %v317
    %v1075 = vunpack.c.h.b16 %v317
    %v1076 = vunpack.c.l.b16 %v318
    %v1077 = vunpack.c.h.b16 %v318
    %v1078 = vunpack.c.l.b16 %v319
    %v1079 = vunpack.c.h.b16 %v319
    %v1080 = vunpack.c.l.b16 %v320
    %v1081 = vunpack.c.h.b16 %v320
    %v1082 = vunpack.c.l.b16 %v321
    %v1083 = vunpack.c.h.b16 %v321
    %v1084 = vunpack.c.l.b16 %v322
    %v1085 = vunpack.c.h.b16 %v322
    %v1086 = vunpack.c.l.b16 %v323
    %v1087 = vunpack.c.h.b16 %v323
    %v1088 = vunpack.c.l.b16 %v324
    %v1089 = vunpack.c.h.b16 %v324
    %v1090 = vunpack.c.l.b16 %v325
    %v1091 = vunpack.c.h.b16 %v325
    %v1092 = vunpack.c.l.b16 %v326
    %v1093 = vunpack.c.h.b16 %v326
    %v1094 = vunpack.c.l.b16 %v327
    %v1095 = vunpack.c.h.b16 %v327
    %v1096 = vunpack.c.l.b16 %v328
    %v1097 = vunpack.c.h.b16 %v328
    %v1098 = vunpack.c.l.b16 %v329
    %v1099 = vunpack.c.h.b16 %v329
    %v1100 = vunpack.c.l.b16 %v330
    %v1101 = vunpack.c.h.b16 %v330
    %v1102 = vunpack.c.l.b16 %v331
    %v1103 = vunpack.c.h.b16 %v331
    %v1104 = vunpack.c.l.b16 %v332
    %v1105 = vunpack.c.h.b16 %v332
    %v1106 = vunpack.c.l.b16 %v333
    %v1107 = vunpack.c.h.b16 %v333
    %v1108 = vunpack.c.l.b16 %v334
    %v1109 = vunpack.c.h.b16 %v334
    %v1110 = vunpack.c.l.b16 %v335
    %v1111 = vunpack.c.h.b16 %v335
    %v1112 = vunpack.c.l.b16 %v336
    %v1113 = vunpack.c.h.b16 %v336
    %v1114 = vunpack.c.l.b16 %v337
    %v1115 = vunpack.c.h.b16 %v337
    %v1116 = vpack.c.b16 %v608, %v604
    %v1117 = vpack.c.b16 %v609, %v605
    %v1118 = vpack.c.b16 %v610, %v606
    %v1119 = vpack.c.b16 %v611, %v607
    %v1120 = vpack.c.b16 %v616, %v612
    %v1121 = vpack.c.b16 %v617, %v613
    %v1122 = vpack.c.b16 %v618, %v614
    %v1123 = vpack.c.b16 %v619, %v615
    %v1124 = vpack.c.b16 %v624, %v620
    %v1125 = vpack.c.b16 %v625, %v621
    %v1126 = vpack.c.b16 %v626, %v622
    %v1127 = vpack.c.b16 %v627, %v623
    %v1128 = vpack.c.b16 %v632, %v628
    %v1129 = vpack.c.b16 %v633, %v629
    %v1130 = vpack.c.b16 %v634, %v630
    %v1131 = vpack.c.b16 %v635, %v631
    %v1132 = vpack.c.b16 %v640, %v636
    %v1133 = vpack.c.b16 %v641, %v637
    %v1134 = vpack.c.b16 %v642, %v638
    %v1135 = vpack.c.b16 %v643, %v639
    %v1136 = vpack.c.b16 %v648, %v644
    %v1137 = vpack.c.b16 %v649, %v645
    %v1138 = vpack.c.b16 %v650, %v646
    %v1139 = vpack.c.b16 %v651, %v647
    %v1140 = vpack.c.b16 %v656, %v652
    %v1141 = vpack.c.b16 %v657, %v653
    %v1142 = vpack.c.b16 %v658, %v654
    %v1143 = vpack.c.b16 %v659, %v655
    %v1144 = vpack.c.b16 %v664, %v660
    %v1145 = vpack.c.b16 %v665, %v661
    %v1146 = vpack.c.b16 %v666, %v662
    %v1147 = vpack.c.b16 %v667, %v663
    %v1148 = vpack.c.b16 %v672, %v668
    %v1149 = vpack.c.b16 %v673, %v669
    %v1150 = vpack.c.b16 %v674, %v670
    %v1151 = vpack.c.b16 %v675, %v671
    %v1152 = vpack.c.b16 %v680, %v676
    %v1153 = vpack.c.b16 %v681, %v677
    %v1154 = vpack.c.b16 %v682, %v678
    %v1155 = vpack.c.b16 %v683, %v679
    %v1156 = vpack.c.b16 %v688, %v684
    %v1157 = vpack.c.b16 %v689, %v685
    %v1158 = vpack.c.b16 %v690, %v686
    %v1159 = vpack.c.b16 %v691, %v687
    %v1160 = vpack.c.b16 %v696, %v692
    %v1161 = vpack.c.b16 %v697, %v693
    %v1162 = vpack.c.b16 %v698, %v694
    %v1163 = vpack.c.b16 %v699, %v695
    %v1164 = vpack.c.b16 %v704, %v700
    %v1165 = vpack.c.b16 %v705, %v701
    %v1166 = vpack.c.b16 %v706, %v702
    %v1167 = vpack.c.b16 %v707, %v703
    %v1168 = vpack.c.b16 %v712, %v708
    %v1169 = vpack.c.b16 %v713, %v709
    %v1170 = vpack.c.b16 %v714, %v710
    %v1171 = vpack.c.b16 %v715, %v711
    %v1172 = vpack.c.b16 %v720, %v716
    %v1173 = vpack.c.b16 %v721, %v717
    %v1174 = vpack.c.b16 %v722, %v718
    %v1175 = vpack.c.b16 %v723, %v719
    %v1176 = vpack.c.b16 %v728, %v724
    %v1177 = vpack.c.b16 %v729, %v725
    %v1178 = vpack.c.b16 %v730, %v726
    %v1179 = vpack.c.b16 %v731, %v727
    %v1180 = vpack.c.b16 %v736, %v732
    %v1181 = vpack.c.b16 %v737, %v733
    %v1182 = vpack.c.b16 %v738, %v734
    %v1183 = vpack.c.b16 %v739, %v735
    %v1184 = vpack.c.b16 %v744, %v740
    %v1185 = vpack.c.b16 %v745, %v741
    %v1186 = vpack.c.b16 %v746, %v742
    %v1187 = vpack.c.b16 %v747, %v743
    %v1188 = vpack.c.b16 %v752, %v748
    %v1189 = vpack.c.b16 %v753, %v749
    %v1190 = vpack.c.b16 %v754, %v750
    %v1191 = vpack.c.b16 %v755, %v751
    %v1192 = vpack.c.b16 %v760, %v756
    %v1193 = vpack.c.b16 %v761, %v757
    %v1194 = vpack.c.b16 %v762, %v758
    %v1195 = vpack.c.b16 %v763, %v759
    %v1196 = vpack.c.b16 %v768, %v764
    %v1197 = vpack.c.b16 %v769, %v765
    %v1198 = vpack.c.b16 %v770, %v766
    %v1199 = vpack.c.b16 %v771, %v767
    %v1200 = vpack.c.b16 %v776, %v772
    %v1201 = vpack.c.b16 %v777, %v773
    %v1202 = vpack.c.b16 %v778, %v774
    %v1203 = vpack.c.b16 %v779, %v775
    %v1204 = vpack.c.b16 %v784, %v780
    %v1205 = vpack.c.b16 %v785, %v781
    %v1206 = vpack.c.b16 %v786, %v782
    %v1207 = vpack.c.b16 %v787, %v783
    %v1208 = vpack.c.b16 %v792, %v788
    %v1209 = vpack.c.b16 %v793, %v789
    %v1210 = vpack.c.b16 %v794, %v790
    %v1211 = vpack.c.b16 %v795, %v791
    %v1212 = vpack.c.b16 %v800, %v796
    %v1213 = vpack.c.b16 %v801, %v797
    %v1214 = vpack.c.b16 %v802, %v798
    %v1215 = vpack.c.b16 %v803, %v799
    %v1216 = vpack.c.b16 %v808, %v804
    %v1217 = vpack.c.b16 %v809, %v805
    %v1218 = vpack.c.b16 %v810, %v806
    %v1219 = vpack.c.b16 %v811, %v807
    %v1220 = vpack.c.b16 %v816, %v812
    %v1221 = vpack.c.b16 %v817, %v813
    %v1222 = vpack.c.b16 %v818, %v814
    %v1223 = vpack.c.b16 %v819, %v815
    %v1224 = vpack.c.b16 %v824, %v820
    %v1225 = vpack.c.b16 %v825, %v821
    %v1226 = vpack.c.b16 %v826, %v822
    %v1227 = vpack.c.b16 %v827, %v823
    %v1228 = vpack.c.b16 %v832, %v828
    %v1229 = vpack.c.b16 %v833, %v829
    %v1230 = vpack.c.b16 %v834, %v830
    %v1231 = vpack.c.b16 %v835, %v831
    %v1232 = vpack.c.b16 %v840, %v836
    %v1233 = vpack.c.b16 %v841, %v837
    %v1234 = vpack.c.b16 %v842, %v838
    %v1235 = vpack.c.b16 %v843, %v839
    %v1236 = vpack.c.b16 %v848, %v844
    %v1237 = vpack.c.b16 %v849, %v845
    %v1238 = vpack.c.b16 %v850, %v846
    %v1239 = vpack.c.b16 %v851, %v847
    %v1240 = vpack.c.b16 %v856, %v852
    %v1241 = vpack.c.b16 %v857, %v853
    %v1242 = vpack.c.b16 %v858, %v854
    %v1243 = vpack.c.b16 %v859, %v855
    %v1244 = vpack.c.b16 %v864, %v860
    %v1245 = vpack.c.b16 %v865, %v861
    %v1246 = vpack.c.b16 %v866, %v862
    %v1247 = vpack.c.b16 %v867, %v863
    %v1248 = vpack.c.b16 %v872, %v868
    %v1249 = vpack.c.b16 %v873, %v869
    %v1250 = vpack.c.b16 %v874, %v870
    %v1251 = vpack.c.b16 %v875, %v871
    %v1252 = vpack.c.b16 %v880, %v876
    %v1253 = vpack.c.b16 %v881, %v877
    %v1254 = vpack.c.b16 %v882, %v878
    %v1255 = vpack.c.b16 %v883, %v879
    %v1256 = vpack.c.b16 %v888, %v884
    %v1257 = vpack.c.b16 %v889, %v885
    %v1258 = vpack.c.b16 %v890, %v886
    %v1259 = vpack.c.b16 %v891, %v887
    %v1260 = vpack.c.b16 %v896, %v892
    %v1261 = vpack.c.b16 %v897, %v893
    %v1262 = vpack.c.b16 %v898, %v894
    %v1263 = vpack.c.b16 %v899, %v895
    %v1264 = vpack.c.b16 %v904, %v900
    %v1265 = vpack.c.b16 %v905, %v901
    %v1266 = vpack.c.b16 %v906, %v902
    %v1267 = vpack.c.b16 %v907, %v903
    %v1268 = vpack.c.b16 %v912, %v908
    %v1269 = vpack.c.b16 %v913, %v909
    %v1270 = vpack.c.b16 %v914, %v910
    %v1271 = vpack.c.b16 %v915, %v911
    %v1272 = vpack.c.b16 %v920, %v916
    %v1273 = vpack.c.b16 %v921, %v917
    %v1274 = vpack.c.b16 %v922, %v918
    %v1275 = vpack.c.b16 %v923, %v919
    %v1276 = vpack.c.b16 %v928, %v924
    %v1277 = vpack.c.b16 %v929, %v925
    %v1278 = vpack.c.b16 %v930, %v926
    %v1279 = vpack.c.b16 %v931, %v927
    %v1280 = vpack.c.b16 %v936, %v932
    %v1281 = vpack.c.b16 %v937, %v933
    %v1282 = vpack.c.b16 %v938, %v934
    %v1283 = vpack.c.b16 %v939, %v935
    %v1284 = vpack.c.b16 %v944, %v940
    %v1285 = vpack.c.b16 %v945, %v941
    %v1286 = vpack.c.b16 %v946, %v942
    %v1287 = vpack.c.b16 %v947, %v943
    %v1288 = vpack.c.b16 %v952, %v948
    %v1289 = vpack.c.b16 %v953, %v949
    %v1290 = vpack.c.b16 %v954, %v950
    %v1291 = vpack.c.b16 %v955, %v951
    %v1292 = vpack.c.b16 %v960, %v956
    %v1293 = vpack.c.b16 %v961, %v957
    %v1294 = vpack.c.b16 %v962, %v958
    %v1295 = vpack.c.b16 %v963, %v959
    %v1296 = vpack.c.b16 %v968, %v964
    %v1297 = vpack.c.b16 %v969, %v965
    %v1298 = vpack.c.b16 %v970, %v966
    %v1299 = vpack.c.b16 %v971, %v967
    %v1300 = vpack.c.b16 %v976, %v972
    %v1301 = vpack.c.b16 %v977, %v973
    %v1302 = vpack.c.b16 %v978, %v974
    %v1303 = vpack.c.b16 %v979, %v975
    %v1304 = vpack.c.b16 %v984, %v980
    %v1305 = vpack.c.b16 %v985, %v981
    %v1306 = vpack.c.b16 %v986, %v982
    %v1307 = vpack.c.b16 %v987, %v983
    %v1308 = vpack.c.b16 %v992, %v988
    %v1309 = vpack.c.b16 %v993, %v989
    %v1310 = vpack.c.b16 %v994, %v990
    %v1311 = vpack.c.b16 %v995, %v991
    %v1312 = vpack.c.b16 %v1000, %v996
    %v1313 = vpack.c.b16 %v1001, %v997
    %v1314 = vpack.c.b16 %v1002, %v998
    %v1315 = vpack.c.b16 %v1003, %v999
    %v1316 = vpack.c.b16 %v1008, %v1004
    %v1317 = vpack.c.b16 %v1009, %v1005
    %v1318 = vpack.c.b16 %v1010, %v1006
    %v1319 = vpack.c.b16 %v1011, %v1007
    %v1320 = vpack.c.b16 %v1016, %v1012
    %v1321 = vpack.c.b16 %v1017, %v1013
    %v1322 = vpack.c.b16 %v1018, %v1014
    %v1323 = vpack.c.b16 %v1019, %v1015
    %v1324 = vpack.c.b16 %v1024, %v1020
    %v1325 = vpack.c.b16 %v1025, %v1021
    %v1326 = vpack.c.b16 %v1026, %v1022
    %v1327 = vpack.c.b16 %v1027, %v1023
    %v1328 = vpack.c.b16 %v1032, %v1028
    %v1329 = vpack.c.b16 %v1033, %v1029
    %v1330 = vpack.c.b16 %v1034, %v1030
    %v1331 = vpack.c.b16 %v1035, %v1031
    %v1332 = vpack.c.b16 %v1040, %v1036
    %v1333 = vpack.c.b16 %v1041, %v1037
    %v1334 = vpack.c.b16 %v1042, %v1038
    %v1335 = vpack.c.b16 %v1043, %v1039
    %v1336 = vpack.c.b16 %v1048, %v1044
    %v1337 = vpack.c.b16 %v1049, %v1045
    %v1338 = vpack.c.b16 %v1050, %v1046
    %v1339 = vpack.c.b16 %v1051, %v1047
    %v1340 = vpack.c.b16 %v1056, %v1052
    %v1341 = vpack.c.b16 %v1057, %v1053
    %v1342 = vpack.c.b16 %v1058, %v1054
    %v1343 = vpack.c.b16 %v1059, %v1055
    %v1344 = vpack.c.b16 %v1064, %v1060
    %v1345 = vpack.c.b16 %v1065, %v1061
    %v1346 = vpack.c.b16 %v1066, %v1062
    %v1347 = vpack.c.b16 %v1067, %v1063
    %v1348 = vpack.c.b16 %v1072, %v1068
    %v1349 = vpack.c.b16 %v1073, %v1069
    %v1350 = vpack.c.b16 %v1074, %v1070
    %v1351 = vpack.c.b16 %v1075, %v1071
    %v1352 = vpack.c.b16 %v1080, %v1076
    %v1353 = vpack.c.b16 %v1081, %v1077
    %v1354 = vpack.c.b16 %v1082, %v1078
    %v1355 = vpack.c.b16 %v1083, %v1079
    %v1356 = vpack.c.b16 %v1088, %v1084
    %v1357 = vpack.c.b16 %v1089, %v1085
    %v1358 = vpack.c.b16 %v1090, %v1086
    %v1359 = vpack.c.b16 %v1091, %v1087
    %v1360 = vpack.c.b16 %v1096, %v1092
    %v1361 = vpack.c.b16 %v1097, %v1093
    %v1362 = vpack.c.b16 %v1098, %v1094
    %v1363 = vpack.c.b16 %v1099, %v1095
    %v1364 = vpack.c.b16 %v1104, %v1100
    %v1365 = vpack.c.b16 %v1105, %v1101
    %v1366 = vpack.c.b16 %v1106, %v1102
    %v1367 = vpack.c.b16 %v1107, %v1103
    %v1368 = vpack.c.b16 %v1112, %v1108
    %v1369 = vpack.c.b16 %v1113, %v1109
    %v1370 = vpack.c.b16 %v1114, %v1110
    %v1371 = vpack.c.b16 %v1115, %v1111
    %1628 = vmatpush.bf16.msra.mxu0 %v1144
    %1629 = vmatpush.bf16.msra.mxu0 %v1140
    %1630 = vmatpush.bf16.msra.mxu0 %v1136
    %1631 = vmatpush.bf16.msra.mxu0 %v1132
    %1632 = vmatpush.bf16.msra.mxu0 %v1128
    %1633 = vmatpush.bf16.msra.mxu0 %v1124
    %1634 = vmatpush.bf16.msra.mxu0 %v1120
    %1635 = vmatpush.bf16.msra.mxu0 %v1116
    %1636 = vmatmul.bf16.gmra.mxu0 %v74
    %v1637 = vpop.f32.mrf.mxu0
    %v1638 = vadd.f32 %v340, %v1637
    %v1639 = vpop.f32.mrf.mxu0
    %v1640 = vadd.f32 %v340, %v1639
    %1641 = vdwg.mxu0
    %1642 = vmatpush.bf16.msra.mxu0 %v1176
    %1643 = vmatpush.bf16.msra.mxu0 %v1172
    %1644 = vmatpush.bf16.msra.mxu0 %v1168
    %1645 = vmatpush.bf16.msra.mxu0 %v1164
    %1646 = vmatpush.bf16.msra.mxu0 %v1160
    %1647 = vmatpush.bf16.msra.mxu0 %v1156
    %1648 = vmatpush.bf16.msra.mxu0 %v1152
    %1649 = vmatpush.bf16.msra.mxu0 %v1148
    %1650 = vmatmul.bf16.gmra.mxu0 %v75
    %v1651 = vpop.f32.mrf.mxu0
    %v1652 = vadd.f32 %v1638, %v1651
    %v1653 = vpop.f32.mrf.mxu0
    %v1654 = vadd.f32 %v1640, %v1653
    %1655 = vdwg.mxu0
    %1656 = vmatpush.bf16.msra.mxu0 %v1208
    %1657 = vmatpush.bf16.msra.mxu0 %v1204
    %1658 = vmatpush.bf16.msra.mxu0 %v1200
    %1659 = vmatpush.bf16.msra.mxu0 %v1196
    %1660 = vmatpush.bf16.msra.mxu0 %v1192
    %1661 = vmatpush.bf16.msra.mxu0 %v1188
    %1662 = vmatpush.bf16.msra.mxu0 %v1184
    %1663 = vmatpush.bf16.msra.mxu0 %v1180
    %1664 = vmatmul.bf16.gmra.mxu0 %v76
    %v1665 = vpop.f32.mrf.mxu0
    %v1666 = vadd.f32 %v1652, %v1665
    %v1667 = vpop.f32.mrf.mxu0
    %v1668 = vadd.f32 %v1654, %v1667
    %1669 = vdwg.mxu0
    %1670 = vmatpush.bf16.msra.mxu0 %v1240
    %1671 = vmatpush.bf16.msra.mxu0 %v1236
    %1672 = vmatpush.bf16.msra.mxu0 %v1232
    %1673 = vmatpush.bf16.msra.mxu0 %v1228
    %1674 = vmatpush.bf16.msra.mxu0 %v1224
    %1675 = vmatpush.bf16.msra.mxu0 %v1220
    %1676 = vmatpush.bf16.msra.mxu0 %v1216
    %1677 = vmatpush.bf16.msra.mxu0 %v1212
    %1678 = vmatmul.bf16.gmra.mxu0 %v77
    %v1679 = vpop.f32.mrf.mxu0
    %v1680 = vadd.f32 %v1666, %v1679
    %v1681 = vpop.f32.mrf.mxu0
    %v1682 = vadd.f32 %v1668, %v1681
    %1683 = vdwg.mxu0
    %1684 = vmatpush.bf16.msra.mxu0 %v1272
    %1685 = vmatpush.bf16.msra.mxu0 %v1268
    %1686 = vmatpush.bf16.msra.mxu0 %v1264
    %1687 = vmatpush.bf16.msra.mxu0 %v1260
    %1688 = vmatpush.bf16.msra.mxu0 %v1256
    %1689 = vmatpush.bf16.msra.mxu0 %v1252
    %1690 = vmatpush.bf16.msra.mxu0 %v1248
    %1691 = vmatpush.bf16.msra.mxu0 %v1244
    %1692 = vmatmul.bf16.gmra.mxu0 %v78
    %v1693 = vpop.f32.mrf.mxu0
    %v1694 = vadd.f32 %v1680, %v1693
    %v1695 = vpop.f32.mrf.mxu0
    %v1696 = vadd.f32 %v1682, %v1695
    %1697 = vdwg.mxu0
    %1698 = vmatpush.bf16.msra.mxu0 %v1304
    %1699 = vmatpush.bf16.msra.mxu0 %v1300
    %1700 = vmatpush.bf16.msra.mxu0 %v1296
    %1701 = vmatpush.bf16.msra.mxu0 %v1292
    %1702 = vmatpush.bf16.msra.mxu0 %v1288
    %1703 = vmatpush.bf16.msra.mxu0 %v1284
    %1704 = vmatpush.bf16.msra.mxu0 %v1280
    %1705 = vmatpush.bf16.msra.mxu0 %v1276
    %1706 = vmatmul.bf16.gmra.mxu0 %v79
    %v1707 = vpop.f32.mrf.mxu0
    %v1708 = vadd.f32 %v1694, %v1707
    %v1709 = vpop.f32.mrf.mxu0
    %v1710 = vadd.f32 %v1696, %v1709
    %1711 = vdwg.mxu0
    %1712 = vmatpush.bf16.msra.mxu0 %v1336
    %1713 = vmatpush.bf16.msra.mxu0 %v1332
    %1714 = vmatpush.bf16.msra.mxu0 %v1328
    %1715 = vmatpush.bf16.msra.mxu0 %v1324
    %1716 = vmatpush.bf16.msra.mxu0 %v1320
    %1717 = vmatpush.bf16.msra.mxu0 %v1316
    %1718 = vmatpush.bf16.msra.mxu0 %v1312
    %1719 = vmatpush.bf16.msra.mxu0 %v1308
    %1720 = vmatmul.bf16.gmra.mxu0 %v80
    %v1721 = vpop.f32.mrf.mxu0
    %v1722 = vadd.f32 %v1708, %v1721
    %v1723 = vpop.f32.mrf.mxu0
    %v1724 = vadd.f32 %v1710, %v1723
    %1725 = vdwg.mxu0
    %1726 = vmatpush.bf16.msra.mxu0 %v1368
    %1727 = vmatpush.bf16.msra.mxu0 %v1364
    %1728 = vmatpush.bf16.msra.mxu0 %v1360
    %1729 = vmatpush.bf16.msra.mxu0 %v1356
    %1730 = vmatpush.bf16.msra.mxu0 %v1352
    %1731 = vmatpush.bf16.msra.mxu0 %v1348
    %1732 = vmatpush.bf16.msra.mxu0 %v1344
    %1733 = vmatpush.bf16.msra.mxu0 %v1340
    %1734 = vmatmul.bf16.gmra.mxu0 %v81
    %v1735 = vpop.f32.mrf.mxu0
    %v1736 = vadd.f32 %v1722, %v1735
    %v1737 = vpop.f32.mrf.mxu0
    %v1738 = vadd.f32 %v1724, %v1737
    %1739 = vdwg.mxu0
    %1740 = vmatpush.bf16.msra.mxu0 %v1145
    %1741 = vmatpush.bf16.msra.mxu0 %v1141
    %1742 = vmatpush.bf16.msra.mxu0 %v1137
    %1743 = vmatpush.bf16.msra.mxu0 %v1133
    %1744 = vmatpush.bf16.msra.mxu0 %v1129
    %1745 = vmatpush.bf16.msra.mxu0 %v1125
    %1746 = vmatpush.bf16.msra.mxu0 %v1121
    %1747 = vmatpush.bf16.msra.mxu0 %v1117
    %1748 = vmatmul.bf16.gmra.mxu0 %v74
    %v1749 = vpop.f32.mrf.mxu0
    %v1750 = vadd.f32 %v341, %v1749
    %v1751 = vpop.f32.mrf.mxu0
    %v1752 = vadd.f32 %v341, %v1751
    %1753 = vdwg.mxu0
    %1754 = vmatpush.bf16.msra.mxu0 %v1177
    %1755 = vmatpush.bf16.msra.mxu0 %v1173
    %1756 = vmatpush.bf16.msra.mxu0 %v1169
    %1757 = vmatpush.bf16.msra.mxu0 %v1165
    %1758 = vmatpush.bf16.msra.mxu0 %v1161
    %1759 = vmatpush.bf16.msra.mxu0 %v1157
    %1760 = vmatpush.bf16.msra.mxu0 %v1153
    %1761 = vmatpush.bf16.msra.mxu0 %v1149
    %1762 = vmatmul.bf16.gmra.mxu0 %v75
    %v1763 = vpop.f32.mrf.mxu0
    %v1764 = vadd.f32 %v1750, %v1763
    %v1765 = vpop.f32.mrf.mxu0
    %v1766 = vadd.f32 %v1752, %v1765
    %1767 = vdwg.mxu0
    %1768 = vmatpush.bf16.msra.mxu0 %v1209
    %1769 = vmatpush.bf16.msra.mxu0 %v1205
    %1770 = vmatpush.bf16.msra.mxu0 %v1201
    %1771 = vmatpush.bf16.msra.mxu0 %v1197
    %1772 = vmatpush.bf16.msra.mxu0 %v1193
    %1773 = vmatpush.bf16.msra.mxu0 %v1189
    %1774 = vmatpush.bf16.msra.mxu0 %v1185
    %1775 = vmatpush.bf16.msra.mxu0 %v1181
    %1776 = vmatmul.bf16.gmra.mxu0 %v76
    %v1777 = vpop.f32.mrf.mxu0
    %v1778 = vadd.f32 %v1764, %v1777
    %v1779 = vpop.f32.mrf.mxu0
    %v1780 = vadd.f32 %v1766, %v1779
    %1781 = vdwg.mxu0
    %1782 = vmatpush.bf16.msra.mxu0 %v1241
    %1783 = vmatpush.bf16.msra.mxu0 %v1237
    %1784 = vmatpush.bf16.msra.mxu0 %v1233
    %1785 = vmatpush.bf16.msra.mxu0 %v1229
    %1786 = vmatpush.bf16.msra.mxu0 %v1225
    %1787 = vmatpush.bf16.msra.mxu0 %v1221
    %1788 = vmatpush.bf16.msra.mxu0 %v1217
    %1789 = vmatpush.bf16.msra.mxu0 %v1213
    %1790 = vmatmul.bf16.gmra.mxu0 %v77
    %v1791 = vpop.f32.mrf.mxu0
    %v1792 = vadd.f32 %v1778, %v1791
    %v1793 = vpop.f32.mrf.mxu0
    %v1794 = vadd.f32 %v1780, %v1793
    %1795 = vdwg.mxu0
    %1796 = vmatpush.bf16.msra.mxu0 %v1273
    %1797 = vmatpush.bf16.msra.mxu0 %v1269
    %1798 = vmatpush.bf16.msra.mxu0 %v1265
    %1799 = vmatpush.bf16.msra.mxu0 %v1261
    %1800 = vmatpush.bf16.msra.mxu0 %v1257
    %1801 = vmatpush.bf16.msra.mxu0 %v1253
    %1802 = vmatpush.bf16.msra.mxu0 %v1249
    %1803 = vmatpush.bf16.msra.mxu0 %v1245
    %1804 = vmatmul.bf16.gmra.mxu0 %v78
    %v1805 = vpop.f32.mrf.mxu0
    %v1806 = vadd.f32 %v1792, %v1805
    %v1807 = vpop.f32.mrf.mxu0
    %v1808 = vadd.f32 %v1794, %v1807
    %1809 = vdwg.mxu0
    %1810 = vmatpush.bf16.msra.mxu0 %v1305
    %1811 = vmatpush.bf16.msra.mxu0 %v1301
    %1812 = vmatpush.bf16.msra.mxu0 %v1297
    %1813 = vmatpush.bf16.msra.mxu0 %v1293
    %1814 = vmatpush.bf16.msra.mxu0 %v1289
    %1815 = vmatpush.bf16.msra.mxu0 %v1285
    %1816 = vmatpush.bf16.msra.mxu0 %v1281
    %1817 = vmatpush.bf16.msra.mxu0 %v1277
    %1818 = vmatmul.bf16.gmra.mxu0 %v79
    %v1819 = vpop.f32.mrf.mxu0
    %v1820 = vadd.f32 %v1806, %v1819
    %v1821 = vpop.f32.mrf.mxu0
    %v1822 = vadd.f32 %v1808, %v1821
    %1823 = vdwg.mxu0
    %1824 = vmatpush.bf16.msra.mxu0 %v1337
    %1825 = vmatpush.bf16.msra.mxu0 %v1333
    %1826 = vmatpush.bf16.msra.mxu0 %v1329
    %1827 = vmatpush.bf16.msra.mxu0 %v1325
    %1828 = vmatpush.bf16.msra.mxu0 %v1321
    %1829 = vmatpush.bf16.msra.mxu0 %v1317
    %1830 = vmatpush.bf16.msra.mxu0 %v1313
    %1831 = vmatpush.bf16.msra.mxu0 %v1309
    %1832 = vmatmul.bf16.gmra.mxu0 %v80
    %v1833 = vpop.f32.mrf.mxu0
    %v1834 = vadd.f32 %v1820, %v1833
    %v1835 = vpop.f32.mrf.mxu0
    %v1836 = vadd.f32 %v1822, %v1835
    %1837 = vdwg.mxu0
    %1838 = vmatpush.bf16.msra.mxu0 %v1369
    %1839 = vmatpush.bf16.msra.mxu0 %v1365
    %1840 = vmatpush.bf16.msra.mxu0 %v1361
    %1841 = vmatpush.bf16.msra.mxu0 %v1357
    %1842 = vmatpush.bf16.msra.mxu0 %v1353
    %1843 = vmatpush.bf16.msra.mxu0 %v1349
    %1844 = vmatpush.bf16.msra.mxu0 %v1345
    %1845 = vmatpush.bf16.msra.mxu0 %v1341
    %1846 = vmatmul.bf16.gmra.mxu0 %v81
    %v1847 = vpop.f32.mrf.mxu0
    %v1848 = vadd.f32 %v1834, %v1847
    %v1849 = vpop.f32.mrf.mxu0
    %v1850 = vadd.f32 %v1836, %v1849
    %1851 = vdwg.mxu0
    %1852 = vmatpush.bf16.msra.mxu0 %v1146
    %1853 = vmatpush.bf16.msra.mxu0 %v1142
    %1854 = vmatpush.bf16.msra.mxu0 %v1138
    %1855 = vmatpush.bf16.msra.mxu0 %v1134
    %1856 = vmatpush.bf16.msra.mxu0 %v1130
    %1857 = vmatpush.bf16.msra.mxu0 %v1126
    %1858 = vmatpush.bf16.msra.mxu0 %v1122
    %1859 = vmatpush.bf16.msra.mxu0 %v1118
    %1860 = vmatmul.bf16.gmra.mxu0 %v74
    %v1861 = vpop.f32.mrf.mxu0
    %v1862 = vadd.f32 %v342, %v1861
    %v1863 = vpop.f32.mrf.mxu0
    %v1864 = vadd.f32 %v342, %v1863
    %1865 = vdwg.mxu0
    %1866 = vmatpush.bf16.msra.mxu0 %v1178
    %1867 = vmatpush.bf16.msra.mxu0 %v1174
    %1868 = vmatpush.bf16.msra.mxu0 %v1170
    %1869 = vmatpush.bf16.msra.mxu0 %v1166
    %1870 = vmatpush.bf16.msra.mxu0 %v1162
    %1871 = vmatpush.bf16.msra.mxu0 %v1158
    %1872 = vmatpush.bf16.msra.mxu0 %v1154
    %1873 = vmatpush.bf16.msra.mxu0 %v1150
    %1874 = vmatmul.bf16.gmra.mxu0 %v75
    %v1875 = vpop.f32.mrf.mxu0
    %v1876 = vadd.f32 %v1862, %v1875
    %v1877 = vpop.f32.mrf.mxu0
    %v1878 = vadd.f32 %v1864, %v1877
    %1879 = vdwg.mxu0
    %1880 = vmatpush.bf16.msra.mxu0 %v1210
    %1881 = vmatpush.bf16.msra.mxu0 %v1206
    %1882 = vmatpush.bf16.msra.mxu0 %v1202
    %1883 = vmatpush.bf16.msra.mxu0 %v1198
    %1884 = vmatpush.bf16.msra.mxu0 %v1194
    %1885 = vmatpush.bf16.msra.mxu0 %v1190
    %1886 = vmatpush.bf16.msra.mxu0 %v1186
    %1887 = vmatpush.bf16.msra.mxu0 %v1182
    %1888 = vmatmul.bf16.gmra.mxu0 %v76
    %v1889 = vpop.f32.mrf.mxu0
    %v1890 = vadd.f32 %v1876, %v1889
    %v1891 = vpop.f32.mrf.mxu0
    %v1892 = vadd.f32 %v1878, %v1891
    %1893 = vdwg.mxu0
    %1894 = vmatpush.bf16.msra.mxu0 %v1242
    %1895 = vmatpush.bf16.msra.mxu0 %v1238
    %1896 = vmatpush.bf16.msra.mxu0 %v1234
    %1897 = vmatpush.bf16.msra.mxu0 %v1230
    %1898 = vmatpush.bf16.msra.mxu0 %v1226
    %1899 = vmatpush.bf16.msra.mxu0 %v1222
    %1900 = vmatpush.bf16.msra.mxu0 %v1218
    %1901 = vmatpush.bf16.msra.mxu0 %v1214
    %1902 = vmatmul.bf16.gmra.mxu0 %v77
    %v1903 = vpop.f32.mrf.mxu0
    %v1904 = vadd.f32 %v1890, %v1903
    %v1905 = vpop.f32.mrf.mxu0
    %v1906 = vadd.f32 %v1892, %v1905
    %1907 = vdwg.mxu0
    %1908 = vmatpush.bf16.msra.mxu0 %v1274
    %1909 = vmatpush.bf16.msra.mxu0 %v1270
    %1910 = vmatpush.bf16.msra.mxu0 %v1266
    %1911 = vmatpush.bf16.msra.mxu0 %v1262
    %1912 = vmatpush.bf16.msra.mxu0 %v1258
    %1913 = vmatpush.bf16.msra.mxu0 %v1254
    %1914 = vmatpush.bf16.msra.mxu0 %v1250
    %1915 = vmatpush.bf16.msra.mxu0 %v1246
    %1916 = vmatmul.bf16.gmra.mxu0 %v78
    %v1917 = vpop.f32.mrf.mxu0
    %v1918 = vadd.f32 %v1904, %v1917
    %v1919 = vpop.f32.mrf.mxu0
    %v1920 = vadd.f32 %v1906, %v1919
    %1921 = vdwg.mxu0
    %1922 = vmatpush.bf16.msra.mxu0 %v1306
    %1923 = vmatpush.bf16.msra.mxu0 %v1302
    %1924 = vmatpush.bf16.msra.mxu0 %v1298
    %1925 = vmatpush.bf16.msra.mxu0 %v1294
    %1926 = vmatpush.bf16.msra.mxu0 %v1290
    %1927 = vmatpush.bf16.msra.mxu0 %v1286
    %1928 = vmatpush.bf16.msra.mxu0 %v1282
    %1929 = vmatpush.bf16.msra.mxu0 %v1278
    %1930 = vmatmul.bf16.gmra.mxu0 %v79
    %v1931 = vpop.f32.mrf.mxu0
    %v1932 = vadd.f32 %v1918, %v1931
    %v1933 = vpop.f32.mrf.mxu0
    %v1934 = vadd.f32 %v1920, %v1933
    %1935 = vdwg.mxu0
    %1936 = vmatpush.bf16.msra.mxu0 %v1338
    %1937 = vmatpush.bf16.msra.mxu0 %v1334
    %1938 = vmatpush.bf16.msra.mxu0 %v1330
    %1939 = vmatpush.bf16.msra.mxu0 %v1326
    %1940 = vmatpush.bf16.msra.mxu0 %v1322
    %1941 = vmatpush.bf16.msra.mxu0 %v1318
    %1942 = vmatpush.bf16.msra.mxu0 %v1314
    %1943 = vmatpush.bf16.msra.mxu0 %v1310
    %1944 = vmatmul.bf16.gmra.mxu0 %v80
    %v1945 = vpop.f32.mrf.mxu0
    %v1946 = vadd.f32 %v1932, %v1945
    %v1947 = vpop.f32.mrf.mxu0
    %v1948 = vadd.f32 %v1934, %v1947
    %1949 = vdwg.mxu0
    %1950 = vmatpush.bf16.msra.mxu0 %v1370
    %1951 = vmatpush.bf16.msra.mxu0 %v1366
    %1952 = vmatpush.bf16.msra.mxu0 %v1362
    %1953 = vmatpush.bf16.msra.mxu0 %v1358
    %1954 = vmatpush.bf16.msra.mxu0 %v1354
    %1955 = vmatpush.bf16.msra.mxu0 %v1350
    %1956 = vmatpush.bf16.msra.mxu0 %v1346
    %1957 = vmatpush.bf16.msra.mxu0 %v1342
    %1958 = vmatmul.bf16.gmra.mxu0 %v81
    %v1959 = vpop.f32.mrf.mxu0
    %v1960 = vadd.f32 %v1946, %v1959
    %v1961 = vpop.f32.mrf.mxu0
    %v1962 = vadd.f32 %v1948, %v1961
    %1963 = vdwg.mxu0
    %1964 = vmatpush.bf16.msra.mxu0 %v1147
    %1965 = vmatpush.bf16.msra.mxu0 %v1143
    %1966 = vmatpush.bf16.msra.mxu0 %v1139
    %1967 = vmatpush.bf16.msra.mxu0 %v1135
    %1968 = vmatpush.bf16.msra.mxu0 %v1131
    %1969 = vmatpush.bf16.msra.mxu0 %v1127
    %1970 = vmatpush.bf16.msra.mxu0 %v1123
    %1971 = vmatpush.bf16.msra.mxu0 %v1119
    %1972 = vmatmul.bf16.gmra.mxu0 %v74
    %v1973 = vpop.f32.mrf.mxu0
    %v1974 = vadd.f32 %v343, %v1973
    %v1975 = vpop.f32.mrf.mxu0
    %v1976 = vadd.f32 %v343, %v1975
    %1977 = vdwg.mxu0
    %1978 = vmatpush.bf16.msra.mxu0 %v1179
    %1979 = vmatpush.bf16.msra.mxu0 %v1175
    %1980 = vmatpush.bf16.msra.mxu0 %v1171
    %1981 = vmatpush.bf16.msra.mxu0 %v1167
    %1982 = vmatpush.bf16.msra.mxu0 %v1163
    %1983 = vmatpush.bf16.msra.mxu0 %v1159
    %1984 = vmatpush.bf16.msra.mxu0 %v1155
    %1985 = vmatpush.bf16.msra.mxu0 %v1151
    %1986 = vmatmul.bf16.gmra.mxu0 %v75
    %v1987 = vpop.f32.mrf.mxu0
    %v1988 = vadd.f32 %v1974, %v1987
    %v1989 = vpop.f32.mrf.mxu0
    %v1990 = vadd.f32 %v1976, %v1989
    %1991 = vdwg.mxu0
    %1992 = vmatpush.bf16.msra.mxu0 %v1211
    %1993 = vmatpush.bf16.msra.mxu0 %v1207
    %1994 = vmatpush.bf16.msra.mxu0 %v1203
    %1995 = vmatpush.bf16.msra.mxu0 %v1199
    %1996 = vmatpush.bf16.msra.mxu0 %v1195
    %1997 = vmatpush.bf16.msra.mxu0 %v1191
    %1998 = vmatpush.bf16.msra.mxu0 %v1187
    %1999 = vmatpush.bf16.msra.mxu0 %v1183
    %2000 = vmatmul.bf16.gmra.mxu0 %v76
    %v2001 = vpop.f32.mrf.mxu0
    %v2002 = vadd.f32 %v1988, %v2001
    %v2003 = vpop.f32.mrf.mxu0
    %v2004 = vadd.f32 %v1990, %v2003
    %2005 = vdwg.mxu0
    %2006 = vmatpush.bf16.msra.mxu0 %v1243
    %2007 = vmatpush.bf16.msra.mxu0 %v1239
    %2008 = vmatpush.bf16.msra.mxu0 %v1235
    %2009 = vmatpush.bf16.msra.mxu0 %v1231
    %2010 = vmatpush.bf16.msra.mxu0 %v1227
    %2011 = vmatpush.bf16.msra.mxu0 %v1223
    %2012 = vmatpush.bf16.msra.mxu0 %v1219
    %2013 = vmatpush.bf16.msra.mxu0 %v1215
    %2014 = vmatmul.bf16.gmra.mxu0 %v77
    %v2015 = vpop.f32.mrf.mxu0
    %v2016 = vadd.f32 %v2002, %v2015
    %v2017 = vpop.f32.mrf.mxu0
    %v2018 = vadd.f32 %v2004, %v2017
    %2019 = vdwg.mxu0
    %2020 = vmatpush.bf16.msra.mxu0 %v1275
    %2021 = vmatpush.bf16.msra.mxu0 %v1271
    %2022 = vmatpush.bf16.msra.mxu0 %v1267
    %2023 = vmatpush.bf16.msra.mxu0 %v1263
    %2024 = vmatpush.bf16.msra.mxu0 %v1259
    %2025 = vmatpush.bf16.msra.mxu0 %v1255
    %2026 = vmatpush.bf16.msra.mxu0 %v1251
    %2027 = vmatpush.bf16.msra.mxu0 %v1247
    %2028 = vmatmul.bf16.gmra.mxu0 %v78
    %v2029 = vpop.f32.mrf.mxu0
    %v2030 = vadd.f32 %v2016, %v2029
    %v2031 = vpop.f32.mrf.mxu0
    %v2032 = vadd.f32 %v2018, %v2031
    %2033 = vdwg.mxu0
    %2034 = vmatpush.bf16.msra.mxu0 %v1307
    %2035 = vmatpush.bf16.msra.mxu0 %v1303
    %2036 = vmatpush.bf16.msra.mxu0 %v1299
    %2037 = vmatpush.bf16.msra.mxu0 %v1295
    %2038 = vmatpush.bf16.msra.mxu0 %v1291
    %2039 = vmatpush.bf16.msra.mxu0 %v1287
    %2040 = vmatpush.bf16.msra.mxu0 %v1283
    %2041 = vmatpush.bf16.msra.mxu0 %v1279
    %2042 = vmatmul.bf16.gmra.mxu0 %v79
    %v2043 = vpop.f32.mrf.mxu0
    %v2044 = vadd.f32 %v2030, %v2043
    %v2045 = vpop.f32.mrf.mxu0
    %v2046 = vadd.f32 %v2032, %v2045
    %2047 = vdwg.mxu0
    %2048 = vmatpush.bf16.msra.mxu0 %v1339
    %2049 = vmatpush.bf16.msra.mxu0 %v1335
    %2050 = vmatpush.bf16.msra.mxu0 %v1331
    %2051 = vmatpush.bf16.msra.mxu0 %v1327
    %2052 = vmatpush.bf16.msra.mxu0 %v1323
    %2053 = vmatpush.bf16.msra.mxu0 %v1319
    %2054 = vmatpush.bf16.msra.mxu0 %v1315
    %2055 = vmatpush.bf16.msra.mxu0 %v1311
    %2056 = vmatmul.bf16.gmra.mxu0 %v80
    %v2057 = vpop.f32.mrf.mxu0
    %v2058 = vadd.f32 %v2044, %v2057
    %v2059 = vpop.f32.mrf.mxu0
    %v2060 = vadd.f32 %v2046, %v2059
    %2061 = vdwg.mxu0
    %2062 = vmatpush.bf16.msra.mxu0 %v1371
    %2063 = vmatpush.bf16.msra.mxu0 %v1367
    %2064 = vmatpush.bf16.msra.mxu0 %v1363
    %2065 = vmatpush.bf16.msra.mxu0 %v1359
    %2066 = vmatpush.bf16.msra.mxu0 %v1355
    %2067 = vmatpush.bf16.msra.mxu0 %v1351
    %2068 = vmatpush.bf16.msra.mxu0 %v1347
    %2069 = vmatpush.bf16.msra.mxu0 %v1343
    %2070 = vmatmul.bf16.gmra.mxu0 %v81
    %v2071 = vpop.f32.mrf.mxu0
    %v2072 = vadd.f32 %v2058, %v2071
    %v2073 = vpop.f32.mrf.mxu0
    %v2074 = vadd.f32 %v2060, %v2073
    %2075 = vdwg.mxu0
    %v2076 = vmax.f32 %v1736, 0.0
    %v2077 = vmax.f32 %v1848, 0.0
    %v2078 = vmax.f32 %v1960, 0.0
    %v2079 = vmax.f32 %v2072, 0.0
    %v2080 = vmax.f32 %v1738, 0.0
    %v2081 = vmax.f32 %v1850, 0.0
    %v2082 = vmax.f32 %v1962, 0.0
    %v2083 = vmax.f32 %v2074, 0.0
    %v2084 = vpack.c.bf16 %v2080, %v2076
    %v2085 = vpack.c.bf16 %v2081, %v2077
    %v2086 = vpack.c.bf16 %v2082, %v2078
    %v2087 = vpack.c.bf16 %v2083, %v2079
    %v2088 = vld [vmem:[%s3] sm:$0xf]
    %v2089 = vld [vmem:[%s3 + $0x4] sm:$0xf]
    %v2090 = vld [vmem:[%s3 + $0x8] sm:$0xf]
    %v2091 = vld [vmem:[%s3 + $0xc] sm:$0xf]
    %v2092 = vld [vmem:[%s3 + $0x10] sm:$0xf]
    %v2093 = vld [vmem:[%s3 + $0x14] sm:$0xf]
    %v2094 = vld [vmem:[%s3 + $0x18] sm:$0xf]
    %v2095 = vld [vmem:[%s3 + $0x1c] sm:$0xf]
    %v2096 = vld [vmem:[%s3 + $0x20] sm:$0xf]
    %v2097 = vld [vmem:[%s3 + $0x24] sm:$0xf]
    %v2098 = vld [vmem:[%s3 + $0x28] sm:$0xf]
    %v2099 = vld [vmem:[%s3 + $0x2c] sm:$0xf]
    %v2100 = vld [vmem:[%s3 + $0x30] sm:$0xf]
    %v2101 = vld [vmem:[%s3 + $0x34] sm:$0xf]
    %v2102 = vld [vmem:[%s3 + $0x38] sm:$0xf]
    %v2103 = vld [vmem:[%s3 + $0x3c] sm:$0xf]
    %v2104 = vld [vmem:[%s3 + $0x40] sm:$0xf]
    %v2105 = vld [vmem:[%s3 + $0x44] sm:$0xf]
    %v2106 = vld [vmem:[%s3 + $0x48] sm:$0xf]
    %v2107 = vld [vmem:[%s3 + $0x4c] sm:$0xf]
    %v2108 = vld [vmem:[%s3 + $0x50] sm:$0xf]
    %v2109 = vld [vmem:[%s3 + $0x54] sm:$0xf]
    %v2110 = vld [vmem:[%s3 + $0x58] sm:$0xf]
    %v2111 = vld [vmem:[%s3 + $0x5c] sm:$0xf]
    %v2112 = vld [vmem:[%s3 + $0x60] sm:$0xf]
    %v2113 = vld [vmem:[%s3 + $0x64] sm:$0xf]
    %v2114 = vld [vmem:[%s3 + $0x68] sm:$0xf]
    %v2115 = vld [vmem:[%s3 + $0x6c] sm:$0xf]
    %v2116 = vld [vmem:[%s3 + $0x70] sm:$0xf]
    %v2117 = vld [vmem:[%s3 + $0x74] sm:$0xf]
    %v2118 = vld [vmem:[%s3 + $0x78] sm:$0xf]
    %v2119 = vld [vmem:[%s3 + $0x7c] sm:$0xf]
    %v2120 = vld [vmem:[%s3 + $0x80] sm:$0xf]
    %v2121 = vld [vmem:[%s3 + $0x84] sm:$0xf]
    %v2122 = vld [vmem:[%s3 + $0x88] sm:$0xf]
    %v2123 = vld [vmem:[%s3 + $0x8c] sm:$0xf]
    %v2124 = vld [vmem:[%s3 + $0x90] sm:$0xf]
    %v2125 = vld [vmem:[%s3 + $0x94] sm:$0xf]
    %v2126 = vld [vmem:[%s3 + $0x98] sm:$0xf]
    %v2127 = vld [vmem:[%s3 + $0x9c] sm:$0xf]
    %v2128 = vld [vmem:[%s3 + $0xa0] sm:$0xf]
    %v2129 = vld [vmem:[%s3 + $0xa4] sm:$0xf]
    %v2130 = vld [vmem:[%s3 + $0xa8] sm:$0xf]
    %v2131 = vld [vmem:[%s3 + $0xac] sm:$0xf]
    %v2132 = vld [vmem:[%s3 + $0xb0] sm:$0xf]
    %v2133 = vld [vmem:[%s3 + $0xb4] sm:$0xf]
    %v2134 = vld [vmem:[%s3 + $0xb8] sm:$0xf]
    %v2135 = vld [vmem:[%s3 + $0xbc] sm:$0xf]
    %v2136 = vld [vmem:[%s3 + $0xc0] sm:$0xf]
    %v2137 = vld [vmem:[%s3 + $0xc4] sm:$0xf]
    %v2138 = vld [vmem:[%s3 + $0xc8] sm:$0xf]
    %v2139 = vld [vmem:[%s3 + $0xcc] sm:$0xf]
    %v2140 = vld [vmem:[%s3 + $0xd0] sm:$0xf]
    %v2141 = vld [vmem:[%s3 + $0xd4] sm:$0xf]
    %v2142 = vld [vmem:[%s3 + $0xd8] sm:$0xf]
    %v2143 = vld [vmem:[%s3 + $0xdc] sm:$0xf]
    %v2144 = vld [vmem:[%s3 + $0xe0] sm:$0xf]
    %v2145 = vld [vmem:[%s3 + $0xe4] sm:$0xf]
    %v2146 = vld [vmem:[%s3 + $0xe8] sm:$0xf]
    %v2147 = vld [vmem:[%s3 + $0xec] sm:$0xf]
    %v2148 = vld [vmem:[%s3 + $0xf0] sm:$0xf]
    %v2149 = vld [vmem:[%s3 + $0xf4] sm:$0xf]
    %v2150 = vld [vmem:[%s3 + $0xf8] sm:$0xf]
    %v2151 = vld [vmem:[%s3 + $0xfc] sm:$0xf]
    %v2152 = vld [vmem:[%s4] sm:$0x1]
    %v2154 = vperm.slane %v2152, 0
    %v2220 = vunpack.c.l.b16 %v2088
    %v2221 = vunpack.c.l.b16 %v2089
    %v2222 = vunpack.c.l.b16 %v2090
    %v2223 = vunpack.c.l.b16 %v2091
    %v2224 = vunpack.c.l.b16 %v2092
    %v2225 = vunpack.c.l.b16 %v2093
    %v2226 = vunpack.c.l.b16 %v2094
    %v2227 = vunpack.c.l.b16 %v2095
    %v2228 = vunpack.c.l.b16 %v2096
    %v2229 = vunpack.c.l.b16 %v2097
    %v2230 = vunpack.c.l.b16 %v2098
    %v2231 = vunpack.c.l.b16 %v2099
    %v2232 = vunpack.c.l.b16 %v2100
    %v2233 = vunpack.c.l.b16 %v2101
    %v2234 = vunpack.c.l.b16 %v2102
    %v2235 = vunpack.c.l.b16 %v2103
    %v2236 = vunpack.c.l.b16 %v2104
    %v2237 = vunpack.c.l.b16 %v2105
    %v2238 = vunpack.c.l.b16 %v2106
    %v2239 = vunpack.c.l.b16 %v2107
    %v2240 = vunpack.c.l.b16 %v2108
    %v2241 = vunpack.c.l.b16 %v2109
    %v2242 = vunpack.c.l.b16 %v2110
    %v2243 = vunpack.c.l.b16 %v2111
    %v2244 = vunpack.c.l.b16 %v2112
    %v2245 = vunpack.c.l.b16 %v2113
    %v2246 = vunpack.c.l.b16 %v2114
    %v2247 = vunpack.c.l.b16 %v2115
    %v2248 = vunpack.c.l.b16 %v2116
    %v2249 = vunpack.c.l.b16 %v2117
    %v2250 = vunpack.c.l.b16 %v2118
    %v2251 = vunpack.c.l.b16 %v2119
    %v2252 = vunpack.c.l.b16 %v2120
    %v2253 = vunpack.c.l.b16 %v2121
    %v2254 = vunpack.c.l.b16 %v2122
    %v2255 = vunpack.c.l.b16 %v2123
    %v2256 = vunpack.c.l.b16 %v2124
    %v2257 = vunpack.c.l.b16 %v2125
    %v2258 = vunpack.c.l.b16 %v2126
    %v2259 = vunpack.c.l.b16 %v2127
    %v2260 = vunpack.c.l.b16 %v2128
    %v2261 = vunpack.c.l.b16 %v2129
    %v2262 = vunpack.c.l.b16 %v2130
    %v2263 = vunpack.c.l.b16 %v2131
    %v2264 = vunpack.c.l.b16 %v2132
    %v2265 = vunpack.c.l.b16 %v2133
    %v2266 = vunpack.c.l.b16 %v2134
    %v2267 = vunpack.c.l.b16 %v2135
    %v2268 = vunpack.c.l.b16 %v2136
    %v2269 = vunpack.c.l.b16 %v2137
    %v2270 = vunpack.c.l.b16 %v2138
    %v2271 = vunpack.c.l.b16 %v2139
    %v2272 = vunpack.c.l.b16 %v2140
    %v2273 = vunpack.c.l.b16 %v2141
    %v2274 = vunpack.c.l.b16 %v2142
    %v2275 = vunpack.c.l.b16 %v2143
    %v2276 = vunpack.c.l.b16 %v2144
    %v2277 = vunpack.c.l.b16 %v2145
    %v2278 = vunpack.c.l.b16 %v2146
    %v2279 = vunpack.c.l.b16 %v2147
    %v2280 = vunpack.c.l.b16 %v2148
    %v2281 = vunpack.c.l.b16 %v2149
    %v2282 = vunpack.c.l.b16 %v2150
    %v2283 = vunpack.c.l.b16 %v2151
    %v2284 = vpack.c.b16 %v2221, %v2220
    %v2285 = vpack.c.b16 %v2223, %v2222
    %v2286 = vpack.c.b16 %v2225, %v2224
    %v2287 = vpack.c.b16 %v2227, %v2226
    %v2288 = vpack.c.b16 %v2229, %v2228
    %v2289 = vpack.c.b16 %v2231, %v2230
    %v2290 = vpack.c.b16 %v2233, %v2232
    %v2291 = vpack.c.b16 %v2235, %v2234
    %v2292 = vpack.c.b16 %v2237, %v2236
    %v2293 = vpack.c.b16 %v2239, %v2238
    %v2294 = vpack.c.b16 %v2241, %v2240
    %v2295 = vpack.c.b16 %v2243, %v2242
    %v2296 = vpack.c.b16 %v2245, %v2244
    %v2297 = vpack.c.b16 %v2247, %v2246
    %v2298 = vpack.c.b16 %v2249, %v2248
    %v2299 = vpack.c.b16 %v2251, %v2250
    %v2300 = vpack.c.b16 %v2253, %v2252
    %v2301 = vpack.c.b16 %v2255, %v2254
    %v2302 = vpack.c.b16 %v2257, %v2256
    %v2303 = vpack.c.b16 %v2259, %v2258
    %v2304 = vpack.c.b16 %v2261, %v2260
    %v2305 = vpack.c.b16 %v2263, %v2262
    %v2306 = vpack.c.b16 %v2265, %v2264
    %v2307 = vpack.c.b16 %v2267, %v2266
    %v2308 = vpack.c.b16 %v2269, %v2268
    %v2309 = vpack.c.b16 %v2271, %v2270
    %v2310 = vpack.c.b16 %v2273, %v2272
    %v2311 = vpack.c.b16 %v2275, %v2274
    %v2312 = vpack.c.b16 %v2277, %v2276
    %v2313 = vpack.c.b16 %v2279, %v2278
    %v2314 = vpack.c.b16 %v2281, %v2280
    %v2315 = vpack.c.b16 %v2283, %v2282
    %2348 = vmatpush.bf16.msra.mxu0 %v2291
    %2349 = vmatpush.bf16.msra.mxu0 %v2290
    %2350 = vmatpush.bf16.msra.mxu0 %v2289
    %2351 = vmatpush.bf16.msra.mxu0 %v2288
    %2352 = vmatpush.bf16.msra.mxu0 %v2287
    %2353 = vmatpush.bf16.msra.mxu0 %v2286
    %2354 = vmatpush.bf16.msra.mxu0 %v2285
    %2355 = vmatpush.bf16.msra.mxu0 %v2284
    %2356 = vmatmul.bf16.gmra.mxu0 %v2084
    %v2357 = vpop.f32.mrf.mxu0
    %v2358 = vadd.f32 %v2154, %v2357
    %v2359 = vpop.f32.mrf.mxu0
    %v2360 = vadd.f32 %v2154, %v2359
    %2361 = vdwg.mxu0
    %2362 = vmatpush.bf16.msra.mxu0 %v2299
    %2363 = vmatpush.bf16.msra.mxu0 %v2298
    %2364 = vmatpush.bf16.msra.mxu0 %v2297
    %2365 = vmatpush.bf16.msra.mxu0 %v2296
    %2366 = vmatpush.bf16.msra.mxu0 %v2295
    %2367 = vmatpush.bf16.msra.mxu0 %v2294
    %2368 = vmatpush.bf16.msra.mxu0 %v2293
    %2369 = vmatpush.bf16.msra.mxu0 %v2292
    %2370 = vmatmul.bf16.gmra.mxu0 %v2085
    %v2371 = vpop.f32.mrf.mxu0
    %v2372 = vadd.f32 %v2358, %v2371
    %v2373 = vpop.f32.mrf.mxu0
    %v2374 = vadd.f32 %v2360, %v2373
    %2375 = vdwg.mxu0
    %2376 = vmatpush.bf16.msra.mxu0 %v2307
    %2377 = vmatpush.bf16.msra.mxu0 %v2306
    %2378 = vmatpush.bf16.msra.mxu0 %v2305
    %2379 = vmatpush.bf16.msra.mxu0 %v2304
    %2380 = vmatpush.bf16.msra.mxu0 %v2303
    %2381 = vmatpush.bf16.msra.mxu0 %v2302
    %2382 = vmatpush.bf16.msra.mxu0 %v2301
    %2383 = vmatpush.bf16.msra.mxu0 %v2300
    %2384 = vmatmul.bf16.gmra.mxu0 %v2086
    %v2385 = vpop.f32.mrf.mxu0
    %v2386 = vadd.f32 %v2372, %v2385
    %v2387 = vpop.f32.mrf.mxu0
    %v2388 = vadd.f32 %v2374, %v2387
    %2389 = vdwg.mxu0
    %2390 = vmatpush.bf16.msra.mxu0 %v2315
    %2391 = vmatpush.bf16.msra.mxu0 %v2314
    %2392 = vmatpush.bf16.msra.mxu0 %v2313
    %2393 = vmatpush.bf16.msra.mxu0 %v2312
    %2394 = vmatpush.bf16.msra.mxu0 %v2311
    %2395 = vmatpush.bf16.msra.mxu0 %v2310
    %2396 = vmatpush.bf16.msra.mxu0 %v2309
    %2397 = vmatpush.bf16.msra.mxu0 %v2308
    %2398 = vmatmul.bf16.gmra.mxu0 %v2087
    %v2399 = vpop.f32.mrf.mxu0
    %v2400 = vadd.f32 %v2386, %v2399
    %v2401 = vpop.f32.mrf.mxu0
    %v2402 = vadd.f32 %v2388, %v2401
    %2403 = vdwg.mxu0
    %v2404 = vmax.f32 %v2400, 0.0
    %v2405 = vmax.f32 %v2402, 0.0
    %v2406 = vpack.c.bf16 %v2405, %v2404
    %v2407 = vld [vmem:[#allocation4] sm:$0xf]
    %v2408 = vld [vmem:[#allocation4 + $0x4] sm:$0xf]
    %v2409 = vld [vmem:[#allocation4 + $0x8] sm:$0xf]
    %v2410 = vld [vmem:[#allocation4 + $0xc] sm:$0xf]
    %v2411 = vld [vmem:[#allocation4 + $0x10] sm:$0xf]
    %v2412 = vld [vmem:[#allocation4 + $0x14] sm:$0xf]
    %v2413 = vld [vmem:[#allocation4 + $0x18] sm:$0xf]
    %v2414 = vld [vmem:[#allocation4 + $0x1c] sm:$0xf]
    %v2415 = vld [vmem:[#allocation4 + $0x20] sm:$0xf]
    %v2416 = vld [vmem:[#allocation4 + $0x24] sm:$0xf]
    %v2417 = vld [vmem:[#allocation4 + $0x28] sm:$0xf]
    %v2418 = vld [vmem:[#allocation4 + $0x2c] sm:$0xf]
    %v2419 = vld [vmem:[#allocation4 + $0x30] sm:$0xf]
    %v2420 = vld [vmem:[#allocation4 + $0x34] sm:$0xf]
    %v2421 = vld [vmem:[#allocation4 + $0x38] sm:$0xf]
    %v2422 = vld [vmem:[#allocation4 + $0x3c] sm:$0xf]
    %v2423 = vld [vmem:[%s6] sm:$0x1]
    %v2425 = vperm.slane %v2423, 0
    %v2443 = vunpack.c.l.b16 %v2407
    %v2444 = vunpack.c.l.b16 %v2408
    %v2445 = vunpack.c.l.b16 %v2409
    %v2446 = vunpack.c.l.b16 %v2410
    %v2447 = vunpack.c.l.b16 %v2411
    %v2448 = vunpack.c.l.b16 %v2412
    %v2449 = vunpack.c.l.b16 %v2413
    %v2450 = vunpack.c.l.b16 %v2414
    %v2451 = vunpack.c.l.b16 %v2415
    %v2452 = vunpack.c.l.b16 %v2416
    %v2453 = vunpack.c.l.b16 %v2417
    %v2454 = vunpack.c.l.b16 %v2418
    %v2455 = vunpack.c.l.b16 %v2419
    %v2456 = vunpack.c.l.b16 %v2420
    %v2457 = vunpack.c.l.b16 %v2421
    %v2458 = vunpack.c.l.b16 %v2422
    %v2459 = vpack.c.b16 %v2444, %v2443
    %v2460 = vpack.c.b16 %v2446, %v2445
    %v2461 = vpack.c.b16 %v2448, %v2447
    %v2462 = vpack.c.b16 %v2450, %v2449
    %v2463 = vpack.c.b16 %v2452, %v2451
    %v2464 = vpack.c.b16 %v2454, %v2453
    %v2465 = vpack.c.b16 %v2456, %v2455
    %v2466 = vpack.c.b16 %v2458, %v2457
    %2475 = vmatpush.bf16.msra.mxu0 %v2466
    %2476 = vmatpush.bf16.msra.mxu0 %v2465
    %2477 = vmatpush.bf16.msra.mxu0 %v2464
    %2478 = vmatpush.bf16.msra.mxu0 %v2463
    %2479 = vmatpush.bf16.msra.mxu0 %v2462
    %2480 = vmatpush.bf16.msra.mxu0 %v2461
    %2481 = vmatpush.bf16.msra.mxu0 %v2460
    %2482 = vmatpush.bf16.msra.mxu0 %v2459
    %2483 = vmatmul.bf16.gmra.mxu0 %v2406
    %v2484 = vpop.f32.mrf.mxu0
    %v2485 = vadd.f32 %v2425, %v2484
    %v2486 = vpop.f32.mrf.mxu0
    %v2487 = vadd.f32 %v2425, %v2486
    %2488 = vdwg.mxu0
    %v2489 = vpack.c.bf16 %v2485, %v2485
    %v2490 = vpack.c.bf16 %v2487, %v2487
    %2491 = vst [vmem:[%s7] sm:$0xf] %v2489
    %2492 = vst [vmem:[%s7 + $0x4] sm:$0xf] %v2490
    // Predicated region
    $region38: #{_forward.1} parent=1 // pred_check
      _
    $region39: #{_forward.1} parent=1 // pred_check_branch
      %2494 = sbr.rel (0) target = $region41
    $region40: #{_forward.1} parent=1 // pred_region
      _
    $region41: #{_forward.1} parent=1 // pred_fallthru
      _
    // Predicated region
    $region42: #{_forward.1} parent=1 // pred_check
      _
    $region43: #{_forward.1} parent=1 // pred_check_branch
      %2496 = sbr.rel (0) target = $region45
    $region44: #{_forward.1} parent=1 // pred_region
      _
    $region45: #{_forward.1} parent=1 // pred_fallthru
      _
    %2497 = vsyncpa [#allocation3], 1
    %2498 = vsyncpa [#allocation5], 1

// kernel: _forward.1
$region0: #{_forward.1}
  #allocation0 [shape = 'u32[]', space=smem, size = 0x4, offset = 0x4, fixed_abs, tag = 'smem constant byte address 0x4 - core index']
  #allocation1 [shape = 'u32[72,128]{1,0:T(1,128)}', space=vmem, size = 0x9000, scoped, tag = 'internal scratch']
  %s0 = inlined_call_operand.vmem [shape: f32[16,1024], index: 0, kind: input, shape index: {}]
  %s1 = inlined_call_operand.hbm [shape: bf16[1024,512], index: 1, kind: input, shape index: {}]
  %s2 = inlined_call_operand.vmem [shape: f32[1,512], index: 2, kind: input, shape index: {}]
  %s3 = inlined_call_operand.vmem [shape: bf16[512,128], index: 3, kind: input, shape index: {}]
  %s4 = inlined_call_operand.vmem [shape: f32[1,128], index: 4, kind: input, shape index: {}]
  %s5 = inlined_call_operand.hbm [shape: bf16[128,128], index: 5, kind: input, shape index: {}]
  %s6 = inlined_call_operand.vmem [shape: f32[1,128], index: 6, kind: input, shape index: {}]
  %s7 = inlined_call_operand.vmem [shape: bf16[16,128], index: 7, kind: output, shape index: {}]
  %s8 = sld [smem:[#allocation0]]
  $region46: #{_forward.1} parent=0
    _
  %s10 = ssub.s32 1, %s8
  %s11 = scalar_select 0, %s10, %s8
  $region1: #{_forward.1} parent=0
    #allocation2 [shape = 'u8[1048576]{0}', space=vmem, size = 0x100000, scoped, tag = 'input window, operand 1, single buffered']
    #allocation3 [shape = 's32[1]{0}', space=sflag, size = 0x4, scoped, tag = 'scoped memory for _forward.1']
    #allocation4 [shape = 'u8[32768]{0}', space=vmem, size = 0x8000, scoped, tag = 'input window, operand 5, single buffered']
    #allocation5 [shape = 's32[1]{0}', space=sflag, size = 0x4, scoped, tag = 'scoped memory for _forward.1']
    %12 = vsyncpa [#allocation3], 0
    %13 = vsyncpa [#allocation5], 0
    // Predicated region
    $region2: #{_forward.1} parent=1 // pred_check
      _
    $region3: #{_forward.1} parent=1 // pred_check_branch
      %15 = sbr.rel (0) target = $region5
    $region4: #{_forward.1} parent=1 // pred_region
      _
    $region5: #{_forward.1} parent=1 // pred_fallthru
      _
    // Predicated region
    $region6: #{_forward.1} parent=1 // pred_check
      _
    $region7: #{_forward.1} parent=1 // pred_check_branch
      %17 = sbr.rel (0) target = $region9
    $region8: #{_forward.1} parent=1 // pred_region
      %19 = vsyncadd [#allocation3], 0
      %s20 = sshll.u32 %s1, 4
      %s21 = int_to_ptr.hbm [resolvable:$true] %s20
      %s22 = sshll.u32 [#allocation2], 4
      %s23 = int_to_ptr.vmem [resolvable:$true] %s22
      %28 = dma.hbm_to_vmem [thread:$0]  %s21, 32768, %s23, [#allocation3], 256, 256, 16
    $region9: #{_forward.1} parent=1 // pred_fallthru
      _
    // Predicated region
    $region10: #{_forward.1} parent=1 // pred_check
      _
    $region11: #{_forward.1} parent=1 // pred_check_branch
      %30 = sbr.rel (0) target = $region13
    $region12: #{_forward.1} parent=1 // pred_region
      _
    $region13: #{_forward.1} parent=1 // pred_fallthru
      _
    // Predicated region
    $region14: #{_forward.1} parent=1 // pred_check
      _
    $region15: #{_forward.1} parent=1 // pred_check_branch
      %32 = sbr.rel (0) target = $region17
    $region16: #{_forward.1} parent=1 // pred_region
      _
    $region17: #{_forward.1} parent=1 // pred_fallthru
      _
    // Predicated region
    $region18: #{_forward.1} parent=1 // pred_check
      _
    $region19: #{_forward.1} parent=1 // pred_check_branch
      %34 = sbr.rel (0) target = $region21
    $region20: #{_forward.1} parent=1 // pred_region
      _
    $region21: #{_forward.1} parent=1 // pred_fallthru
      _
    // Predicated region
    $region22: #{_forward.1} parent=1 // pred_check
      _
    $region23: #{_forward.1} parent=1 // pred_check_branch
      %36 = sbr.rel (0) target = $region25
    $region24: #{_forward.1} parent=1 // pred_region
      %38 = vsyncadd [#allocation5], 0
      %s39 = sshll.u32 %s5, 4
      %s40 = int_to_ptr.hbm [resolvable:$true] %s39
      %s41 = sshll.u32 [#allocation4], 4
      %s42 = int_to_ptr.vmem [resolvable:$true] %s41
      %47 = dma.hbm_to_vmem [thread:$0]  %s40, 1024, %s42, [#allocation5], 64, 64, 4
    $region25: #{_forward.1} parent=1 // pred_fallthru
      _
    // Predicated region
    $region26: #{_forward.1} parent=1 // pred_check
      _
    $region27: #{_forward.1} parent=1 // pred_check_branch
      %49 = sbr.rel (0) target = $region29
    $region28: #{_forward.1} parent=1 // pred_region
      _
    $region29: #{_forward.1} parent=1 // pred_fallthru
      _
    // Predicated region
    $region30: #{_forward.1} parent=1 // pred_check
      _
    $region31: #{_forward.1} parent=1 // pred_check_branch
      %51 = sbr.rel (0) target = $region33
    $region32: #{_forward.1} parent=1 // pred_region
      %53 = dma.done [#allocation3], 32768
    $region33: #{_forward.1} parent=1 // pred_fallthru
      _
    // Predicated region
    $region34: #{_forward.1} parent=1 // pred_check
      _
    $region35: #{_forward.1} parent=1 // pred_check_branch
      %55 = sbr.rel (0) target = $region37
    $region36: #{_forward.1} parent=1 // pred_region
      %57 = dma.done [#allocation5], 1024
    $region37: #{_forward.1} parent=1 // pred_fallthru
      _
    %v58 = vld [vmem:[%s0] sm:$0xff]
    %v59 = vld [vmem:[%s0 + $0x8] sm:$0xff]
    %v60 = vld [vmem:[%s0 + $0x10] sm:$0xff]
    %v61 = vld [vmem:[%s0 + $0x18] sm:$0xff]
    %v62 = vld [vmem:[%s0 + $0x20] sm:$0xff]
    %v63 = vld [vmem:[%s0 + $0x28] sm:$0xff]
    %v64 = vld [vmem:[%s0 + $0x30] sm:$0xff]
    %v65 = vld [vmem:[%s0 + $0x38] sm:$0xff]
    %v66 = vld [vmem:[%s0 + $0x40] sm:$0xff]
    %v67 = vld [vmem:[%s0 + $0x48] sm:$0xff]
    %v68 = vld [vmem:[%s0 + $0x50] sm:$0xff]
    %v69 = vld [vmem:[%s0 + $0x58] sm:$0xff]
    %v70 = vld [vmem:[%s0 + $0x60] sm:$0xff]
    %v71 = vld [vmem:[%s0 + $0x68] sm:$0xff]
    %v72 = vld [vmem:[%s0 + $0x70] sm:$0xff]
    %v73 = vld [vmem:[%s0 + $0x78] sm:$0xff]
    %v74 = vpack.c.bf16 %v66, %v58
    %v75 = vpack.c.bf16 %v67, %v59
    %v76 = vpack.c.bf16 %v68, %v60
    %v77 = vpack.c.bf16 %v69, %v61
    %v78 = vpack.c.bf16 %v70, %v62
    %v79 = vpack.c.bf16 %v71, %v63
    %v80 = vpack.c.bf16 %v72, %v64
    %v81 = vpack.c.bf16 %v73, %v65
    %v82 = vld [vmem:[#allocation2] sm:$0xff]
    %v83 = vld [vmem:[#allocation2 + $0x8] sm:$0xff]
    %v84 = vld [vmem:[#allocation2 + $0x10] sm:$0xff]
    %v85 = vld [vmem:[#allocation2 + $0x18] sm:$0xff]
    %v86 = vld [vmem:[#allocation2 + $0x20] sm:$0xff]
    %v87 = vld [vmem:[#allocation2 + $0x28] sm:$0xff]
    %v88 = vld [vmem:[#allocation2 + $0x30] sm:$0xff]
    %v89 = vld [vmem:[#allocation2 + $0x38] sm:$0xff]
    %v90 = vld [vmem:[#allocation2 + $0x40] sm:$0xff]
    %v91 = vld [vmem:[#allocation2 + $0x48] sm:$0xff]
    %v92 = vld [vmem:[#allocation2 + $0x50] sm:$0xff]
    %v93 = vld [vmem:[#allocation2 + $0x58] sm:$0xff]
    %v94 = vld [vmem:[#allocation2 + $0x60] sm:$0xff]
    %v95 = vld [vmem:[#allocation2 + $0x68] sm:$0xff]
    %v96 = vld [vmem:[#allocation2 + $0x70] sm:$0xff]
    %v97 = vld [vmem:[#allocation2 + $0x78] sm:$0xff]
    %v98 = vld [vmem:[#allocation2 + $0x80] sm:$0xff]
    %v99 = vld [vmem:[#allocation2 + $0x88] sm:$0xff]
    %v100 = vld [vmem:[#allocation2 + $0x90] sm:$0xff]
    %v101 = vld [vmem:[#allocation2 + $0x98] sm:$0xff]
    %v102 = vld [vmem:[#allocation2 + $0xa0] sm:$0xff]
    %v103 = vld [vmem:[#allocation2 + $0xa8] sm:$0xff]
    %v104 = vld [vmem:[#allocation2 + $0xb0] sm:$0xff]
    %v105 = vld [vmem:[#allocation2 + $0xb8] sm:$0xff]
    %v106 = vld [vmem:[#allocation2 + $0xc0] sm:$0xff]
    %v107 = vld [vmem:[#allocation2 + $0xc8] sm:$0xff]
    %v108 = vld [vmem:[#allocation2 + $0xd0] sm:$0xff]
    %v109 = vld [vmem:[#allocation2 + $0xd8] sm:$0xff]
    %v110 = vld [vmem:[#allocation2 + $0xe0] sm:$0xff]
    %v111 = vld [vmem:[#allocation2 + $0xe8] sm:$0xff]
    %v112 = vld [vmem:[#allocation2 + $0xf0] sm:$0xff]
    %v113 = vld [vmem:[#allocation2 + $0xf8] sm:$0xff]
    %v114 = vld [vmem:[#allocation2 + $0x100] sm:$0xff]
    %v115 = vld [vmem:[#allocation2 + $0x108] sm:$0xff]
    %v116 = vld [vmem:[#allocation2 + $0x110] sm:$0xff]
    %v117 = vld [vmem:[#allocation2 + $0x118] sm:$0xff]
    %v118 = vld [vmem:[#allocation2 + $0x120] sm:$0xff]
    %v119 = vld [vmem:[#allocation2 + $0x128] sm:$0xff]
    %v120 = vld [vmem:[#allocation2 + $0x130] sm:$0xff]
    %v121 = vld [vmem:[#allocation2 + $0x138] sm:$0xff]
    %v122 = vld [vmem:[#allocation2 + $0x140] sm:$0xff]
    %v123 = vld [vmem:[#allocation2 + $0x148] sm:$0xff]
    %v124 = vld [vmem:[#allocation2 + $0x150] sm:$0xff]
    %v125 = vld [vmem:[#allocation2 + $0x158] sm:$0xff]
    %v126 = vld [vmem:[#allocation2 + $0x160] sm:$0xff]
    %v127 = vld [vmem:[#allocation2 + $0x168] sm:$0xff]
    %v128 = vld [vmem:[#allocation2 + $0x170] sm:$0xff]
    %v129 = vld [vmem:[#allocation2 + $0x178] sm:$0xff]
    %v130 = vld [vmem:[#allocation2 + $0x180] sm:$0xff]
    %v131 = vld [vmem:[#allocation2 + $0x188] sm:$0xff]
    %v132 = vld [vmem:[#allocation2 + $0x190] sm:$0xff]
    %v133 = vld [vmem:[#allocation2 + $0x198] sm:$0xff]
    %v134 = vld [vmem:[#allocation2 + $0x1a0] sm:$0xff]
    %v135 = vld [vmem:[#allocation2 + $0x1a8] sm:$0xff]
    %v136 = vld [vmem:[#allocation2 + $0x1b0] sm:$0xff]
    %v137 = vld [vmem:[#allocation2 + $0x1b8] sm:$0xff]
    %v138 = vld [vmem:[#allocation2 + $0x1c0] sm:$0xff]
    %v139 = vld [vmem:[#allocation2 + $0x1c8] sm:$0xff]
    %v140 = vld [vmem:[#allocation2 + $0x1d0] sm:$0xff]
    %v141 = vld [vmem:[#allocation2 + $0x1d8] sm:$0xff]
    %v142 = vld [vmem:[#allocation2 + $0x1e0] sm:$0xff]
    %v143 = vld [vmem:[#allocation2 + $0x1e8] sm:$0xff]
    %v144 = vld [vmem:[#allocation2 + $0x1f0] sm:$0xff]
    %v145 = vld [vmem:[#allocation2 + $0x1f8] sm:$0xff]
    %v146 = vld [vmem:[#allocation2 + $0x200] sm:$0xff]
    %v147 = vld [vmem:[#allocation2 + $0x208] sm:$0xff]
    %v148 = vld [vmem:[#allocation2 + $0x210] sm:$0xff]
    %v149 = vld [vmem:[#allocation2 + $0x218] sm:$0xff]
    %v150 = vld [vmem:[#allocation2 + $0x220] sm:$0xff]
    %v151 = vld [vmem:[#allocation2 + $0x228] sm:$0xff]
    %v152 = vld [vmem:[#allocation2 + $0x230] sm:$0xff]
    %v153 = vld [vmem:[#allocation2 + $0x238] sm:$0xff]
    %v154 = vld [vmem:[#allocation2 + $0x240] sm:$0xff]
    %v155 = vld [vmem:[#allocation2 + $0x248] sm:$0xff]
    %v156 = vld [vmem:[#allocation2 + $0x250] sm:$0xff]
    %v157 = vld [vmem:[#allocation2 + $0x258] sm:$0xff]
    %v158 = vld [vmem:[#allocation2 + $0x260] sm:$0xff]
    %v159 = vld [vmem:[#allocation2 + $0x268] sm:$0xff]
    %v160 = vld [vmem:[#allocation2 + $0x270] sm:$0xff]
    %v161 = vld [vmem:[#allocation2 + $0x278] sm:$0xff]
    %v162 = vld [vmem:[#allocation2 + $0x280] sm:$0xff]
    %v163 = vld [vmem:[#allocation2 + $0x288] sm:$0xff]
    %v164 = vld [vmem:[#allocation2 + $0x290] sm:$0xff]
    %v165 = vld [vmem:[#allocation2 + $0x298] sm:$0xff]
    %v166 = vld [vmem:[#allocation2 + $0x2a0] sm:$0xff]
    %v167 = vld [vmem:[#allocation2 + $0x2a8] sm:$0xff]
    %v168 = vld [vmem:[#allocation2 + $0x2b0] sm:$0xff]
    %v169 = vld [vmem:[#allocation2 + $0x2b8] sm:$0xff]
    %v170 = vld [vmem:[#allocation2 + $0x2c0] sm:$0xff]
    %v171 = vld [vmem:[#allocation2 + $0x2c8] sm:$0xff]
    %v172 = vld [vmem:[#allocation2 + $0x2d0] sm:$0xff]
    %v173 = vld [vmem:[#allocation2 + $0x2d8] sm:$0xff]
    %v174 = vld [vmem:[#allocation2 + $0x2e0] sm:$0xff]
    %v175 = vld [vmem:[#allocation2 + $0x2e8] sm:$0xff]
    %v176 = vld [vmem:[#allocation2 + $0x2f0] sm:$0xff]
    %v177 = vld [vmem:[#allocation2 + $0x2f8] sm:$0xff]
    %v178 = vld [vmem:[#allocation2 + $0x300] sm:$0xff]
    %v179 = vld [vmem:[#allocation2 + $0x308] sm:$0xff]
    %v180 = vld [vmem:[#allocation2 + $0x310] sm:$0xff]
    %v181 = vld [vmem:[#allocation2 + $0x318] sm:$0xff]
    %v182 = vld [vmem:[#allocation2 + $0x320] sm:$0xff]
    %v183 = vld [vmem:[#allocation2 + $0x328] sm:$0xff]
    %v184 = vld [vmem:[#allocation2 + $0x330] sm:$0xff]
    %v185 = vld [vmem:[#allocation2 + $0x338] sm:$0xff]
    %v186 = vld [vmem:[#allocation2 + $0x340] sm:$0xff]
    %v187 = vld [vmem:[#allocation2 + $0x348] sm:$0xff]
    %v188 = vld [vmem:[#allocation2 + $0x350] sm:$0xff]
    %v189 = vld [vmem:[#allocation2 + $0x358] sm:$0xff]
    %v190 = vld [vmem:[#allocation2 + $0x360] sm:$0xff]
    %v191 = vld [vmem:[#allocation2 + $0x368] sm:$0xff]
    %v192 = vld [vmem:[#allocation2 + $0x370] sm:$0xff]
    %v193 = vld [vmem:[#allocation2 + $0x378] sm:$0xff]
    %v194 = vld [vmem:[#allocation2 + $0x380] sm:$0xff]
    %v195 = vld [vmem:[#allocation2 + $0x388] sm:$0xff]
    %v196 = vld [vmem:[#allocation2 + $0x390] sm:$0xff]
    %v197 = vld [vmem:[#allocation2 + $0x398] sm:$0xff]
    %v198 = vld [vmem:[#allocation2 + $0x3a0] sm:$0xff]
    %v199 = vld [vmem:[#allocation2 + $0x3a8] sm:$0xff]
    %v200 = vld [vmem:[#allocation2 + $0x3b0] sm:$0xff]
    %v201 = vld [vmem:[#allocation2 + $0x3b8] sm:$0xff]
    %v202 = vld [vmem:[#allocation2 + $0x3c0] sm:$0xff]
    %v203 = vld [vmem:[#allocation2 + $0x3c8] sm:$0xff]
    %v204 = vld [vmem:[#allocation2 + $0x3d0] sm:$0xff]
    %v205 = vld [vmem:[#allocation2 + $0x3d8] sm:$0xff]
    %v206 = vld [vmem:[#allocation2 + $0x3e0] sm:$0xff]
    %v207 = vld [vmem:[#allocation2 + $0x3e8] sm:$0xff]
    %v208 = vld [vmem:[#allocation2 + $0x3f0] sm:$0xff]
    %v209 = vld [vmem:[#allocation2 + $0x3f8] sm:$0xff]
    %v210 = vld [vmem:[#allocation2 + $0x400] sm:$0xff]
    %v211 = vld [vmem:[#allocation2 + $0x408] sm:$0xff]
    %v212 = vld [vmem:[#allocation2 + $0x410] sm:$0xff]
    %v213 = vld [vmem:[#allocation2 + $0x418] sm:$0xff]
    %v214 = vld [vmem:[#allocation2 + $0x420] sm:$0xff]
    %v215 = vld [vmem:[#allocation2 + $0x428] sm:$0xff]
    %v216 = vld [vmem:[#allocation2 + $0x430] sm:$0xff]
    %v217 = vld [vmem:[#allocation2 + $0x438] sm:$0xff]
    %v218 = vld [vmem:[#allocation2 + $0x440] sm:$0xff]
    %v219 = vld [vmem:[#allocation2 + $0x448] sm:$0xff]
    %v220 = vld [vmem:[#allocation2 + $0x450] sm:$0xff]
    %v221 = vld [vmem:[#allocation2 + $0x458] sm:$0xff]
    %v222 = vld [vmem:[#allocation2 + $0x460] sm:$0xff]
    %v223 = vld [vmem:[#allocation2 + $0x468] sm:$0xff]
    %v224 = vld [vmem:[#allocation2 + $0x470] sm:$0xff]
    %v225 = vld [vmem:[#allocation2 + $0x478] sm:$0xff]
    %v226 = vld [vmem:[#allocation2 + $0x480] sm:$0xff]
    %v227 = vld [vmem:[#allocation2 + $0x488] sm:$0xff]
    %v228 = vld [vmem:[#allocation2 + $0x490] sm:$0xff]
    %v229 = vld [vmem:[#allocation2 + $0x498] sm:$0xff]
    %v230 = vld [vmem:[#allocation2 + $0x4a0] sm:$0xff]
    %v231 = vld [vmem:[#allocation2 + $0x4a8] sm:$0xff]
    %v232 = vld [vmem:[#allocation2 + $0x4b0] sm:$0xff]
    %v233 = vld [vmem:[#allocation2 + $0x4b8] sm:$0xff]
    %v234 = vld [vmem:[#allocation2 + $0x4c0] sm:$0xff]
    %v235 = vld [vmem:[#allocation2 + $0x4c8] sm:$0xff]
    %v236 = vld [vmem:[#allocation2 + $0x4d0] sm:$0xff]
    %v237 = vld [vmem:[#allocation2 + $0x4d8] sm:$0xff]
    %v238 = vld [vmem:[#allocation2 + $0x4e0] sm:$0xff]
    %v239 = vld [vmem:[#allocation2 + $0x4e8] sm:$0xff]
    %v240 = vld [vmem:[#allocation2 + $0x4f0] sm:$0xff]
    %v241 = vld [vmem:[#allocation2 + $0x4f8] sm:$0xff]
    %v242 = vld [vmem:[#allocation2 + $0x500] sm:$0xff]
    %v243 = vld [vmem:[#allocation2 + $0x508] sm:$0xff]
    %v244 = vld [vmem:[#allocation2 + $0x510] sm:$0xff]
    %v245 = vld [vmem:[#allocation2 + $0x518] sm:$0xff]
    %v246 = vld [vmem:[#allocation2 + $0x520] sm:$0xff]
    %v247 = vld [vmem:[#allocation2 + $0x528] sm:$0xff]
    %v248 = vld [vmem:[#allocation2 + $0x530] sm:$0xff]
    %v249 = vld [vmem:[#allocation2 + $0x538] sm:$0xff]
    %v250 = vld [vmem:[#allocation2 + $0x540] sm:$0xff]
    %v251 = vld [vmem:[#allocation2 + $0x548] sm:$0xff]
    %v252 = vld [vmem:[#allocation2 + $0x550] sm:$0xff]
    %v253 = vld [vmem:[#allocation2 + $0x558] sm:$0xff]
    %v254 = vld [vmem:[#allocation2 + $0x560] sm:$0xff]
    %v255 = vld [vmem:[#allocation2 + $0x568] sm:$0xff]
    %v256 = vld [vmem:[#allocation2 + $0x570] sm:$0xff]
    %v257 = vld [vmem:[#allocation2 + $0x578] sm:$0xff]
    %v258 = vld [vmem:[#allocation2 + $0x580] sm:$0xff]
    %v259 = vld [vmem:[#allocation2 + $0x588] sm:$0xff]
    %v260 = vld [vmem:[#allocation2 + $0x590] sm:$0xff]
    %v261 = vld [vmem:[#allocation2 + $0x598] sm:$0xff]
    %v262 = vld [vmem:[#allocation2 + $0x5a0] sm:$0xff]
    %v263 = vld [vmem:[#allocation2 + $0x5a8] sm:$0xff]
    %v264 = vld [vmem:[#allocation2 + $0x5b0] sm:$0xff]
    %v265 = vld [vmem:[#allocation2 + $0x5b8] sm:$0xff]
    %v266 = vld [vmem:[#allocation2 + $0x5c0] sm:$0xff]
    %v267 = vld [vmem:[#allocation2 + $0x5c8] sm:$0xff]
    %v268 = vld [vmem:[#allocation2 + $0x5d0] sm:$0xff]
    %v269 = vld [vmem:[#allocation2 + $0x5d8] sm:$0xff]
    %v270 = vld [vmem:[#allocation2 + $0x5e0] sm:$0xff]
    %v271 = vld [vmem:[#allocation2 + $0x5e8] sm:$0xff]
    %v272 = vld [vmem:[#allocation2 + $0x5f0] sm:$0xff]
    %v273 = vld [vmem:[#allocation2 + $0x5f8] sm:$0xff]
    %v274 = vld [vmem:[#allocation2 + $0x600] sm:$0xff]
    %v275 = vld [vmem:[#allocation2 + $0x608] sm:$0xff]
    %v276 = vld [vmem:[#allocation2 + $0x610] sm:$0xff]
    %v277 = vld [vmem:[#allocation2 + $0x618] sm:$0xff]
    %v278 = vld [vmem:[#allocation2 + $0x620] sm:$0xff]
    %v279 = vld [vmem:[#allocation2 + $0x628] sm:$0xff]
    %v280 = vld [vmem:[#allocation2 + $0x630] sm:$0xff]
    %v281 = vld [vmem:[#allocation2 + $0x638] sm:$0xff]
    %v282 = vld [vmem:[#allocation2 + $0x640] sm:$0xff]
    %v283 = vld [vmem:[#allocation2 + $0x648] sm:$0xff]
    %v284 = vld [vmem:[#allocation2 + $0x650] sm:$0xff]
    %v285 = vld [vmem:[#allocation2 + $0x658] sm:$0xff]
    %v286 = vld [vmem:[#allocation2 + $0x660] sm:$0xff]
    %v287 = vld [vmem:[#allocation2 + $0x668] sm:$0xff]
    %v288 = vld [vmem:[#allocation2 + $0x670] sm:$0xff]
    %v289 = vld [vmem:[#allocation2 + $0x678] sm:$0xff]
    %v290 = vld [vmem:[#allocation2 + $0x680] sm:$0xff]
    %v291 = vld [vmem:[#allocation2 + $0x688] sm:$0xff]
    %v292 = vld [vmem:[#allocation2 + $0x690] sm:$0xff]
    %v293 = vld [vmem:[#allocation2 + $0x698] sm:$0xff]
    %v294 = vld [vmem:[#allocation2 + $0x6a0] sm:$0xff]
    %v295 = vld [vmem:[#allocation2 + $0x6a8] sm:$0xff]
    %v296 = vld [vmem:[#allocation2 + $0x6b0] sm:$0xff]
    %v297 = vld [vmem:[#allocation2 + $0x6b8] sm:$0xff]
    %v298 = vld [vmem:[#allocation2 + $0x6c0] sm:$0xff]
    %v299 = vld [vmem:[#allocation2 + $0x6c8] sm:$0xff]
    %v300 = vld [vmem:[#allocation2 + $0x6d0] sm:$0xff]
    %v301 = vld [vmem:[#allocation2 + $0x6d8] sm:$0xff]
    %v302 = vld [vmem:[#allocation2 + $0x6e0] sm:$0xff]
    %v303 = vld [vmem:[#allocation2 + $0x6e8] sm:$0xff]
    %v304 = vld [vmem:[#allocation2 + $0x6f0] sm:$0xff]
    %v305 = vld [vmem:[#allocation2 + $0x6f8] sm:$0xff]
    %v306 = vld [vmem:[#allocation2 + $0x700] sm:$0xff]
    %v307 = vld [vmem:[#allocation2 + $0x708] sm:$0xff]
    %v308 = vld [vmem:[#allocation2 + $0x710] sm:$0xff]
    %v309 = vld [vmem:[#allocation2 + $0x718] sm:$0xff]
    %v310 = vld [vmem:[#allocation2 + $0x720] sm:$0xff]
    %v311 = vld [vmem:[#allocation2 + $0x728] sm:$0xff]
    %v312 = vld [vmem:[#allocation2 + $0x730] sm:$0xff]
    %v313 = vld [vmem:[#allocation2 + $0x738] sm:$0xff]
    %v314 = vld [vmem:[#allocation2 + $0x740] sm:$0xff]
    %v315 = vld [vmem:[#allocation2 + $0x748] sm:$0xff]
    %v316 = vld [vmem:[#allocation2 + $0x750] sm:$0xff]
    %v317 = vld [vmem:[#allocation2 + $0x758] sm:$0xff]
    %v318 = vld [vmem:[#allocation2 + $0x760] sm:$0xff]
    %v319 = vld [vmem:[#allocation2 + $0x768] sm:$0xff]
    %v320 = vld [vmem:[#allocation2 + $0x770] sm:$0xff]
    %v321 = vld [vmem:[#allocation2 + $0x778] sm:$0xff]
    %v322 = vld [vmem:[#allocation2 + $0x780] sm:$0xff]
    %v323 = vld [vmem:[#allocation2 + $0x788] sm:$0xff]
    %v324 = vld [vmem:[#allocation2 + $0x790] sm:$0xff]
    %v325 = vld [vmem:[#allocation2 + $0x798] sm:$0xff]
    %v326 = vld [vmem:[#allocation2 + $0x7a0] sm:$0xff]
    %v327 = vld [vmem:[#allocation2 + $0x7a8] sm:$0xff]
    %v328 = vld [vmem:[#allocation2 + $0x7b0] sm:$0xff]
    %v329 = vld [vmem:[#allocation2 + $0x7b8] sm:$0xff]
    %v330 = vld [vmem:[#allocation2 + $0x7c0] sm:$0xff]
    %v331 = vld [vmem:[#allocation2 + $0x7c8] sm:$0xff]
    %v332 = vld [vmem:[#allocation2 + $0x7d0] sm:$0xff]
    %v333 = vld [vmem:[#allocation2 + $0x7d8] sm:$0xff]
    %v334 = vld [vmem:[#allocation2 + $0x7e0] sm:$0xff]
    %v335 = vld [vmem:[#allocation2 + $0x7e8] sm:$0xff]
    %v336 = vld [vmem:[#allocation2 + $0x7f0] sm:$0xff]
    %v337 = vld [vmem:[#allocation2 + $0x7f8] sm:$0xff]
    %v338 = vld [vmem:[%s2] sm:$0xf]
    %v340 = vperm.slane %v338, 0
    %v341 = vperm.slane %v338, 1
    %v342 = vperm.slane %v338, 2
    %v343 = vperm.slane %v338, 3
    %v604 = vunpack.c.l.b16 %v82
    %v605 = vunpack.c.h.b16 %v82
    %v606 = vunpack.c.l.b16 %v83
    %v607 = vunpack.c.h.b16 %v83
    %v608 = vunpack.c.l.b16 %v84
    %v609 = vunpack.c.h.b16 %v84
    %v610 = vunpack.c.l.b16 %v85
    %v611 = vunpack.c.h.b16 %v85
    %v612 = vunpack.c.l.b16 %v86
    %v613 = vunpack.c.h.b16 %v86
    %v614 = vunpack.c.l.b16 %v87
    %v615 = vunpack.c.h.b16 %v87
    %v616 = vunpack.c.l.b16 %v88
    %v617 = vunpack.c.h.b16 %v88
    %v618 = vunpack.c.l.b16 %v89
    %v619 = vunpack.c.h.b16 %v89
    %v620 = vunpack.c.l.b16 %v90
    %v621 = vunpack.c.h.b16 %v90
    %v622 = vunpack.c.l.b16 %v91
    %v623 = vunpack.c.h.b16 %v91
    %v624 = vunpack.c.l.b16 %v92
    %v625 = vunpack.c.h.b16 %v92
    %v626 = vunpack.c.l.b16 %v93
    %v627 = vunpack.c.h.b16 %v93
    %v628 = vunpack.c.l.b16 %v94
    %v629 = vunpack.c.h.b16 %v94
    %v630 = vunpack.c.l.b16 %v95
    %v631 = vunpack.c.h.b16 %v95
    %v632 = vunpack.c.l.b16 %v96
    %v633 = vunpack.c.h.b16 %v96
    %v634 = vunpack.c.l.b16 %v97
    %v635 = vunpack.c.h.b16 %v97
    %v636 = vunpack.c.l.b16 %v98
    %v637 = vunpack.c.h.b16 %v98
    %v638 = vunpack.c.l.b16 %v99
    %v639 = vunpack.c.h.b16 %v99
    %v640 = vunpack.c.l.b16 %v100
    %v641 = vunpack.c.h.b16 %v100
    %v642 = vunpack.c.l.b16 %v101
    %v643 = vunpack.c.h.b16 %v101
    %v644 = vunpack.c.l.b16 %v102
    %v645 = vunpack.c.h.b16 %v102
    %v646 = vunpack.c.l.b16 %v103
    %v647 = vunpack.c.h.b16 %v103
    %v648 = vunpack.c.l.b16 %v104
    %v649 = vunpack.c.h.b16 %v104
    %v650 = vunpack.c.l.b16 %v105
    %v651 = vunpack.c.h.b16 %v105
    %v652 = vunpack.c.l.b16 %v106
    %v653 = vunpack.c.h.b16 %v106
    %v654 = vunpack.c.l.b16 %v107
    %v655 = vunpack.c.h.b16 %v107
    %v656 = vunpack.c.l.b16 %v108
    %v657 = vunpack.c.h.b16 %v108
    %v658 = vunpack.c.l.b16 %v109
    %v659 = vunpack.c.h.b16 %v109
    %v660 = vunpack.c.l.b16 %v110
    %v661 = vunpack.c.h.b16 %v110
    %v662 = vunpack.c.l.b16 %v111
    %v663 = vunpack.c.h.b16 %v111
    %v664 = vunpack.c.l.b16 %v112
    %v665 = vunpack.c.h.b16 %v112
    %v666 = vunpack.c.l.b16 %v113
    %v667 = vunpack.c.h.b16 %v113
    %v668 = vunpack.c.l.b16 %v114
    %v669 = vunpack.c.h.b16 %v114
    %v670 = vunpack.c.l.b16 %v115
    %v671 = vunpack.c.h.b16 %v115
    %v672 = vunpack.c.l.b16 %v116
    %v673 = vunpack.c.h.b16 %v116
    %v674 = vunpack.c.l.b16 %v117
    %v675 = vunpack.c.h.b16 %v117
    %v676 = vunpack.c.l.b16 %v118
    %v677 = vunpack.c.h.b16 %v118
    %v678 = vunpack.c.l.b16 %v119
    %v679 = vunpack.c.h.b16 %v119
    %v680 = vunpack.c.l.b16 %v120
    %v681 = vunpack.c.h.b16 %v120
    %v682 = vunpack.c.l.b16 %v121
    %v683 = vunpack.c.h.b16 %v121
    %v684 = vunpack.c.l.b16 %v122
    %v685 = vunpack.c.h.b16 %v122
    %v686 = vunpack.c.l.b16 %v123
    %v687 = vunpack.c.h.b16 %v123
    %v688 = vunpack.c.l.b16 %v124
    %v689 = vunpack.c.h.b16 %v124
    %v690 = vunpack.c.l.b16 %v125
    %v691 = vunpack.c.h.b16 %v125
    %v692 = vunpack.c.l.b16 %v126
    %v693 = vunpack.c.h.b16 %v126
    %v694 = vunpack.c.l.b16 %v127
    %v695 = vunpack.c.h.b16 %v127
    %v696 = vunpack.c.l.b16 %v128
    %v697 = vunpack.c.h.b16 %v128
    %v698 = vunpack.c.l.b16 %v129
    %v699 = vunpack.c.h.b16 %v129
    %v700 = vunpack.c.l.b16 %v130
    %v701 = vunpack.c.h.b16 %v130
    %v702 = vunpack.c.l.b16 %v131
    %v703 = vunpack.c.h.b16 %v131
    %v704 = vunpack.c.l.b16 %v132
    %v705 = vunpack.c.h.b16 %v132
    %v706 = vunpack.c.l.b16 %v133
    %v707 = vunpack.c.h.b16 %v133
    %v708 = vunpack.c.l.b16 %v134
    %v709 = vunpack.c.h.b16 %v134
    %v710 = vunpack.c.l.b16 %v135
    %v711 = vunpack.c.h.b16 %v135
    %v712 = vunpack.c.l.b16 %v136
    %v713 = vunpack.c.h.b16 %v136
    %v714 = vunpack.c.l.b16 %v137
    %v715 = vunpack.c.h.b16 %v137
    %v716 = vunpack.c.l.b16 %v138
    %v717 = vunpack.c.h.b16 %v138
    %v718 = vunpack.c.l.b16 %v139
    %v719 = vunpack.c.h.b16 %v139
    %v720 = vunpack.c.l.b16 %v140
    %v721 = vunpack.c.h.b16 %v140
    %v722 = vunpack.c.l.b16 %v141
    %v723 = vunpack.c.h.b16 %v141
    %v724 = vunpack.c.l.b16 %v142
    %v725 = vunpack.c.h.b16 %v142
    %v726 = vunpack.c.l.b16 %v143
    %v727 = vunpack.c.h.b16 %v143
    %v728 = vunpack.c.l.b16 %v144
    %v729 = vunpack.c.h.b16 %v144
    %v730 = vunpack.c.l.b16 %v145
    %v731 = vunpack.c.h.b16 %v145
    %v732 = vunpack.c.l.b16 %v146
    %v733 = vunpack.c.h.b16 %v146
    %v734 = vunpack.c.l.b16 %v147
    %v735 = vunpack.c.h.b16 %v147
    %v736 = vunpack.c.l.b16 %v148
    %v737 = vunpack.c.h.b16 %v148
    %v738 = vunpack.c.l.b16 %v149
    %v739 = vunpack.c.h.b16 %v149
    %v740 = vunpack.c.l.b16 %v150
    %v741 = vunpack.c.h.b16 %v150
    %v742 = vunpack.c.l.b16 %v151
    %v743 = vunpack.c.h.b16 %v151
    %v744 = vunpack.c.l.b16 %v152
    %v745 = vunpack.c.h.b16 %v152
    %v746 = vunpack.c.l.b16 %v153
    %v747 = vunpack.c.h.b16 %v153
    %v748 = vunpack.c.l.b16 %v154
    %v749 = vunpack.c.h.b16 %v154
    %v750 = vunpack.c.l.b16 %v155
    %v751 = vunpack.c.h.b16 %v155
    %v752 = vunpack.c.l.b16 %v156
    %v753 = vunpack.c.h.b16 %v156
    %v754 = vunpack.c.l.b16 %v157
    %v755 = vunpack.c.h.b16 %v157
    %v756 = vunpack.c.l.b16 %v158
    %v757 = vunpack.c.h.b16 %v158
    %v758 = vunpack.c.l.b16 %v159
    %v759 = vunpack.c.h.b16 %v159
    %v760 = vunpack.c.l.b16 %v160
    %v761 = vunpack.c.h.b16 %v160
    %v762 = vunpack.c.l.b16 %v161
    %v763 = vunpack.c.h.b16 %v161
    %v764 = vunpack.c.l.b16 %v162
    %v765 = vunpack.c.h.b16 %v162
    %v766 = vunpack.c.l.b16 %v163
    %v767 = vunpack.c.h.b16 %v163
    %v768 = vunpack.c.l.b16 %v164
    %v769 = vunpack.c.h.b16 %v164
    %v770 = vunpack.c.l.b16 %v165
    %v771 = vunpack.c.h.b16 %v165
    %v772 = vunpack.c.l.b16 %v166
    %v773 = vunpack.c.h.b16 %v166
    %v774 = vunpack.c.l.b16 %v167
    %v775 = vunpack.c.h.b16 %v167
    %v776 = vunpack.c.l.b16 %v168
    %v777 = vunpack.c.h.b16 %v168
    %v778 = vunpack.c.l.b16 %v169
    %v779 = vunpack.c.h.b16 %v169
    %v780 = vunpack.c.l.b16 %v170
    %v781 = vunpack.c.h.b16 %v170
    %v782 = vunpack.c.l.b16 %v171
    %v783 = vunpack.c.h.b16 %v171
    %v784 = vunpack.c.l.b16 %v172
    %v785 = vunpack.c.h.b16 %v172
    %v786 = vunpack.c.l.b16 %v173
    %v787 = vunpack.c.h.b16 %v173
    %v788 = vunpack.c.l.b16 %v174
    %v789 = vunpack.c.h.b16 %v174
    %v790 = vunpack.c.l.b16 %v175
    %v791 = vunpack.c.h.b16 %v175
    %v792 = vunpack.c.l.b16 %v176
    %v793 = vunpack.c.h.b16 %v176
    %v794 = vunpack.c.l.b16 %v177
    %v795 = vunpack.c.h.b16 %v177
    %v796 = vunpack.c.l.b16 %v178
    %v797 = vunpack.c.h.b16 %v178
    %v798 = vunpack.c.l.b16 %v179
    %v799 = vunpack.c.h.b16 %v179
    %v800 = vunpack.c.l.b16 %v180
    %v801 = vunpack.c.h.b16 %v180
    %v802 = vunpack.c.l.b16 %v181
    %v803 = vunpack.c.h.b16 %v181
    %v804 = vunpack.c.l.b16 %v182
    %v805 = vunpack.c.h.b16 %v182
    %v806 = vunpack.c.l.b16 %v183
    %v807 = vunpack.c.h.b16 %v183
    %v808 = vunpack.c.l.b16 %v184
    %v809 = vunpack.c.h.b16 %v184
    %v810 = vunpack.c.l.b16 %v185
    %v811 = vunpack.c.h.b16 %v185
    %v812 = vunpack.c.l.b16 %v186
    %v813 = vunpack.c.h.b16 %v186
    %v814 = vunpack.c.l.b16 %v187
    %v815 = vunpack.c.h.b16 %v187
    %v816 = vunpack.c.l.b16 %v188
    %v817 = vunpack.c.h.b16 %v188
    %v818 = vunpack.c.l.b16 %v189
    %v819 = vunpack.c.h.b16 %v189
    %v820 = vunpack.c.l.b16 %v190
    %v821 = vunpack.c.h.b16 %v190
    %v822 = vunpack.c.l.b16 %v191
    %v823 = vunpack.c.h.b16 %v191
    %v824 = vunpack.c.l.b16 %v192
    %v825 = vunpack.c.h.b16 %v192
    %v826 = vunpack.c.l.b16 %v193
    %v827 = vunpack.c.h.b16 %v193
    %v828 = vunpack.c.l.b16 %v194
    %v829 = vunpack.c.h.b16 %v194
    %v830 = vunpack.c.l.b16 %v195
    %v831 = vunpack.c.h.b16 %v195
    %v832 = vunpack.c.l.b16 %v196
    %v833 = vunpack.c.h.b16 %v196
    %v834 = vunpack.c.l.b16 %v197
    %v835 = vunpack.c.h.b16 %v197
    %v836 = vunpack.c.l.b16 %v198
    %v837 = vunpack.c.h.b16 %v198
    %v838 = vunpack.c.l.b16 %v199
    %v839 = vunpack.c.h.b16 %v199
    %v840 = vunpack.c.l.b16 %v200
    %v841 = vunpack.c.h.b16 %v200
    %v842 = vunpack.c.l.b16 %v201
    %v843 = vunpack.c.h.b16 %v201
    %v844 = vunpack.c.l.b16 %v202
    %v845 = vunpack.c.h.b16 %v202
    %v846 = vunpack.c.l.b16 %v203
    %v847 = vunpack.c.h.b16 %v203
    %v848 = vunpack.c.l.b16 %v204
    %v849 = vunpack.c.h.b16 %v204
    %v850 = vunpack.c.l.b16 %v205
    %v851 = vunpack.c.h.b16 %v205
    %v852 = vunpack.c.l.b16 %v206
    %v853 = vunpack.c.h.b16 %v206
    %v854 = vunpack.c.l.b16 %v207
    %v855 = vunpack.c.h.b16 %v207
    %v856 = vunpack.c.l.b16 %v208
    %v857 = vunpack.c.h.b16 %v208
    %v858 = vunpack.c.l.b16 %v209
    %v859 = vunpack.c.h.b16 %v209
    %v860 = vunpack.c.l.b16 %v210
    %v861 = vunpack.c.h.b16 %v210
    %v862 = vunpack.c.l.b16 %v211
    %v863 = vunpack.c.h.b16 %v211
    %v864 = vunpack.c.l.b16 %v212
    %v865 = vunpack.c.h.b16 %v212
    %v866 = vunpack.c.l.b16 %v213
    %v867 = vunpack.c.h.b16 %v213
    %v868 = vunpack.c.l.b16 %v214
    %v869 = vunpack.c.h.b16 %v214
    %v870 = vunpack.c.l.b16 %v215
    %v871 = vunpack.c.h.b16 %v215
    %v872 = vunpack.c.l.b16 %v216
    %v873 = vunpack.c.h.b16 %v216
    %v874 = vunpack.c.l.b16 %v217
    %v875 = vunpack.c.h.b16 %v217
    %v876 = vunpack.c.l.b16 %v218
    %v877 = vunpack.c.h.b16 %v218
    %v878 = vunpack.c.l.b16 %v219
    %v879 = vunpack.c.h.b16 %v219
    %v880 = vunpack.c.l.b16 %v220
    %v881 = vunpack.c.h.b16 %v220
    %v882 = vunpack.c.l.b16 %v221
    %v883 = vunpack.c.h.b16 %v221
    %v884 = vunpack.c.l.b16 %v222
    %v885 = vunpack.c.h.b16 %v222
    %v886 = vunpack.c.l.b16 %v223
    %v887 = vunpack.c.h.b16 %v223
    %v888 = vunpack.c.l.b16 %v224
    %v889 = vunpack.c.h.b16 %v224
    %v890 = vunpack.c.l.b16 %v225
    %v891 = vunpack.c.h.b16 %v225
    %v892 = vunpack.c.l.b16 %v226
    %v893 = vunpack.c.h.b16 %v226
    %v894 = vunpack.c.l.b16 %v227
    %v895 = vunpack.c.h.b16 %v227
    %v896 = vunpack.c.l.b16 %v228
    %v897 = vunpack.c.h.b16 %v228
    %v898 = vunpack.c.l.b16 %v229
    %v899 = vunpack.c.h.b16 %v229
    %v900 = vunpack.c.l.b16 %v230
    %v901 = vunpack.c.h.b16 %v230
    %v902 = vunpack.c.l.b16 %v231
    %v903 = vunpack.c.h.b16 %v231
    %v904 = vunpack.c.l.b16 %v232
    %v905 = vunpack.c.h.b16 %v232
    %v906 = vunpack.c.l.b16 %v233
    %v907 = vunpack.c.h.b16 %v233
    %v908 = vunpack.c.l.b16 %v234
    %v909 = vunpack.c.h.b16 %v234
    %v910 = vunpack.c.l.b16 %v235
    %v911 = vunpack.c.h.b16 %v235
    %v912 = vunpack.c.l.b16 %v236
    %v913 = vunpack.c.h.b16 %v236
    %v914 = vunpack.c.l.b16 %v237
    %v915 = vunpack.c.h.b16 %v237
    %v916 = vunpack.c.l.b16 %v238
    %v917 = vunpack.c.h.b16 %v238
    %v918 = vunpack.c.l.b16 %v239
    %v919 = vunpack.c.h.b16 %v239
    %v920 = vunpack.c.l.b16 %v240
    %v921 = vunpack.c.h.b16 %v240
    %v922 = vunpack.c.l.b16 %v241
    %v923 = vunpack.c.h.b16 %v241
    %v924 = vunpack.c.l.b16 %v242
    %v925 = vunpack.c.h.b16 %v242
    %v926 = vunpack.c.l.b16 %v243
    %v927 = vunpack.c.h.b16 %v243
    %v928 = vunpack.c.l.b16 %v244
    %v929 = vunpack.c.h.b16 %v244
    %v930 = vunpack.c.l.b16 %v245
    %v931 = vunpack.c.h.b16 %v245
    %v932 = vunpack.c.l.b16 %v246
    %v933 = vunpack.c.h.b16 %v246
    %v934 = vunpack.c.l.b16 %v247
    %v935 = vunpack.c.h.b16 %v247
    %v936 = vunpack.c.l.b16 %v248
    %v937 = vunpack.c.h.b16 %v248
    %v938 = vunpack.c.l.b16 %v249
    %v939 = vunpack.c.h.b16 %v249
    %v940 = vunpack.c.l.b16 %v250
    %v941 = vunpack.c.h.b16 %v250
    %v942 = vunpack.c.l.b16 %v251
    %v943 = vunpack.c.h.b16 %v251
    %v944 = vunpack.c.l.b16 %v252
    %v945 = vunpack.c.h.b16 %v252
    %v946 = vunpack.c.l.b16 %v253
    %v947 = vunpack.c.h.b16 %v253
    %v948 = vunpack.c.l.b16 %v254
    %v949 = vunpack.c.h.b16 %v254
    %v950 = vunpack.c.l.b16 %v255
    %v951 = vunpack.c.h.b16 %v255
    %v952 = vunpack.c.l.b16 %v256
    %v953 = vunpack.c.h.b16 %v256
    %v954 = vunpack.c.l.b16 %v257
    %v955 = vunpack.c.h.b16 %v257
    %v956 = vunpack.c.l.b16 %v258
    %v957 = vunpack.c.h.b16 %v258
    %v958 = vunpack.c.l.b16 %v259
    %v959 = vunpack.c.h.b16 %v259
    %v960 = vunpack.c.l.b16 %v260
    %v961 = vunpack.c.h.b16 %v260
    %v962 = vunpack.c.l.b16 %v261
    %v963 = vunpack.c.h.b16 %v261
    %v964 = vunpack.c.l.b16 %v262
    %v965 = vunpack.c.h.b16 %v262
    %v966 = vunpack.c.l.b16 %v263
    %v967 = vunpack.c.h.b16 %v263
    %v968 = vunpack.c.l.b16 %v264
    %v969 = vunpack.c.h.b16 %v264
    %v970 = vunpack.c.l.b16 %v265
    %v971 = vunpack.c.h.b16 %v265
    %v972 = vunpack.c.l.b16 %v266
    %v973 = vunpack.c.h.b16 %v266
    %v974 = vunpack.c.l.b16 %v267
    %v975 = vunpack.c.h.b16 %v267
    %v976 = vunpack.c.l.b16 %v268
    %v977 = vunpack.c.h.b16 %v268
    %v978 = vunpack.c.l.b16 %v269
    %v979 = vunpack.c.h.b16 %v269
    %v980 = vunpack.c.l.b16 %v270
    %v981 = vunpack.c.h.b16 %v270
    %v982 = vunpack.c.l.b16 %v271
    %v983 = vunpack.c.h.b16 %v271
    %v984 = vunpack.c.l.b16 %v272
    %v985 = vunpack.c.h.b16 %v272
    %v986 = vunpack.c.l.b16 %v273
    %v987 = vunpack.c.h.b16 %v273
    %v988 = vunpack.c.l.b16 %v274
    %v989 = vunpack.c.h.b16 %v274
    %v990 = vunpack.c.l.b16 %v275
    %v991 = vunpack.c.h.b16 %v275
    %v992 = vunpack.c.l.b16 %v276
    %v993 = vunpack.c.h.b16 %v276
    %v994 = vunpack.c.l.b16 %v277
    %v995 = vunpack.c.h.b16 %v277
    %v996 = vunpack.c.l.b16 %v278
    %v997 = vunpack.c.h.b16 %v278
    %v998 = vunpack.c.l.b16 %v279
    %v999 = vunpack.c.h.b16 %v279
    %v1000 = vunpack.c.l.b16 %v280
    %v1001 = vunpack.c.h.b16 %v280
    %v1002 = vunpack.c.l.b16 %v281
    %v1003 = vunpack.c.h.b16 %v281
    %v1004 = vunpack.c.l.b16 %v282
    %v1005 = vunpack.c.h.b16 %v282
    %v1006 = vunpack.c.l.b16 %v283
    %v1007 = vunpack.c.h.b16 %v283
    %v1008 = vunpack.c.l.b16 %v284
    %v1009 = vunpack.c.h.b16 %v284
    %v1010 = vunpack.c.l.b16 %v285
    %v1011 = vunpack.c.h.b16 %v285
    %v1012 = vunpack.c.l.b16 %v286
    %v1013 = vunpack.c.h.b16 %v286
    %v1014 = vunpack.c.l.b16 %v287
    %v1015 = vunpack.c.h.b16 %v287
    %v1016 = vunpack.c.l.b16 %v288
    %v1017 = vunpack.c.h.b16 %v288
    %v1018 = vunpack.c.l.b16 %v289
    %v1019 = vunpack.c.h.b16 %v289
    %v1020 = vunpack.c.l.b16 %v290
    %v1021 = vunpack.c.h.b16 %v290
    %v1022 = vunpack.c.l.b16 %v291
    %v1023 = vunpack.c.h.b16 %v291
    %v1024 = vunpack.c.l.b16 %v292
    %v1025 = vunpack.c.h.b16 %v292
    %v1026 = vunpack.c.l.b16 %v293
    %v1027 = vunpack.c.h.b16 %v293
    %v1028 = vunpack.c.l.b16 %v294
    %v1029 = vunpack.c.h.b16 %v294
    %v1030 = vunpack.c.l.b16 %v295
    %v1031 = vunpack.c.h.b16 %v295
    %v1032 = vunpack.c.l.b16 %v296
    %v1033 = vunpack.c.h.b16 %v296
    %v1034 = vunpack.c.l.b16 %v297
    %v1035 = vunpack.c.h.b16 %v297
    %v1036 = vunpack.c.l.b16 %v298
    %v1037 = vunpack.c.h.b16 %v298
    %v1038 = vunpack.c.l.b16 %v299
    %v1039 = vunpack.c.h.b16 %v299
    %v1040 = vunpack.c.l.b16 %v300
    %v1041 = vunpack.c.h.b16 %v300
    %v1042 = vunpack.c.l.b16 %v301
    %v1043 = vunpack.c.h.b16 %v301
    %v1044 = vunpack.c.l.b16 %v302
    %v1045 = vunpack.c.h.b16 %v302
    %v1046 = vunpack.c.l.b16 %v303
    %v1047 = vunpack.c.h.b16 %v303
    %v1048 = vunpack.c.l.b16 %v304
    %v1049 = vunpack.c.h.b16 %v304
    %v1050 = vunpack.c.l.b16 %v305
    %v1051 = vunpack.c.h.b16 %v305
    %v1052 = vunpack.c.l.b16 %v306
    %v1053 = vunpack.c.h.b16 %v306
    %v1054 = vunpack.c.l.b16 %v307
    %v1055 = vunpack.c.h.b16 %v307
    %v1056 = vunpack.c.l.b16 %v308
    %v1057 = vunpack.c.h.b16 %v308
    %v1058 = vunpack.c.l.b16 %v309
    %v1059 = vunpack.c.h.b16 %v309
    %v1060 = vunpack.c.l.b16 %v310
    %v1061 = vunpack.c.h.b16 %v310
    %v1062 = vunpack.c.l.b16 %v311
    %v1063 = vunpack.c.h.b16 %v311
    %v1064 = vunpack.c.l.b16 %v312
    %v1065 = vunpack.c.h.b16 %v312
    %v1066 = vunpack.c.l.b16 %v313
    %v1067 = vunpack.c.h.b16 %v313
    %v1068 = vunpack.c.l.b16 %v314
    %v1069 = vunpack.c.h.b16 %v314
    %v1070 = vunpack.c.l.b16 %v315
    %v1071 = vunpack.c.h.b16 %v315
    %v1072 = vunpack.c.l.b16 %v316
    %v1073 = vunpack.c.h.b16 %v316
    %v1074 = vunpack.c.l.b16 %v317
    %v1075 = vunpack.c.h.b16 %v317
    %v1076 = vunpack.c.l.b16 %v318
    %v1077 = vunpack.c.h.b16 %v318
    %v1078 = vunpack.c.l.b16 %v319
    %v1079 = vunpack.c.h.b16 %v319
    %v1080 = vunpack.c.l.b16 %v320
    %v1081 = vunpack.c.h.b16 %v320
    %v1082 = vunpack.c.l.b16 %v321
    %v1083 = vunpack.c.h.b16 %v321
    %v1084 = vunpack.c.l.b16 %v322
    %v1085 = vunpack.c.h.b16 %v322
    %v1086 = vunpack.c.l.b16 %v323
    %v1087 = vunpack.c.h.b16 %v323
    %v1088 = vunpack.c.l.b16 %v324
    %v1089 = vunpack.c.h.b16 %v324
    %v1090 = vunpack.c.l.b16 %v325
    %v1091 = vunpack.c.h.b16 %v325
    %v1092 = vunpack.c.l.b16 %v326
    %v1093 = vunpack.c.h.b16 %v326
    %v1094 = vunpack.c.l.b16 %v327
    %v1095 = vunpack.c.h.b16 %v327
    %v1096 = vunpack.c.l.b16 %v328
    %v1097 = vunpack.c.h.b16 %v328
    %v1098 = vunpack.c.l.b16 %v329
    %v1099 = vunpack.c.h.b16 %v329
    %v1100 = vunpack.c.l.b16 %v330
    %v1101 = vunpack.c.h.b16 %v330
    %v1102 = vunpack.c.l.b16 %v331
    %v1103 = vunpack.c.h.b16 %v331
    %v1104 = vunpack.c.l.b16 %v332
    %v1105 = vunpack.c.h.b16 %v332
    %v1106 = vunpack.c.l.b16 %v333
    %v1107 = vunpack.c.h.b16 %v333
    %v1108 = vunpack.c.l.b16 %v334
    %v1109 = vunpack.c.h.b16 %v334
    %v1110 = vunpack.c.l.b16 %v335
    %v1111 = vunpack.c.h.b16 %v335
    %v1112 = vunpack.c.l.b16 %v336
    %v1113 = vunpack.c.h.b16 %v336
    %v1114 = vunpack.c.l.b16 %v337
    %v1115 = vunpack.c.h.b16 %v337
    %v1116 = vpack.c.b16 %v608, %v604
    %v1117 = vpack.c.b16 %v609, %v605
    %v1118 = vpack.c.b16 %v610, %v606
    %v1119 = vpack.c.b16 %v611, %v607
    %v1120 = vpack.c.b16 %v616, %v612
    %v1121 = vpack.c.b16 %v617, %v613
    %v1122 = vpack.c.b16 %v618, %v614
    %v1123 = vpack.c.b16 %v619, %v615
    %v1124 = vpack.c.b16 %v624, %v620
    %v1125 = vpack.c.b16 %v625, %v621
    %v1126 = vpack.c.b16 %v626, %v622
    %v1127 = vpack.c.b16 %v627, %v623
    %v1128 = vpack.c.b16 %v632, %v628
    %v1129 = vpack.c.b16 %v633, %v629
    %v1130 = vpack.c.b16 %v634, %v630
    %v1131 = vpack.c.b16 %v635, %v631
    %v1132 = vpack.c.b16 %v640, %v636
    %v1133 = vpack.c.b16 %v641, %v637
    %v1134 = vpack.c.b16 %v642, %v638
    %v1135 = vpack.c.b16 %v643, %v639
    %v1136 = vpack.c.b16 %v648, %v644
    %v1137 = vpack.c.b16 %v649, %v645
    %v1138 = vpack.c.b16 %v650, %v646
    %v1139 = vpack.c.b16 %v651, %v647
    %v1140 = vpack.c.b16 %v656, %v652
    %v1141 = vpack.c.b16 %v657, %v653
    %v1142 = vpack.c.b16 %v658, %v654
    %v1143 = vpack.c.b16 %v659, %v655
    %v1144 = vpack.c.b16 %v664, %v660
    %v1145 = vpack.c.b16 %v665, %v661
    %v1146 = vpack.c.b16 %v666, %v662
    %v1147 = vpack.c.b16 %v667, %v663
    %v1148 = vpack.c.b16 %v672, %v668
    %v1149 = vpack.c.b16 %v673, %v669
    %v1150 = vpack.c.b16 %v674, %v670
    %v1151 = vpack.c.b16 %v675, %v671
    %v1152 = vpack.c.b16 %v680, %v676
    %v1153 = vpack.c.b16 %v681, %v677
    %v1154 = vpack.c.b16 %v682, %v678
    %v1155 = vpack.c.b16 %v683, %v679
    %v1156 = vpack.c.b16 %v688, %v684
    %v1157 = vpack.c.b16 %v689, %v685
    %v1158 = vpack.c.b16 %v690, %v686
    %v1159 = vpack.c.b16 %v691, %v687
    %v1160 = vpack.c.b16 %v696, %v692
    %v1161 = vpack.c.b16 %v697, %v693
    %v1162 = vpack.c.b16 %v698, %v694
    %v1163 = vpack.c.b16 %v699, %v695
    %v1164 = vpack.c.b16 %v704, %v700
    %v1165 = vpack.c.b16 %v705, %v701
    %v1166 = vpack.c.b16 %v706, %v702
    %v1167 = vpack.c.b16 %v707, %v703
    %v1168 = vpack.c.b16 %v712, %v708
    %v1169 = vpack.c.b16 %v713, %v709
    %v1170 = vpack.c.b16 %v714, %v710
    %v1171 = vpack.c.b16 %v715, %v711
    %v1172 = vpack.c.b16 %v720, %v716
    %v1173 = vpack.c.b16 %v721, %v717
    %v1174 = vpack.c.b16 %v722, %v718
    %v1175 = vpack.c.b16 %v723, %v719
    %v1176 = vpack.c.b16 %v728, %v724
    %v1177 = vpack.c.b16 %v729, %v725
    %v1178 = vpack.c.b16 %v730, %v726
    %v1179 = vpack.c.b16 %v731, %v727
    %v1180 = vpack.c.b16 %v736, %v732
    %v1181 = vpack.c.b16 %v737, %v733
    %v1182 = vpack.c.b16 %v738, %v734
    %v1183 = vpack.c.b16 %v739, %v735
    %v1184 = vpack.c.b16 %v744, %v740
    %v1185 = vpack.c.b16 %v745, %v741
    %v1186 = vpack.c.b16 %v746, %v742
    %v1187 = vpack.c.b16 %v747, %v743
    %v1188 = vpack.c.b16 %v752, %v748
    %v1189 = vpack.c.b16 %v753, %v749
    %v1190 = vpack.c.b16 %v754, %v750
    %v1191 = vpack.c.b16 %v755, %v751
    %v1192 = vpack.c.b16 %v760, %v756
    %v1193 = vpack.c.b16 %v761, %v757
    %v1194 = vpack.c.b16 %v762, %v758
    %v1195 = vpack.c.b16 %v763, %v759
    %v1196 = vpack.c.b16 %v768, %v764
    %v1197 = vpack.c.b16 %v769, %v765
    %v1198 = vpack.c.b16 %v770, %v766
    %v1199 = vpack.c.b16 %v771, %v767
    %v1200 = vpack.c.b16 %v776, %v772
    %v1201 = vpack.c.b16 %v777, %v773
    %v1202 = vpack.c.b16 %v778, %v774
    %v1203 = vpack.c.b16 %v779, %v775
    %v1204 = vpack.c.b16 %v784, %v780
    %v1205 = vpack.c.b16 %v785, %v781
    %v1206 = vpack.c.b16 %v786, %v782
    %v1207 = vpack.c.b16 %v787, %v783
    %v1208 = vpack.c.b16 %v792, %v788
    %v1209 = vpack.c.b16 %v793, %v789
    %v1210 = vpack.c.b16 %v794, %v790
    %v1211 = vpack.c.b16 %v795, %v791
    %v1212 = vpack.c.b16 %v800, %v796
    %v1213 = vpack.c.b16 %v801, %v797
    %v1214 = vpack.c.b16 %v802, %v798
    %v1215 = vpack.c.b16 %v803, %v799
    %v1216 = vpack.c.b16 %v808, %v804
    %v1217 = vpack.c.b16 %v809, %v805
    %v1218 = vpack.c.b16 %v810, %v806
    %v1219 = vpack.c.b16 %v811, %v807
    %v1220 = vpack.c.b16 %v816, %v812
    %v1221 = vpack.c.b16 %v817, %v813
    %v1222 = vpack.c.b16 %v818, %v814
    %v1223 = vpack.c.b16 %v819, %v815
    %v1224 = vpack.c.b16 %v824, %v820
    %v1225 = vpack.c.b16 %v825, %v821
    %v1226 = vpack.c.b16 %v826, %v822
    %v1227 = vpack.c.b16 %v827, %v823
    %v1228 = vpack.c.b16 %v832, %v828
    %v1229 = vpack.c.b16 %v833, %v829
    %v1230 = vpack.c.b16 %v834, %v830
    %v1231 = vpack.c.b16 %v835, %v831
    %v1232 = vpack.c.b16 %v840, %v836
    %v1233 = vpack.c.b16 %v841, %v837
    %v1234 = vpack.c.b16 %v842, %v838
    %v1235 = vpack.c.b16 %v843, %v839
    %v1236 = vpack.c.b16 %v848, %v844
    %v1237 = vpack.c.b16 %v849, %v845
    %v1238 = vpack.c.b16 %v850, %v846
    %v1239 = vpack.c.b16 %v851, %v847
    %v1240 = vpack.c.b16 %v856, %v852
    %v1241 = vpack.c.b16 %v857, %v853
    %v1242 = vpack.c.b16 %v858, %v854
    %v1243 = vpack.c.b16 %v859, %v855
    %v1244 = vpack.c.b16 %v864, %v860
    %v1245 = vpack.c.b16 %v865, %v861
    %v1246 = vpack.c.b16 %v866, %v862
    %v1247 = vpack.c.b16 %v867, %v863
    %v1248 = vpack.c.b16 %v872, %v868
    %v1249 = vpack.c.b16 %v873, %v869
    %v1250 = vpack.c.b16 %v874, %v870
    %v1251 = vpack.c.b16 %v875, %v871
    %v1252 = vpack.c.b16 %v880, %v876
    %v1253 = vpack.c.b16 %v881, %v877
    %v1254 = vpack.c.b16 %v882, %v878
    %v1255 = vpack.c.b16 %v883, %v879
    %v1256 = vpack.c.b16 %v888, %v884
    %v1257 = vpack.c.b16 %v889, %v885
    %v1258 = vpack.c.b16 %v890, %v886
    %v1259 = vpack.c.b16 %v891, %v887
    %v1260 = vpack.c.b16 %v896, %v892
    %v1261 = vpack.c.b16 %v897, %v893
    %v1262 = vpack.c.b16 %v898, %v894
    %v1263 = vpack.c.b16 %v899, %v895
    %v1264 = vpack.c.b16 %v904, %v900
    %v1265 = vpack.c.b16 %v905, %v901
    %v1266 = vpack.c.b16 %v906, %v902
    %v1267 = vpack.c.b16 %v907, %v903
    %v1268 = vpack.c.b16 %v912, %v908
    %v1269 = vpack.c.b16 %v913, %v909
    %v1270 = vpack.c.b16 %v914, %v910
    %v1271 = vpack.c.b16 %v915, %v911
    %v1272 = vpack.c.b16 %v920, %v916
    %v1273 = vpack.c.b16 %v921, %v917
    %v1274 = vpack.c.b16 %v922, %v918
    %v1275 = vpack.c.b16 %v923, %v919
    %v1276 = vpack.c.b16 %v928, %v924
    %v1277 = vpack.c.b16 %v929, %v925
    %v1278 = vpack.c.b16 %v930, %v926
    %v1279 = vpack.c.b16 %v931, %v927
    %v1280 = vpack.c.b16 %v936, %v932
    %v1281 = vpack.c.b16 %v937, %v933
    %v1282 = vpack.c.b16 %v938, %v934
    %v1283 = vpack.c.b16 %v939, %v935
    %v1284 = vpack.c.b16 %v944, %v940
    %v1285 = vpack.c.b16 %v945, %v941
    %v1286 = vpack.c.b16 %v946, %v942
    %v1287 = vpack.c.b16 %v947, %v943
    %v1288 = vpack.c.b16 %v952, %v948
    %v1289 = vpack.c.b16 %v953, %v949
    %v1290 = vpack.c.b16 %v954, %v950
    %v1291 = vpack.c.b16 %v955, %v951
    %v1292 = vpack.c.b16 %v960, %v956
    %v1293 = vpack.c.b16 %v961, %v957
    %v1294 = vpack.c.b16 %v962, %v958
    %v1295 = vpack.c.b16 %v963, %v959
    %v1296 = vpack.c.b16 %v968, %v964
    %v1297 = vpack.c.b16 %v969, %v965
    %v1298 = vpack.c.b16 %v970, %v966
    %v1299 = vpack.c.b16 %v971, %v967
    %v1300 = vpack.c.b16 %v976, %v972
    %v1301 = vpack.c.b16 %v977, %v973
    %v1302 = vpack.c.b16 %v978, %v974
    %v1303 = vpack.c.b16 %v979, %v975
    %v1304 = vpack.c.b16 %v984, %v980
    %v1305 = vpack.c.b16 %v985, %v981
    %v1306 = vpack.c.b16 %v986, %v982
    %v1307 = vpack.c.b16 %v987, %v983
    %v1308 = vpack.c.b16 %v992, %v988
    %v1309 = vpack.c.b16 %v993, %v989
    %v1310 = vpack.c.b16 %v994, %v990
    %v1311 = vpack.c.b16 %v995, %v991
    %v1312 = vpack.c.b16 %v1000, %v996
    %v1313 = vpack.c.b16 %v1001, %v997
    %v1314 = vpack.c.b16 %v1002, %v998
    %v1315 = vpack.c.b16 %v1003, %v999
    %v1316 = vpack.c.b16 %v1008, %v1004
    %v1317 = vpack.c.b16 %v1009, %v1005
    %v1318 = vpack.c.b16 %v1010, %v1006
    %v1319 = vpack.c.b16 %v1011, %v1007
    %v1320 = vpack.c.b16 %v1016, %v1012
    %v1321 = vpack.c.b16 %v1017, %v1013
    %v1322 = vpack.c.b16 %v1018, %v1014
    %v1323 = vpack.c.b16 %v1019, %v1015
    %v1324 = vpack.c.b16 %v1024, %v1020
    %v1325 = vpack.c.b16 %v1025, %v1021
    %v1326 = vpack.c.b16 %v1026, %v1022
    %v1327 = vpack.c.b16 %v1027, %v1023
    %v1328 = vpack.c.b16 %v1032, %v1028
    %v1329 = vpack.c.b16 %v1033, %v1029
    %v1330 = vpack.c.b16 %v1034, %v1030
    %v1331 = vpack.c.b16 %v1035, %v1031
    %v1332 = vpack.c.b16 %v1040, %v1036
    %v1333 = vpack.c.b16 %v1041, %v1037
    %v1334 = vpack.c.b16 %v1042, %v1038
    %v1335 = vpack.c.b16 %v1043, %v1039
    %v1336 = vpack.c.b16 %v1048, %v1044
    %v1337 = vpack.c.b16 %v1049, %v1045
    %v1338 = vpack.c.b16 %v1050, %v1046
    %v1339 = vpack.c.b16 %v1051, %v1047
    %v1340 = vpack.c.b16 %v1056, %v1052
    %v1341 = vpack.c.b16 %v1057, %v1053
    %v1342 = vpack.c.b16 %v1058, %v1054
    %v1343 = vpack.c.b16 %v1059, %v1055
    %v1344 = vpack.c.b16 %v1064, %v1060
    %v1345 = vpack.c.b16 %v1065, %v1061
    %v1346 = vpack.c.b16 %v1066, %v1062
    %v1347 = vpack.c.b16 %v1067, %v1063
    %v1348 = vpack.c.b16 %v1072, %v1068
    %v1349 = vpack.c.b16 %v1073, %v1069
    %v1350 = vpack.c.b16 %v1074, %v1070
    %v1351 = vpack.c.b16 %v1075, %v1071
    %v1352 = vpack.c.b16 %v1080, %v1076
    %v1353 = vpack.c.b16 %v1081, %v1077
    %v1354 = vpack.c.b16 %v1082, %v1078
    %v1355 = vpack.c.b16 %v1083, %v1079
    %v1356 = vpack.c.b16 %v1088, %v1084
    %v1357 = vpack.c.b16 %v1089, %v1085
    %v1358 = vpack.c.b16 %v1090, %v1086
    %v1359 = vpack.c.b16 %v1091, %v1087
    %v1360 = vpack.c.b16 %v1096, %v1092
    %v1361 = vpack.c.b16 %v1097, %v1093
    %v1362 = vpack.c.b16 %v1098, %v1094
    %v1363 = vpack.c.b16 %v1099, %v1095
    %v1364 = vpack.c.b16 %v1104, %v1100
    %v1365 = vpack.c.b16 %v1105, %v1101
    %v1366 = vpack.c.b16 %v1106, %v1102
    %v1367 = vpack.c.b16 %v1107, %v1103
    %v1368 = vpack.c.b16 %v1112, %v1108
    %v1369 = vpack.c.b16 %v1113, %v1109
    %v1370 = vpack.c.b16 %v1114, %v1110
    %v1371 = vpack.c.b16 %v1115, %v1111
    %1628 = vmatpush.bf16.msra.mxu0 %v1144
    %1629 = vmatpush.bf16.msra.mxu0 %v1140
    %1630 = vmatpush.bf16.msra.mxu0 %v1136
    %1631 = vmatpush.bf16.msra.mxu0 %v1132
    %1632 = vmatpush.bf16.msra.mxu0 %v1128
    %1633 = vmatpush.bf16.msra.mxu0 %v1124
    %1634 = vmatpush.bf16.msra.mxu0 %v1120
    %1635 = vmatpush.bf16.msra.mxu0 %v1116
    %1636 = vmatmul.bf16.gmra.mxu0 %v74
    %v1637 = vpop.f32.mrf.mxu0
    %v1638 = vadd.f32 %v340, %v1637
    %v1639 = vpop.f32.mrf.mxu0
    %v1640 = vadd.f32 %v340, %v1639
    %1641 = vdwg.mxu0
    %1642 = vmatpush.bf16.msra.mxu0 %v1176
    %1643 = vmatpush.bf16.msra.mxu0 %v1172
    %1644 = vmatpush.bf16.msra.mxu0 %v1168
    %1645 = vmatpush.bf16.msra.mxu0 %v1164
    %1646 = vmatpush.bf16.msra.mxu0 %v1160
    %1647 = vmatpush.bf16.msra.mxu0 %v1156
    %1648 = vmatpush.bf16.msra.mxu0 %v1152
    %1649 = vmatpush.bf16.msra.mxu0 %v1148
    %1650 = vmatmul.bf16.gmra.mxu0 %v75
    %v1651 = vpop.f32.mrf.mxu0
    %v1652 = vadd.f32 %v1638, %v1651
    %v1653 = vpop.f32.mrf.mxu0
    %v1654 = vadd.f32 %v1640, %v1653
    %1655 = vdwg.mxu0
    %1656 = vmatpush.bf16.msra.mxu0 %v1208
    %1657 = vmatpush.bf16.msra.mxu0 %v1204
    %1658 = vmatpush.bf16.msra.mxu0 %v1200
    %1659 = vmatpush.bf16.msra.mxu0 %v1196
    %1660 = vmatpush.bf16.msra.mxu0 %v1192
    %1661 = vmatpush.bf16.msra.mxu0 %v1188
    %1662 = vmatpush.bf16.msra.mxu0 %v1184
    %1663 = vmatpush.bf16.msra.mxu0 %v1180
    %1664 = vmatmul.bf16.gmra.mxu0 %v76
    %v1665 = vpop.f32.mrf.mxu0
    %v1666 = vadd.f32 %v1652, %v1665
    %v1667 = vpop.f32.mrf.mxu0
    %v1668 = vadd.f32 %v1654, %v1667
    %1669 = vdwg.mxu0
    %1670 = vmatpush.bf16.msra.mxu0 %v1240
    %1671 = vmatpush.bf16.msra.mxu0 %v1236
    %1672 = vmatpush.bf16.msra.mxu0 %v1232
    %1673 = vmatpush.bf16.msra.mxu0 %v1228
    %1674 = vmatpush.bf16.msra.mxu0 %v1224
    %1675 = vmatpush.bf16.msra.mxu0 %v1220
    %1676 = vmatpush.bf16.msra.mxu0 %v1216
    %1677 = vmatpush.bf16.msra.mxu0 %v1212
    %1678 = vmatmul.bf16.gmra.mxu0 %v77
    %v1679 = vpop.f32.mrf.mxu0
    %v1680 = vadd.f32 %v1666, %v1679
    %v1681 = vpop.f32.mrf.mxu0
    %v1682 = vadd.f32 %v1668, %v1681
    %1683 = vdwg.mxu0
    %1684 = vmatpush.bf16.msra.mxu0 %v1272
    %1685 = vmatpush.bf16.msra.mxu0 %v1268
    %1686 = vmatpush.bf16.msra.mxu0 %v1264
    %1687 = vmatpush.bf16.msra.mxu0 %v1260
    %1688 = vmatpush.bf16.msra.mxu0 %v1256
    %1689 = vmatpush.bf16.msra.mxu0 %v1252
    %1690 = vmatpush.bf16.msra.mxu0 %v1248
    %1691 = vmatpush.bf16.msra.mxu0 %v1244
    %1692 = vmatmul.bf16.gmra.mxu0 %v78
    %v1693 = vpop.f32.mrf.mxu0
    %v1694 = vadd.f32 %v1680, %v1693
    %v1695 = vpop.f32.mrf.mxu0
    %v1696 = vadd.f32 %v1682, %v1695
    %1697 = vdwg.mxu0
    %1698 = vmatpush.bf16.msra.mxu0 %v1304
    %1699 = vmatpush.bf16.msra.mxu0 %v1300
    %1700 = vmatpush.bf16.msra.mxu0 %v1296
    %1701 = vmatpush.bf16.msra.mxu0 %v1292
    %1702 = vmatpush.bf16.msra.mxu0 %v1288
    %1703 = vmatpush.bf16.msra.mxu0 %v1284
    %1704 = vmatpush.bf16.msra.mxu0 %v1280
    %1705 = vmatpush.bf16.msra.mxu0 %v1276
    %1706 = vmatmul.bf16.gmra.mxu0 %v79
    %v1707 = vpop.f32.mrf.mxu0
    %v1708 = vadd.f32 %v1694, %v1707
    %v1709 = vpop.f32.mrf.mxu0
    %v1710 = vadd.f32 %v1696, %v1709
    %1711 = vdwg.mxu0
    %1712 = vmatpush.bf16.msra.mxu0 %v1336
    %1713 = vmatpush.bf16.msra.mxu0 %v1332
    %1714 = vmatpush.bf16.msra.mxu0 %v1328
    %1715 = vmatpush.bf16.msra.mxu0 %v1324
    %1716 = vmatpush.bf16.msra.mxu0 %v1320
    %1717 = vmatpush.bf16.msra.mxu0 %v1316
    %1718 = vmatpush.bf16.msra.mxu0 %v1312
    %1719 = vmatpush.bf16.msra.mxu0 %v1308
    %1720 = vmatmul.bf16.gmra.mxu0 %v80
    %v1721 = vpop.f32.mrf.mxu0
    %v1722 = vadd.f32 %v1708, %v1721
    %v1723 = vpop.f32.mrf.mxu0
    %v1724 = vadd.f32 %v1710, %v1723
    %1725 = vdwg.mxu0
    %1726 = vmatpush.bf16.msra.mxu0 %v1368
    %1727 = vmatpush.bf16.msra.mxu0 %v1364
    %1728 = vmatpush.bf16.msra.mxu0 %v1360
    %1729 = vmatpush.bf16.msra.mxu0 %v1356
    %1730 = vmatpush.bf16.msra.mxu0 %v1352
    %1731 = vmatpush.bf16.msra.mxu0 %v1348
    %1732 = vmatpush.bf16.msra.mxu0 %v1344
    %1733 = vmatpush.bf16.msra.mxu0 %v1340
    %1734 = vmatmul.bf16.gmra.mxu0 %v81
    %v1735 = vpop.f32.mrf.mxu0
    %v1736 = vadd.f32 %v1722, %v1735
    %v1737 = vpop.f32.mrf.mxu0
    %v1738 = vadd.f32 %v1724, %v1737
    %1739 = vdwg.mxu0
    %1740 = vmatpush.bf16.msra.mxu0 %v1145
    %1741 = vmatpush.bf16.msra.mxu0 %v1141
    %1742 = vmatpush.bf16.msra.mxu0 %v1137
    %1743 = vmatpush.bf16.msra.mxu0 %v1133
    %1744 = vmatpush.bf16.msra.mxu0 %v1129
    %1745 = vmatpush.bf16.msra.mxu0 %v1125
    %1746 = vmatpush.bf16.msra.mxu0 %v1121
    %1747 = vmatpush.bf16.msra.mxu0 %v1117
    %1748 = vmatmul.bf16.gmra.mxu0 %v74
    %v1749 = vpop.f32.mrf.mxu0
    %v1750 = vadd.f32 %v341, %v1749
    %v1751 = vpop.f32.mrf.mxu0
    %v1752 = vadd.f32 %v341, %v1751
    %1753 = vdwg.mxu0
    %1754 = vmatpush.bf16.msra.mxu0 %v1177
    %1755 = vmatpush.bf16.msra.mxu0 %v1173
    %1756 = vmatpush.bf16.msra.mxu0 %v1169
    %1757 = vmatpush.bf16.msra.mxu0 %v1165
    %1758 = vmatpush.bf16.msra.mxu0 %v1161
    %1759 = vmatpush.bf16.msra.mxu0 %v1157
    %1760 = vmatpush.bf16.msra.mxu0 %v1153
    %1761 = vmatpush.bf16.msra.mxu0 %v1149
    %1762 = vmatmul.bf16.gmra.mxu0 %v75
    %v1763 = vpop.f32.mrf.mxu0
    %v1764 = vadd.f32 %v1750, %v1763
    %v1765 = vpop.f32.mrf.mxu0
    %v1766 = vadd.f32 %v1752, %v1765
    %1767 = vdwg.mxu0
    %1768 = vmatpush.bf16.msra.mxu0 %v1209
    %1769 = vmatpush.bf16.msra.mxu0 %v1205
    %1770 = vmatpush.bf16.msra.mxu0 %v1201
    %1771 = vmatpush.bf16.msra.mxu0 %v1197
    %1772 = vmatpush.bf16.msra.mxu0 %v1193
    %1773 = vmatpush.bf16.msra.mxu0 %v1189
    %1774 = vmatpush.bf16.msra.mxu0 %v1185
    %1775 = vmatpush.bf16.msra.mxu0 %v1181
    %1776 = vmatmul.bf16.gmra.mxu0 %v76
    %v1777 = vpop.f32.mrf.mxu0
    %v1778 = vadd.f32 %v1764, %v1777
    %v1779 = vpop.f32.mrf.mxu0
    %v1780 = vadd.f32 %v1766, %v1779
    %1781 = vdwg.mxu0
    %1782 = vmatpush.bf16.msra.mxu0 %v1241
    %1783 = vmatpush.bf16.msra.mxu0 %v1237
    %1784 = vmatpush.bf16.msra.mxu0 %v1233
    %1785 = vmatpush.bf16.msra.mxu0 %v1229
    %1786 = vmatpush.bf16.msra.mxu0 %v1225
    %1787 = vmatpush.bf16.msra.mxu0 %v1221
    %1788 = vmatpush.bf16.msra.mxu0 %v1217
    %1789 = vmatpush.bf16.msra.mxu0 %v1213
    %1790 = vmatmul.bf16.gmra.mxu0 %v77
    %v1791 = vpop.f32.mrf.mxu0
    %v1792 = vadd.f32 %v1778, %v1791
    %v1793 = vpop.f32.mrf.mxu0
    %v1794 = vadd.f32 %v1780, %v1793
    %1795 = vdwg.mxu0
    %1796 = vmatpush.bf16.msra.mxu0 %v1273
    %1797 = vmatpush.bf16.msra.mxu0 %v1269
    %1798 = vmatpush.bf16.msra.mxu0 %v1265
    %1799 = vmatpush.bf16.msra.mxu0 %v1261
    %1800 = vmatpush.bf16.msra.mxu0 %v1257
    %1801 = vmatpush.bf16.msra.mxu0 %v1253
    %1802 = vmatpush.bf16.msra.mxu0 %v1249
    %1803 = vmatpush.bf16.msra.mxu0 %v1245
    %1804 = vmatmul.bf16.gmra.mxu0 %v78
    %v1805 = vpop.f32.mrf.mxu0
    %v1806 = vadd.f32 %v1792, %v1805
    %v1807 = vpop.f32.mrf.mxu0
    %v1808 = vadd.f32 %v1794, %v1807
    %1809 = vdwg.mxu0
    %1810 = vmatpush.bf16.msra.mxu0 %v1305
    %1811 = vmatpush.bf16.msra.mxu0 %v1301
    %1812 = vmatpush.bf16.msra.mxu0 %v1297
    %1813 = vmatpush.bf16.msra.mxu0 %v1293
    %1814 = vmatpush.bf16.msra.mxu0 %v1289
    %1815 = vmatpush.bf16.msra.mxu0 %v1285
    %1816 = vmatpush.bf16.msra.mxu0 %v1281
    %1817 = vmatpush.bf16.msra.mxu0 %v1277
    %1818 = vmatmul.bf16.gmra.mxu0 %v79
    %v1819 = vpop.f32.mrf.mxu0
    %v1820 = vadd.f32 %v1806, %v1819
    %v1821 = vpop.f32.mrf.mxu0
    %v1822 = vadd.f32 %v1808, %v1821
    %1823 = vdwg.mxu0
    %1824 = vmatpush.bf16.msra.mxu0 %v1337
    %1825 = vmatpush.bf16.msra.mxu0 %v1333
    %1826 = vmatpush.bf16.msra.mxu0 %v1329
    %1827 = vmatpush.bf16.msra.mxu0 %v1325
    %1828 = vmatpush.bf16.msra.mxu0 %v1321
    %1829 = vmatpush.bf16.msra.mxu0 %v1317
    %1830 = vmatpush.bf16.msra.mxu0 %v1313
    %1831 = vmatpush.bf16.msra.mxu0 %v1309
    %1832 = vmatmul.bf16.gmra.mxu0 %v80
    %v1833 = vpop.f32.mrf.mxu0
    %v1834 = vadd.f32 %v1820, %v1833
    %v1835 = vpop.f32.mrf.mxu0
    %v1836 = vadd.f32 %v1822, %v1835
    %1837 = vdwg.mxu0
    %1838 = vmatpush.bf16.msra.mxu0 %v1369
    %1839 = vmatpush.bf16.msra.mxu0 %v1365
    %1840 = vmatpush.bf16.msra.mxu0 %v1361
    %1841 = vmatpush.bf16.msra.mxu0 %v1357
    %1842 = vmatpush.bf16.msra.mxu0 %v1353
    %1843 = vmatpush.bf16.msra.mxu0 %v1349
    %1844 = vmatpush.bf16.msra.mxu0 %v1345
    %1845 = vmatpush.bf16.msra.mxu0 %v1341
    %1846 = vmatmul.bf16.gmra.mxu0 %v81
    %v1847 = vpop.f32.mrf.mxu0
    %v1848 = vadd.f32 %v1834, %v1847
    %v1849 = vpop.f32.mrf.mxu0
    %v1850 = vadd.f32 %v1836, %v1849
    %1851 = vdwg.mxu0
    %1852 = vmatpush.bf16.msra.mxu0 %v1146
    %1853 = vmatpush.bf16.msra.mxu0 %v1142
    %1854 = vmatpush.bf16.msra.mxu0 %v1138
    %1855 = vmatpush.bf16.msra.mxu0 %v1134
    %1856 = vmatpush.bf16.msra.mxu0 %v1130
    %1857 = vmatpush.bf16.msra.mxu0 %v1126
    %1858 = vmatpush.bf16.msra.mxu0 %v1122
    %1859 = vmatpush.bf16.msra.mxu0 %v1118
    %1860 = vmatmul.bf16.gmra.mxu0 %v74
    %v1861 = vpop.f32.mrf.mxu0
    %v1862 = vadd.f32 %v342, %v1861
    %v1863 = vpop.f32.mrf.mxu0
    %v1864 = vadd.f32 %v342, %v1863
    %1865 = vdwg.mxu0
    %1866 = vmatpush.bf16.msra.mxu0 %v1178
    %1867 = vmatpush.bf16.msra.mxu0 %v1174
    %1868 = vmatpush.bf16.msra.mxu0 %v1170
    %1869 = vmatpush.bf16.msra.mxu0 %v1166
    %1870 = vmatpush.bf16.msra.mxu0 %v1162
    %1871 = vmatpush.bf16.msra.mxu0 %v1158
    %1872 = vmatpush.bf16.msra.mxu0 %v1154
    %1873 = vmatpush.bf16.msra.mxu0 %v1150
    %1874 = vmatmul.bf16.gmra.mxu0 %v75
    %v1875 = vpop.f32.mrf.mxu0
    %v1876 = vadd.f32 %v1862, %v1875
    %v1877 = vpop.f32.mrf.mxu0
    %v1878 = vadd.f32 %v1864, %v1877
    %1879 = vdwg.mxu0
    %1880 = vmatpush.bf16.msra.mxu0 %v1210
    %1881 = vmatpush.bf16.msra.mxu0 %v1206
    %1882 = vmatpush.bf16.msra.mxu0 %v1202
    %1883 = vmatpush.bf16.msra.mxu0 %v1198
    %1884 = vmatpush.bf16.msra.mxu0 %v1194
    %1885 = vmatpush.bf16.msra.mxu0 %v1190
    %1886 = vmatpush.bf16.msra.mxu0 %v1186
    %1887 = vmatpush.bf16.msra.mxu0 %v1182
    %1888 = vmatmul.bf16.gmra.mxu0 %v76
    %v1889 = vpop.f32.mrf.mxu0
    %v1890 = vadd.f32 %v1876, %v1889
    %v1891 = vpop.f32.mrf.mxu0
    %v1892 = vadd.f32 %v1878, %v1891
    %1893 = vdwg.mxu0
    %1894 = vmatpush.bf16.msra.mxu0 %v1242
    %1895 = vmatpush.bf16.msra.mxu0 %v1238
    %1896 = vmatpush.bf16.msra.mxu0 %v1234
    %1897 = vmatpush.bf16.msra.mxu0 %v1230
    %1898 = vmatpush.bf16.msra.mxu0 %v1226
    %1899 = vmatpush.bf16.msra.mxu0 %v1222
    %1900 = vmatpush.bf16.msra.mxu0 %v1218
    %1901 = vmatpush.bf16.msra.mxu0 %v1214
    %1902 = vmatmul.bf16.gmra.mxu0 %v77
    %v1903 = vpop.f32.mrf.mxu0
    %v1904 = vadd.f32 %v1890, %v1903
    %v1905 = vpop.f32.mrf.mxu0
    %v1906 = vadd.f32 %v1892, %v1905
    %1907 = vdwg.mxu0
    %1908 = vmatpush.bf16.msra.mxu0 %v1274
    %1909 = vmatpush.bf16.msra.mxu0 %v1270
    %1910 = vmatpush.bf16.msra.mxu0 %v1266
    %1911 = vmatpush.bf16.msra.mxu0 %v1262
    %1912 = vmatpush.bf16.msra.mxu0 %v1258
    %1913 = vmatpush.bf16.msra.mxu0 %v1254
    %1914 = vmatpush.bf16.msra.mxu0 %v1250
    %1915 = vmatpush.bf16.msra.mxu0 %v1246
    %1916 = vmatmul.bf16.gmra.mxu0 %v78
    %v1917 = vpop.f32.mrf.mxu0
    %v1918 = vadd.f32 %v1904, %v1917
    %v1919 = vpop.f32.mrf.mxu0
    %v1920 = vadd.f32 %v1906, %v1919
    %1921 = vdwg.mxu0
    %1922 = vmatpush.bf16.msra.mxu0 %v1306
    %1923 = vmatpush.bf16.msra.mxu0 %v1302
    %1924 = vmatpush.bf16.msra.mxu0 %v1298
    %1925 = vmatpush.bf16.msra.mxu0 %v1294
    %1926 = vmatpush.bf16.msra.mxu0 %v1290
    %1927 = vmatpush.bf16.msra.mxu0 %v1286
    %1928 = vmatpush.bf16.msra.mxu0 %v1282
    %1929 = vmatpush.bf16.msra.mxu0 %v1278
    %1930 = vmatmul.bf16.gmra.mxu0 %v79
    %v1931 = vpop.f32.mrf.mxu0
    %v1932 = vadd.f32 %v1918, %v1931
    %v1933 = vpop.f32.mrf.mxu0
    %v1934 = vadd.f32 %v1920, %v1933
    %1935 = vdwg.mxu0
    %1936 = vmatpush.bf16.msra.mxu0 %v1338
    %1937 = vmatpush.bf16.msra.mxu0 %v1334
    %1938 = vmatpush.bf16.msra.mxu0 %v1330
    %1939 = vmatpush.bf16.msra.mxu0 %v1326
    %1940 = vmatpush.bf16.msra.mxu0 %v1322
    %1941 = vmatpush.bf16.msra.mxu0 %v1318
    %1942 = vmatpush.bf16.msra.mxu0 %v1314
    %1943 = vmatpush.bf16.msra.mxu0 %v1310
    %1944 = vmatmul.bf16.gmra.mxu0 %v80
    %v1945 = vpop.f32.mrf.mxu0
    %v1946 = vadd.f32 %v1932, %v1945
    %v1947 = vpop.f32.mrf.mxu0
    %v1948 = vadd.f32 %v1934, %v1947
    %1949 = vdwg.mxu0
    %1950 = vmatpush.bf16.msra.mxu0 %v1370
    %1951 = vmatpush.bf16.msra.mxu0 %v1366
    %1952 = vmatpush.bf16.msra.mxu0 %v1362
    %1953 = vmatpush.bf16.msra.mxu0 %v1358
    %1954 = vmatpush.bf16.msra.mxu0 %v1354
    %1955 = vmatpush.bf16.msra.mxu0 %v1350
    %1956 = vmatpush.bf16.msra.mxu0 %v1346
    %1957 = vmatpush.bf16.msra.mxu0 %v1342
    %1958 = vmatmul.bf16.gmra.mxu0 %v81
    %v1959 = vpop.f32.mrf.mxu0
    %v1960 = vadd.f32 %v1946, %v1959
    %v1961 = vpop.f32.mrf.mxu0
    %v1962 = vadd.f32 %v1948, %v1961
    %1963 = vdwg.mxu0
    %1964 = vmatpush.bf16.msra.mxu0 %v1147
    %1965 = vmatpush.bf16.msra.mxu0 %v1143
    %1966 = vmatpush.bf16.msra.mxu0 %v1139
    %1967 = vmatpush.bf16.msra.mxu0 %v1135
    %1968 = vmatpush.bf16.msra.mxu0 %v1131
    %1969 = vmatpush.bf16.msra.mxu0 %v1127
    %1970 = vmatpush.bf16.msra.mxu0 %v1123
    %1971 = vmatpush.bf16.msra.mxu0 %v1119
    %1972 = vmatmul.bf16.gmra.mxu0 %v74
    %v1973 = vpop.f32.mrf.mxu0
    %v1974 = vadd.f32 %v343, %v1973
    %v1975 = vpop.f32.mrf.mxu0
    %v1976 = vadd.f32 %v343, %v1975
    %1977 = vdwg.mxu0
    %1978 = vmatpush.bf16.msra.mxu0 %v1179
    %1979 = vmatpush.bf16.msra.mxu0 %v1175
    %1980 = vmatpush.bf16.msra.mxu0 %v1171
    %1981 = vmatpush.bf16.msra.mxu0 %v1167
    %1982 = vmatpush.bf16.msra.mxu0 %v1163
    %1983 = vmatpush.bf16.msra.mxu0 %v1159
    %1984 = vmatpush.bf16.msra.mxu0 %v1155
    %1985 = vmatpush.bf16.msra.mxu0 %v1151
    %1986 = vmatmul.bf16.gmra.mxu0 %v75
    %v1987 = vpop.f32.mrf.mxu0
    %v1988 = vadd.f32 %v1974, %v1987
    %v1989 = vpop.f32.mrf.mxu0
    %v1990 = vadd.f32 %v1976, %v1989
    %1991 = vdwg.mxu0
    %1992 = vmatpush.bf16.msra.mxu0 %v1211
    %1993 = vmatpush.bf16.msra.mxu0 %v1207
    %1994 = vmatpush.bf16.msra.mxu0 %v1203
    %1995 = vmatpush.bf16.msra.mxu0 %v1199
    %1996 = vmatpush.bf16.msra.mxu0 %v1195
    %1997 = vmatpush.bf16.msra.mxu0 %v1191
    %1998 = vmatpush.bf16.msra.mxu0 %v1187
    %1999 = vmatpush.bf16.msra.mxu0 %v1183
    %2000 = vmatmul.bf16.gmra.mxu0 %v76
    %v2001 = vpop.f32.mrf.mxu0
    %v2002 = vadd.f32 %v1988, %v2001
    %v2003 = vpop.f32.mrf.mxu0
    %v2004 = vadd.f32 %v1990, %v2003
    %2005 = vdwg.mxu0
    %2006 = vmatpush.bf16.msra.mxu0 %v1243
    %2007 = vmatpush.bf16.msra.mxu0 %v1239
    %2008 = vmatpush.bf16.msra.mxu0 %v1235
    %2009 = vmatpush.bf16.msra.mxu0 %v1231
    %2010 = vmatpush.bf16.msra.mxu0 %v1227
    %2011 = vmatpush.bf16.msra.mxu0 %v1223
    %2012 = vmatpush.bf16.msra.mxu0 %v1219
    %2013 = vmatpush.bf16.msra.mxu0 %v1215
    %2014 = vmatmul.bf16.gmra.mxu0 %v77
    %v2015 = vpop.f32.mrf.mxu0
    %v2016 = vadd.f32 %v2002, %v2015
    %v2017 = vpop.f32.mrf.mxu0
    %v2018 = vadd.f32 %v2004, %v2017
    %2019 = vdwg.mxu0
    %2020 = vmatpush.bf16.msra.mxu0 %v1275
    %2021 = vmatpush.bf16.msra.mxu0 %v1271
    %2022 = vmatpush.bf16.msra.mxu0 %v1267
    %2023 = vmatpush.bf16.msra.mxu0 %v1263
    %2024 = vmatpush.bf16.msra.mxu0 %v1259
    %2025 = vmatpush.bf16.msra.mxu0 %v1255
    %2026 = vmatpush.bf16.msra.mxu0 %v1251
    %2027 = vmatpush.bf16.msra.mxu0 %v1247
    %2028 = vmatmul.bf16.gmra.mxu0 %v78
    %v2029 = vpop.f32.mrf.mxu0
    %v2030 = vadd.f32 %v2016, %v2029
    %v2031 = vpop.f32.mrf.mxu0
    %v2032 = vadd.f32 %v2018, %v2031
    %2033 = vdwg.mxu0
    %2034 = vmatpush.bf16.msra.mxu0 %v1307
    %2035 = vmatpush.bf16.msra.mxu0 %v1303
    %2036 = vmatpush.bf16.msra.mxu0 %v1299
    %2037 = vmatpush.bf16.msra.mxu0 %v1295
    %2038 = vmatpush.bf16.msra.mxu0 %v1291
    %2039 = vmatpush.bf16.msra.mxu0 %v1287
    %2040 = vmatpush.bf16.msra.mxu0 %v1283
    %2041 = vmatpush.bf16.msra.mxu0 %v1279
    %2042 = vmatmul.bf16.gmra.mxu0 %v79
    %v2043 = vpop.f32.mrf.mxu0
    %v2044 = vadd.f32 %v2030, %v2043
    %v2045 = vpop.f32.mrf.mxu0
    %v2046 = vadd.f32 %v2032, %v2045
    %2047 = vdwg.mxu0
    %2048 = vmatpush.bf16.msra.mxu0 %v1339
    %2049 = vmatpush.bf16.msra.mxu0 %v1335
    %2050 = vmatpush.bf16.msra.mxu0 %v1331
    %2051 = vmatpush.bf16.msra.mxu0 %v1327
    %2052 = vmatpush.bf16.msra.mxu0 %v1323
    %2053 = vmatpush.bf16.msra.mxu0 %v1319
    %2054 = vmatpush.bf16.msra.mxu0 %v1315
    %2055 = vmatpush.bf16.msra.mxu0 %v1311
    %2056 = vmatmul.bf16.gmra.mxu0 %v80
    %v2057 = vpop.f32.mrf.mxu0
    %v2058 = vadd.f32 %v2044, %v2057
    %v2059 = vpop.f32.mrf.mxu0
    %v2060 = vadd.f32 %v2046, %v2059
    %2061 = vdwg.mxu0
    %2062 = vmatpush.bf16.msra.mxu0 %v1371
    %2063 = vmatpush.bf16.msra.mxu0 %v1367
    %2064 = vmatpush.bf16.msra.mxu0 %v1363
    %2065 = vmatpush.bf16.msra.mxu0 %v1359
    %2066 = vmatpush.bf16.msra.mxu0 %v1355
    %2067 = vmatpush.bf16.msra.mxu0 %v1351
    %2068 = vmatpush.bf16.msra.mxu0 %v1347
    %2069 = vmatpush.bf16.msra.mxu0 %v1343
    %2070 = vmatmul.bf16.gmra.mxu0 %v81
    %v2071 = vpop.f32.mrf.mxu0
    %v2072 = vadd.f32 %v2058, %v2071
    %v2073 = vpop.f32.mrf.mxu0
    %v2074 = vadd.f32 %v2060, %v2073
    %2075 = vdwg.mxu0
    %v2076 = vmax.f32 %v1736, 0.0
    %v2077 = vmax.f32 %v1848, 0.0
    %v2078 = vmax.f32 %v1960, 0.0
    %v2079 = vmax.f32 %v2072, 0.0
    %v2080 = vmax.f32 %v1738, 0.0
    %v2081 = vmax.f32 %v1850, 0.0
    %v2082 = vmax.f32 %v1962, 0.0
    %v2083 = vmax.f32 %v2074, 0.0
    %v2084 = vpack.c.bf16 %v2080, %v2076
    %v2085 = vpack.c.bf16 %v2081, %v2077
    %v2086 = vpack.c.bf16 %v2082, %v2078
    %v2087 = vpack.c.bf16 %v2083, %v2079
    %v2088 = vld [vmem:[%s3] sm:$0xf]
    %v2089 = vld [vmem:[%s3 + $0x4] sm:$0xf]
    %v2090 = vld [vmem:[%s3 + $0x8] sm:$0xf]
    %v2091 = vld [vmem:[%s3 + $0xc] sm:$0xf]
    %v2092 = vld [vmem:[%s3 + $0x10] sm:$0xf]
    %v2093 = vld [vmem:[%s3 + $0x14] sm:$0xf]
    %v2094 = vld [vmem:[%s3 + $0x18] sm:$0xf]
    %v2095 = vld [vmem:[%s3 + $0x1c] sm:$0xf]
    %v2096 = vld [vmem:[%s3 + $0x20] sm:$0xf]
    %v2097 = vld [vmem:[%s3 + $0x24] sm:$0xf]
    %v2098 = vld [vmem:[%s3 + $0x28] sm:$0xf]
    %v2099 = vld [vmem:[%s3 + $0x2c] sm:$0xf]
    %v2100 = vld [vmem:[%s3 + $0x30] sm:$0xf]
    %v2101 = vld [vmem:[%s3 + $0x34] sm:$0xf]
    %v2102 = vld [vmem:[%s3 + $0x38] sm:$0xf]
    %v2103 = vld [vmem:[%s3 + $0x3c] sm:$0xf]
    %v2104 = vld [vmem:[%s3 + $0x40] sm:$0xf]
    %v2105 = vld [vmem:[%s3 + $0x44] sm:$0xf]
    %v2106 = vld [vmem:[%s3 + $0x48] sm:$0xf]
    %v2107 = vld [vmem:[%s3 + $0x4c] sm:$0xf]
    %v2108 = vld [vmem:[%s3 + $0x50] sm:$0xf]
    %v2109 = vld [vmem:[%s3 + $0x54] sm:$0xf]
    %v2110 = vld [vmem:[%s3 + $0x58] sm:$0xf]
    %v2111 = vld [vmem:[%s3 + $0x5c] sm:$0xf]
    %v2112 = vld [vmem:[%s3 + $0x60] sm:$0xf]
    %v2113 = vld [vmem:[%s3 + $0x64] sm:$0xf]
    %v2114 = vld [vmem:[%s3 + $0x68] sm:$0xf]
    %v2115 = vld [vmem:[%s3 + $0x6c] sm:$0xf]
    %v2116 = vld [vmem:[%s3 + $0x70] sm:$0xf]
    %v2117 = vld [vmem:[%s3 + $0x74] sm:$0xf]
    %v2118 = vld [vmem:[%s3 + $0x78] sm:$0xf]
    %v2119 = vld [vmem:[%s3 + $0x7c] sm:$0xf]
    %v2120 = vld [vmem:[%s3 + $0x80] sm:$0xf]
    %v2121 = vld [vmem:[%s3 + $0x84] sm:$0xf]
    %v2122 = vld [vmem:[%s3 + $0x88] sm:$0xf]
    %v2123 = vld [vmem:[%s3 + $0x8c] sm:$0xf]
    %v2124 = vld [vmem:[%s3 + $0x90] sm:$0xf]
    %v2125 = vld [vmem:[%s3 + $0x94] sm:$0xf]
    %v2126 = vld [vmem:[%s3 + $0x98] sm:$0xf]
    %v2127 = vld [vmem:[%s3 + $0x9c] sm:$0xf]
    %v2128 = vld [vmem:[%s3 + $0xa0] sm:$0xf]
    %v2129 = vld [vmem:[%s3 + $0xa4] sm:$0xf]
    %v2130 = vld [vmem:[%s3 + $0xa8] sm:$0xf]
    %v2131 = vld [vmem:[%s3 + $0xac] sm:$0xf]
    %v2132 = vld [vmem:[%s3 + $0xb0] sm:$0xf]
    %v2133 = vld [vmem:[%s3 + $0xb4] sm:$0xf]
    %v2134 = vld [vmem:[%s3 + $0xb8] sm:$0xf]
    %v2135 = vld [vmem:[%s3 + $0xbc] sm:$0xf]
    %v2136 = vld [vmem:[%s3 + $0xc0] sm:$0xf]
    %v2137 = vld [vmem:[%s3 + $0xc4] sm:$0xf]
    %v2138 = vld [vmem:[%s3 + $0xc8] sm:$0xf]
    %v2139 = vld [vmem:[%s3 + $0xcc] sm:$0xf]
    %v2140 = vld [vmem:[%s3 + $0xd0] sm:$0xf]
    %v2141 = vld [vmem:[%s3 + $0xd4] sm:$0xf]
    %v2142 = vld [vmem:[%s3 + $0xd8] sm:$0xf]
    %v2143 = vld [vmem:[%s3 + $0xdc] sm:$0xf]
    %v2144 = vld [vmem:[%s3 + $0xe0] sm:$0xf]
    %v2145 = vld [vmem:[%s3 + $0xe4] sm:$0xf]
    %v2146 = vld [vmem:[%s3 + $0xe8] sm:$0xf]
    %v2147 = vld [vmem:[%s3 + $0xec] sm:$0xf]
    %v2148 = vld [vmem:[%s3 + $0xf0] sm:$0xf]
    %v2149 = vld [vmem:[%s3 + $0xf4] sm:$0xf]
    %v2150 = vld [vmem:[%s3 + $0xf8] sm:$0xf]
    %v2151 = vld [vmem:[%s3 + $0xfc] sm:$0xf]
    %v2152 = vld [vmem:[%s4] sm:$0x1]
    %v2154 = vperm.slane %v2152, 0
    %v2220 = vunpack.c.l.b16 %v2088
    %v2221 = vunpack.c.l.b16 %v2089
    %v2222 = vunpack.c.l.b16 %v2090
    %v2223 = vunpack.c.l.b16 %v2091
    %v2224 = vunpack.c.l.b16 %v2092
    %v2225 = vunpack.c.l.b16 %v2093
    %v2226 = vunpack.c.l.b16 %v2094
    %v2227 = vunpack.c.l.b16 %v2095
    %v2228 = vunpack.c.l.b16 %v2096
    %v2229 = vunpack.c.l.b16 %v2097
    %v2230 = vunpack.c.l.b16 %v2098
    %v2231 = vunpack.c.l.b16 %v2099
    %v2232 = vunpack.c.l.b16 %v2100
    %v2233 = vunpack.c.l.b16 %v2101
    %v2234 = vunpack.c.l.b16 %v2102
    %v2235 = vunpack.c.l.b16 %v2103
    %v2236 = vunpack.c.l.b16 %v2104
    %v2237 = vunpack.c.l.b16 %v2105
    %v2238 = vunpack.c.l.b16 %v2106
    %v2239 = vunpack.c.l.b16 %v2107
    %v2240 = vunpack.c.l.b16 %v2108
    %v2241 = vunpack.c.l.b16 %v2109
    %v2242 = vunpack.c.l.b16 %v2110
    %v2243 = vunpack.c.l.b16 %v2111
    %v2244 = vunpack.c.l.b16 %v2112
    %v2245 = vunpack.c.l.b16 %v2113
    %v2246 = vunpack.c.l.b16 %v2114
    %v2247 = vunpack.c.l.b16 %v2115
    %v2248 = vunpack.c.l.b16 %v2116
    %v2249 = vunpack.c.l.b16 %v2117
    %v2250 = vunpack.c.l.b16 %v2118
    %v2251 = vunpack.c.l.b16 %v2119
    %v2252 = vunpack.c.l.b16 %v2120
    %v2253 = vunpack.c.l.b16 %v2121
    %v2254 = vunpack.c.l.b16 %v2122
    %v2255 = vunpack.c.l.b16 %v2123
    %v2256 = vunpack.c.l.b16 %v2124
    %v2257 = vunpack.c.l.b16 %v2125
    %v2258 = vunpack.c.l.b16 %v2126
    %v2259 = vunpack.c.l.b16 %v2127
    %v2260 = vunpack.c.l.b16 %v2128
    %v2261 = vunpack.c.l.b16 %v2129
    %v2262 = vunpack.c.l.b16 %v2130
    %v2263 = vunpack.c.l.b16 %v2131
    %v2264 = vunpack.c.l.b16 %v2132
    %v2265 = vunpack.c.l.b16 %v2133
    %v2266 = vunpack.c.l.b16 %v2134
    %v2267 = vunpack.c.l.b16 %v2135
    %v2268 = vunpack.c.l.b16 %v2136
    %v2269 = vunpack.c.l.b16 %v2137
    %v2270 = vunpack.c.l.b16 %v2138
    %v2271 = vunpack.c.l.b16 %v2139
    %v2272 = vunpack.c.l.b16 %v2140
    %v2273 = vunpack.c.l.b16 %v2141
    %v2274 = vunpack.c.l.b16 %v2142
    %v2275 = vunpack.c.l.b16 %v2143
    %v2276 = vunpack.c.l.b16 %v2144
    %v2277 = vunpack.c.l.b16 %v2145
    %v2278 = vunpack.c.l.b16 %v2146
    %v2279 = vunpack.c.l.b16 %v2147
    %v2280 = vunpack.c.l.b16 %v2148
    %v2281 = vunpack.c.l.b16 %v2149
    %v2282 = vunpack.c.l.b16 %v2150
    %v2283 = vunpack.c.l.b16 %v2151
    %v2284 = vpack.c.b16 %v2221, %v2220
    %v2285 = vpack.c.b16 %v2223, %v2222
    %v2286 = vpack.c.b16 %v2225, %v2224
    %v2287 = vpack.c.b16 %v2227, %v2226
    %v2288 = vpack.c.b16 %v2229, %v2228
    %v2289 = vpack.c.b16 %v2231, %v2230
    %v2290 = vpack.c.b16 %v2233, %v2232
    %v2291 = vpack.c.b16 %v2235, %v2234
    %v2292 = vpack.c.b16 %v2237, %v2236
    %v2293 = vpack.c.b16 %v2239, %v2238
    %v2294 = vpack.c.b16 %v2241, %v2240
    %v2295 = vpack.c.b16 %v2243, %v2242
    %v2296 = vpack.c.b16 %v2245, %v2244
    %v2297 = vpack.c.b16 %v2247, %v2246
    %v2298 = vpack.c.b16 %v2249, %v2248
    %v2299 = vpack.c.b16 %v2251, %v2250
    %v2300 = vpack.c.b16 %v2253, %v2252
    %v2301 = vpack.c.b16 %v2255, %v2254
    %v2302 = vpack.c.b16 %v2257, %v2256
    %v2303 = vpack.c.b16 %v2259, %v2258
    %v2304 = vpack.c.b16 %v2261, %v2260
    %v2305 = vpack.c.b16 %v2263, %v2262
    %v2306 = vpack.c.b16 %v2265, %v2264
    %v2307 = vpack.c.b16 %v2267, %v2266
    %v2308 = vpack.c.b16 %v2269, %v2268
    %v2309 = vpack.c.b16 %v2271, %v2270
    %v2310 = vpack.c.b16 %v2273, %v2272
    %v2311 = vpack.c.b16 %v2275, %v2274
    %v2312 = vpack.c.b16 %v2277, %v2276
    %v2313 = vpack.c.b16 %v2279, %v2278
    %v2314 = vpack.c.b16 %v2281, %v2280
    %v2315 = vpack.c.b16 %v2283, %v2282
    %2348 = vmatpush.bf16.msra.mxu0 %v2291
    %2349 = vmatpush.bf16.msra.mxu0 %v2290
    %2350 = vmatpush.bf16.msra.mxu0 %v2289
    %2351 = vmatpush.bf16.msra.mxu0 %v2288
    %2352 = vmatpush.bf16.msra.mxu0 %v2287
    %2353 = vmatpush.bf16.msra.mxu0 %v2286
    %2354 = vmatpush.bf16.msra.mxu0 %v2285
    %2355 = vmatpush.bf16.msra.mxu0 %v2284
    %2356 = vmatmul.bf16.gmra.mxu0 %v2084
    %v2357 = vpop.f32.mrf.mxu0
    %v2358 = vadd.f32 %v2154, %v2357
    %v2359 = vpop.f32.mrf.mxu0
    %v2360 = vadd.f32 %v2154, %v2359
    %2361 = vdwg.mxu0
    %2362 = vmatpush.bf16.msra.mxu0 %v2299
    %2363 = vmatpush.bf16.msra.mxu0 %v2298
    %2364 = vmatpush.bf16.msra.mxu0 %v2297
    %2365 = vmatpush.bf16.msra.mxu0 %v2296
    %2366 = vmatpush.bf16.msra.mxu0 %v2295
    %2367 = vmatpush.bf16.msra.mxu0 %v2294
    %2368 = vmatpush.bf16.msra.mxu0 %v2293
    %2369 = vmatpush.bf16.msra.mxu0 %v2292
    %2370 = vmatmul.bf16.gmra.mxu0 %v2085
    %v2371 = vpop.f32.mrf.mxu0
    %v2372 = vadd.f32 %v2358, %v2371
    %v2373 = vpop.f32.mrf.mxu0
    %v2374 = vadd.f32 %v2360, %v2373
    %2375 = vdwg.mxu0
    %2376 = vmatpush.bf16.msra.mxu0 %v2307
    %2377 = vmatpush.bf16.msra.mxu0 %v2306
    %2378 = vmatpush.bf16.msra.mxu0 %v2305
    %2379 = vmatpush.bf16.msra.mxu0 %v2304
    %2380 = vmatpush.bf16.msra.mxu0 %v2303
    %2381 = vmatpush.bf16.msra.mxu0 %v2302
    %2382 = vmatpush.bf16.msra.mxu0 %v2301
    %2383 = vmatpush.bf16.msra.mxu0 %v2300
    %2384 = vmatmul.bf16.gmra.mxu0 %v2086
    %v2385 = vpop.f32.mrf.mxu0
    %v2386 = vadd.f32 %v2372, %v2385
    %v2387 = vpop.f32.mrf.mxu0
    %v2388 = vadd.f32 %v2374, %v2387
    %2389 = vdwg.mxu0
    %2390 = vmatpush.bf16.msra.mxu0 %v2315
    %2391 = vmatpush.bf16.msra.mxu0 %v2314
    %2392 = vmatpush.bf16.msra.mxu0 %v2313
    %2393 = vmatpush.bf16.msra.mxu0 %v2312
    %2394 = vmatpush.bf16.msra.mxu0 %v2311
    %2395 = vmatpush.bf16.msra.mxu0 %v2310
    %2396 = vmatpush.bf16.msra.mxu0 %v2309
    %2397 = vmatpush.bf16.msra.mxu0 %v2308
    %2398 = vmatmul.bf16.gmra.mxu0 %v2087
    %v2399 = vpop.f32.mrf.mxu0
    %v2400 = vadd.f32 %v2386, %v2399
    %v2401 = vpop.f32.mrf.mxu0
    %v2402 = vadd.f32 %v2388, %v2401
    %2403 = vdwg.mxu0
    %v2404 = vmax.f32 %v2400, 0.0
    %v2405 = vmax.f32 %v2402, 0.0
    %v2406 = vpack.c.bf16 %v2405, %v2404
    %v2407 = vld [vmem:[#allocation4] sm:$0xf]
    %v2408 = vld [vmem:[#allocation4 + $0x4] sm:$0xf]
    %v2409 = vld [vmem:[#allocation4 + $0x8] sm:$0xf]
    %v2410 = vld [vmem:[#allocation4 + $0xc] sm:$0xf]
    %v2411 = vld [vmem:[#allocation4 + $0x10] sm:$0xf]
    %v2412 = vld [vmem:[#allocation4 + $0x14] sm:$0xf]
    %v2413 = vld [vmem:[#allocation4 + $0x18] sm:$0xf]
    %v2414 = vld [vmem:[#allocation4 + $0x1c] sm:$0xf]
    %v2415 = vld [vmem:[#allocation4 + $0x20] sm:$0xf]
    %v2416 = vld [vmem:[#allocation4 + $0x24] sm:$0xf]
    %v2417 = vld [vmem:[#allocation4 + $0x28] sm:$0xf]
    %v2418 = vld [vmem:[#allocation4 + $0x2c] sm:$0xf]
    %v2419 = vld [vmem:[#allocation4 + $0x30] sm:$0xf]
    %v2420 = vld [vmem:[#allocation4 + $0x34] sm:$0xf]
    %v2421 = vld [vmem:[#allocation4 + $0x38] sm:$0xf]
    %v2422 = vld [vmem:[#allocation4 + $0x3c] sm:$0xf]
    %v2423 = vld [vmem:[%s6] sm:$0x1]
    %v2425 = vperm.slane %v2423, 0
    %v2443 = vunpack.c.l.b16 %v2407
    %v2444 = vunpack.c.l.b16 %v2408
    %v2445 = vunpack.c.l.b16 %v2409
    %v2446 = vunpack.c.l.b16 %v2410
    %v2447 = vunpack.c.l.b16 %v2411
    %v2448 = vunpack.c.l.b16 %v2412
    %v2449 = vunpack.c.l.b16 %v2413
    %v2450 = vunpack.c.l.b16 %v2414
    %v2451 = vunpack.c.l.b16 %v2415
    %v2452 = vunpack.c.l.b16 %v2416
    %v2453 = vunpack.c.l.b16 %v2417
    %v2454 = vunpack.c.l.b16 %v2418
    %v2455 = vunpack.c.l.b16 %v2419
    %v2456 = vunpack.c.l.b16 %v2420
    %v2457 = vunpack.c.l.b16 %v2421
    %v2458 = vunpack.c.l.b16 %v2422
    %v2459 = vpack.c.b16 %v2444, %v2443
    %v2460 = vpack.c.b16 %v2446, %v2445
    %v2461 = vpack.c.b16 %v2448, %v2447
    %v2462 = vpack.c.b16 %v2450, %v2449
    %v2463 = vpack.c.b16 %v2452, %v2451
    %v2464 = vpack.c.b16 %v2454, %v2453
    %v2465 = vpack.c.b16 %v2456, %v2455
    %v2466 = vpack.c.b16 %v2458, %v2457
    %2475 = vmatpush.bf16.msra.mxu0 %v2466
    %2476 = vmatpush.bf16.msra.mxu0 %v2465
    %2477 = vmatpush.bf16.msra.mxu0 %v2464
    %2478 = vmatpush.bf16.msra.mxu0 %v2463
    %2479 = vmatpush.bf16.msra.mxu0 %v2462
    %2480 = vmatpush.bf16.msra.mxu0 %v2461
    %2481 = vmatpush.bf16.msra.mxu0 %v2460
    %2482 = vmatpush.bf16.msra.mxu0 %v2459
    %2483 = vmatmul.bf16.gmra.mxu0 %v2406
    %v2484 = vpop.f32.mrf.mxu0
    %v2485 = vadd.f32 %v2425, %v2484
    %v2486 = vpop.f32.mrf.mxu0
    %v2487 = vadd.f32 %v2425, %v2486
    %2488 = vdwg.mxu0
    %v2489 = vpack.c.bf16 %v2485, %v2485
    %v2490 = vpack.c.bf16 %v2487, %v2487
    %2491 = vst [vmem:[%s7] sm:$0xf] %v2489
    %2492 = vst [vmem:[%s7 + $0x4] sm:$0xf] %v2490
    // Predicated region
    $region38: #{_forward.1} parent=1 // pred_check
      _
    $region39: #{_forward.1} parent=1 // pred_check_branch
      %2494 = sbr.rel (0) target = $region41
    $region40: #{_forward.1} parent=1 // pred_region
      _
    $region41: #{_forward.1} parent=1 // pred_fallthru
      _
    // Predicated region
    $region42: #{_forward.1} parent=1 // pred_check
      _
    $region43: #{_forward.1} parent=1 // pred_check_branch
      %2496 = sbr.rel (0) target = $region45
    $region44: #{_forward.1} parent=1 // pred_region
      _
    $region45: #{_forward.1} parent=1 // pred_fallthru
      _
    %2497 = vsyncpa [#allocation3], 1
    %2498 = vsyncpa [#allocation5], 1

</llo_original>
